<compile_context>
chip_gen: v7x
topology: tpu7x:2x2x1
jax: 0.10.0
libtpu: 0.0.40
codegen_flags: <defaults>
</compile_context>

<pallas_src>
import functools

import jax
import jax.numpy as jnp
from jax import lax
from jax.experimental import pallas as pl
from jax.experimental.pallas import tpu as pltpu

EXPANSION = 1          # ResnetBasic.expansion
BN_EPS = 1e-5
NEG_SLOPE = 0.01       # nn.LeakyReLU default negative_slope
LANE = 128             # TPU lane width
WP = 8                 # sublane-aligned interior column offset inside the y1 scratch


def _round_up(n, m):
    return (n + m - 1) // m * m


def _pick_row_tile(ho, target):
    for t in range(min(target, ho), 0, -1):
        if ho % t == 0:
            return t
    return 1


# ---------------------------------------------------------------------------
# Pallas kernel: one grid step == one batch element x one row tile (TH rows).
# ---------------------------------------------------------------------------
def _block_kernel(*refs, th, wo, taps1, identity):
    if identity:
        (x_ref, w1_ref, b1_ref, w2_ref, b2_ref, o_ref, y1p_ref) = refs
    else:
        (x_ref, w1_ref, b1_ref, w2_ref, b2_ref, ws_ref, bs_ref,
         o_ref, y1p_ref) = refs

    k1 = x_ref.shape[3]
    c1p = w1_ref.shape[2]
    c2p = o_ref.shape[3]
    rows1 = th + 2                       # y1 rows needed by conv2 (1-row halo each side)

    r = pl.program_id(1)
    r0 = r * th
    if th % 8 == 0:
        r0 = pl.multiple_of(r0, 8)

    def leaky(z):
        return jnp.maximum(z, NEG_SLOPE * z)

    # ---- conv1 (+ folded BN1 + LeakyReLU): TH+2 rows, taps on the resident padded x --
    acc1 = jnp.zeros((rows1 * wo, c1p), jnp.float32)
    for t, (oy, ox) in enumerate(taps1):
        slab = x_ref[0, pl.ds(r0 + oy, rows1), pl.ds(ox, wo), :]
        acc1 = acc1 + jnp.dot(slab.reshape(rows1 * wo, k1), w1_ref[t],
                              preferred_element_type=jnp.float32)
    y1 = leaky(acc1 + b1_ref[...]).reshape(rows1, wo, c1p).astype(y1p_ref.dtype)

    # ---- stage y1 (bf16) into the halo scratch (interior write is sublane-aligned) ---
    y1p_ref[:, WP - 1:WP, :] = jnp.zeros((rows1, 1, c1p), y1p_ref.dtype)          # left
    y1p_ref[:, WP + wo:WP + wo + 1, :] = jnp.zeros((rows1, 1, c1p), y1p_ref.dtype)  # right
    y1p_ref[:, WP:WP + wo, :] = y1

    @pl.when(r == 0)                     # top image boundary: y1 "row -1" must be zero
    def _():
        y1p_ref[0:1, :, :] = jnp.zeros((1, y1p_ref.shape[1], c1p), y1p_ref.dtype)

    @pl.when(r == pl.num_programs(1) - 1)   # bottom image boundary
    def _():
        y1p_ref[rows1 - 1:rows1, :, :] = jnp.zeros((1, y1p_ref.shape[1], c1p),
                                                   y1p_ref.dtype)

    # ---- conv2 3x3 (stride 1, pad 1) + folded BN2 ------------------------------------
    acc2 = jnp.zeros((th * wo, c2p), jnp.float32)
    for dy in range(3):
        for dx in range(3):
            slab = y1p_ref[pl.ds(dy, th), pl.ds(WP - 1 + dx, wo), :]
            acc2 = acc2 + jnp.dot(slab.reshape(th * wo, c1p), w2_ref[dy * 3 + dx],
                                  preferred_element_type=jnp.float32)
    y2 = acc2 + b2_ref[...]

    # ---- shortcut: zero-lane-padded x added on the VPU, or 1x1 projection (+BN) ------
    xs = x_ref[0, pl.ds(r0 + 2, th), pl.ds(1, wo), :]
    if identity:
        sc = xs.reshape(th * wo, c2p).astype(jnp.float32)
    else:
        sc = jnp.dot(xs.reshape(th * wo, k1), ws_ref[...],
                     preferred_element_type=jnp.float32) + bs_ref[...]

    out = leaky(y2 + sc)
    o_ref[0] = out.reshape(th, wo, c2p).astype(o_ref.dtype)


# ---------------------------------------------------------------------------
# Parameter construction (deterministic, synthetic) + one-time folding / layout.
# ---------------------------------------------------------------------------
def make_params(key, in_channels, out_channels):
    c1 = out_channels
    c2 = out_channels * EXPANSION
    keys = jax.random.split(key, 6)

    def bn_params(k, c):
        kg, kb, km, kv = jax.random.split(k, 4)
        gamma = 1.0 + 0.1 * jax.random.normal(kg, (c,), jnp.float32)
        beta = 0.1 * jax.random.normal(kb, (c,), jnp.float32)
        mean = 0.1 * jax.random.normal(km, (c,), jnp.float32)
        var = jax.random.uniform(kv, (c,), jnp.float32, 0.5, 1.5)
        return gamma, beta, mean, var

    return dict(
        w1=(1.0 / in_channels) * jax.random.normal(keys[0], (c1, in_channels, 3, 3), jnp.float32),
        w2=(1.0 / c1) * jax.random.normal(keys[1], (c2, c1, 3, 3), jnp.float32),
        ws=(1.0 / in_channels) * jax.random.normal(keys[2], (c2, in_channels, 1, 1), jnp.float32),
        bn1=bn_params(keys[3], c1),
        bn2=bn_params(keys[4], c2),
        bns=bn_params(keys[5], c2),
    )


def _fold_bn(w, bn):
    gamma, beta, mean, var = bn
    s = gamma / jnp.sqrt(var + BN_EPS)
    return w * s[:, None, None, None], beta - mean * s


def prepare_resnet_basic(params, *, stride=1):
    """Fold BN and lay out weights for the kernel.  Call ONCE at init (hoisted out of
    the per-forward path)."""
    assert stride in (1, 2), "stride must be 1 or 2"
    w1, b1 = _fold_bn(params['w1'], params['bn1'])   # (C1, Cin, 3, 3)
    w2, b2 = _fold_bn(params['w2'], params['bn2'])   # (C2, C1, 3, 3)
    c1, cin = w1.shape[0], w1.shape[1]
    c2 = w2.shape[0]
    identity = (stride == 1) and (cin == c2)
    c1p, c2p = _round_up(c1, LANE), _round_up(c2, LANE)

    w1m = jnp.transpose(w1, (2, 3, 1, 0)).reshape(9, cin, c1)   # (tap, K, C1)
    w2m = jnp.transpose(w2, (2, 3, 1, 0)).reshape(9, c1, c2)

    if stride == 1:
        # identity: x is zero-lane-padded to c2p in HBM, so pad conv1's K dim to match.
        k1 = c2p if identity else cin
        w1k = jnp.pad(w1m, ((0, 0), (0, k1 - cin), (0, c1p - c1)))
        taps1 = tuple((dy, dx) for dy in range(3) for dx in range(3))
    else:
        # space-to-depth: 3x3 stride-2 conv becomes a 2x2 conv over 4*Cin channels.
        k1 = 4 * cin
        tap_mats = []
        for dI in range(2):
            for dJ in range(2):
                sub = []
                for a in range(2):
                    for b in range(2):
                        dy, dx = 2 * dI + a - 1, 2 * dJ + b - 1
                        if 0 <= dy < 3 and 0 <= dx < 3:
                            sub.append(w1m[dy * 3 + dx])
                        else:
                            sub.append(jnp.zeros((cin, c1), w1m.dtype))
                tap_mats.append(jnp.concatenate(sub, axis=0))       # (4*cin, c1)
        w1k = jnp.pad(jnp.stack(tap_mats, axis=0), ((0, 0), (0, 0), (0, c1p - c1)))
        taps1 = tuple((dI, dJ) for dI in range(2) for dJ in range(2))

    kp = dict(
        w1=w1k.astype(jnp.bfloat16),
        b1=jnp.pad(b1, (0, c1p - c1)).reshape(1, c1p).astype(jnp.float32),
        w2=jnp.pad(w2m, ((0, 0), (0, c1p - c1), (0, c2p - c2))).astype(jnp.bfloat16),
        b2=jnp.pad(b2, (0, c2p - c2)).reshape(1, c2p).astype(jnp.float32),
    )
    if not identity:
        ws, bs = _fold_bn(params['ws'], params['bns'])               # (C2, Cin, 1, 1)
        wsm = ws[:, :, 0, 0].T                                       # (Cin, C2)
        if stride == 2:
            # the 1x1 stride-2 conv only sees the (even,even) s2d sub-channel block
            wsm = jnp.concatenate([wsm, jnp.zeros((3 * cin, c2), wsm.dtype)], axis=0)
        kp['ws'] = jnp.pad(wsm, ((0, 0), (0, c2p - c2))).astype(jnp.bfloat16)
        kp['bs'] = jnp.pad(bs, (0, c2p - c2)).reshape(1, c2p).astype(jnp.float32)

    meta = dict(stride=stride, identity=identity, cin=cin, c2=c2,
                c1p=c1p, c2p=c2p, k1=k1, taps1=taps1)
    return kp, meta


# ---------------------------------------------------------------------------
# Public wrappers.
# ---------------------------------------------------------------------------
def resnet_basic_pallas_nhwc(x_nhwc, kp, meta, *, row_tile=8, out_dtype=jnp.bfloat16):
    """Primary entry point: NHWC in, lane-padded bf16 NHWC out (N, Ho, Wo, C2p).

    Padding lanes [C2:C2p] are exactly zero; keep them for the next lane-padded block
    or slice in the consumer (no HBM slice is done here)."""
    N, H, W, cin = x_nhwc.shape
    assert cin == meta['cin']
    stride, identity = meta['stride'], meta['identity']
    c1p, c2p, k1, taps1 = meta['c1p'], meta['c2p'], meta['k1'], meta['taps1']

    xb = x_nhwc if x_nhwc.dtype == jnp.bfloat16 else x_nhwc.astype(jnp.bfloat16)

    if stride == 1:
        Ho, Wo = H, W
        # 1-px conv halo + 1 extra row top/bottom so the y1 halo-row recompute stays
        # in bounds; identity shortcuts also get zero lane-padding (plain VPU add).
        xk = jnp.pad(xb, ((0, 0), (2, 2), (1, 1), (0, k1 - cin)))
    else:
        Ho, Wo = (H + 1) // 2, (W + 1) // 2
        # space-to-depth: every in-kernel read is unit-stride, K grows 4x.
        xe = jnp.pad(xb, ((0, 0), (0, 2 * Ho - H), (0, 2 * Wo - W), (0, 0)))
        xs2d = xe.reshape(N, Ho, 2, Wo, 2, cin).transpose(0, 1, 3, 2, 4, 5)
        xs2d = xs2d.reshape(N, Ho, Wo, 4 * cin)
        xk = jnp.pad(xs2d, ((0, 0), (2, 1), (1, 0), (0, 0)))

    th = _pick_row_tile(Ho, row_tile)
    nr = Ho // th
    Hp, Wp = xk.shape[1], xk.shape[2]

    kernel = functools.partial(_block_kernel, th=th, wo=Wo, taps1=taps1,
                               identity=identity)

    def const_spec(a):
        nd = a.ndim
        return pl.BlockSpec(a.shape, lambda n, r, _nd=nd: (0,) * _nd)

    flat = [kp['w1'], kp['b1'], kp['w2'], kp['b2']]
    if not identity:
        flat += [kp['ws'], kp['bs']]

    return pl.pallas_call(
        kernel,
        out_shape=jax.ShapeDtypeStruct((N, Ho, Wo, c2p), out_dtype),
        grid_spec=pltpu.PrefetchScalarGridSpec(
            num_scalar_prefetch=0,
            grid=(N, nr),
            in_specs=[pl.BlockSpec((1, Hp, Wp, k1), lambda n, r: (n, 0, 0, 0))]
                     + [const_spec(a) for a in flat],
            out_specs=pl.BlockSpec((1, th, Wo, c2p), lambda n, r: (n, r, 0, 0)),
            scratch_shapes=[
                pltpu.VMEM((th + 2, Wo + 2 * WP, c1p), jnp.bfloat16),   # y1 halo slab
            ],
        ),
        compiler_params=pltpu.CompilerParams(
            dimension_semantics=("parallel", "parallel"),
            vmem_limit_bytes=48 * 1024 * 1024,   # explicit headroom (v7x: 64 MiB phys)
        ),
    )(xk, *flat)


def resnet_basic_pallas(x_nchw, params, *, stride=1, out_dtype=jnp.float32):
    """Drop-in NCHW wrapper matching the PyTorch module interface (prep + channel
    slice done per call here for parity/testing; in production call
    prepare_resnet_basic once and stay NHWC / lane-padded / bf16)."""
    kp, meta = prepare_resnet_basic(params, stride=stride)
    x = jnp.transpose(x_nchw, (0, 2, 3, 1))
    out = resnet_basic_pallas_nhwc(x, kp, meta)
    out = out[..., :meta['c2']].astype(out_dtype)
    return jnp.transpose(out, (0, 3, 1, 2))


# ---------------------------------------------------------------------------
# Pure-JAX references (NCHW, mirror the PyTorch forward) for validation.
# ---------------------------------------------------------------------------
def _conv(inp, w, s, pad):
    return lax.conv_general_dilated(
        inp, w, (s, s), pad, dimension_numbers=('NCHW', 'OIHW', 'NCHW'),
        precision=lax.Precision.HIGHEST)


def _lrelu(z):
    return jnp.maximum(z, NEG_SLOPE * z)


def ref_forward(x, p, stride, has_proj):
    """Exact f32 module semantics (inference-mode BN)."""
    def bn(y, bn_p):
        gamma, beta, mean, var = bn_p
        sc = gamma / jnp.sqrt(var + BN_EPS)
        return y * sc[None, :, None, None] + (beta - mean * sc)[None, :, None, None]

    y = _lrelu(bn(_conv(x, p['w1'], stride, [(1, 1), (1, 1)]), p['bn1']))
    y = bn(_conv(y, p['w2'], 1, [(1, 1), (1, 1)]), p['bn2'])
    if has_proj:
        sc = bn(_conv(x, p['ws'], stride, [(0, 0), (0, 0)]), p['bns'])
    else:
        sc = x
    return _lrelu(y + sc)


def ref_forward_bf16(x, p, stride, has_proj):
    """Same dataflow as the kernel (bf16-rounded operands, f32 math) for a tight check."""
    q = lambda a: a.astype(jnp.bfloat16).astype(jnp.float32)
    w1, b1 = _fold_bn(p['w1'], p['bn1'])
    w2, b2 = _fold_bn(p['w2'], p['bn2'])
    xq = q(x)
    y1 = _lrelu(_conv(xq, q(w1), stride, [(1, 1), (1, 1)]) + b1[None, :, None, None])
    y1 = q(y1)
    y2 = _conv(y1, q(w2), 1, [(1, 1), (1, 1)]) + b2[None, :, None, None]
    if has_proj:
        ws, bs = _fold_bn(p['ws'], p['bns'])
        sc = _conv(xq, q(ws), stride, [(0, 0), (0, 0)]) + bs[None, :, None, None]
    else:
        sc = xq
    return _lrelu(y2 + sc)


# ---------------------------------------------------------------------------
if __name__ == "__main__":
    root = jax.random.PRNGKey(0)

    def run_case(key, in_channels, out_channels, stride):
        kx, kparam = jax.random.split(key)
        N, H, W = 2, 16, 16
        x = jax.random.normal(kx, (N, in_channels, H, W), jnp.float32)
        params = make_params(kparam, in_channels, out_channels)
        has_proj = (stride != 1) or (in_channels != out_channels * EXPANSION)

        out = jax.block_until_ready(resnet_basic_pallas(x, params, stride=stride))

        ref = ref_forward(x, params, stride, has_proj)
        ref_q = ref_forward_bf16(x, params, stride, has_proj)
        assert out.shape == ref.shape, (out.shape, ref.shape)
        # Tight check vs a reference with identical bf16 operand rounding
        # (kernel output is bf16, hence the small extra slack).
        assert bool(jnp.allclose(out, ref_q, atol=2e-2, rtol=2e-2)), \
            (in_channels, out_channels, stride, float(jnp.max(jnp.abs(out - ref_q))))
        # Loose check vs exact f32 module semantics (slack = bf16 rounding).
        assert bool(jnp.allclose(out, ref, atol=2e-1, rtol=5e-2)), \
            (in_channels, out_channels, stride, float(jnp.max(jnp.abs(out - ref))))

    k1, k2, k3 = jax.random.split(root, 3)
    run_case(k1, 4, 8, 1)    # projection shortcut (in_channels != expansion*out_channels)
    run_case(k2, 8, 8, 1)    # identity shortcut (direct VPU add, lane-padded x)
    run_case(k3, 4, 8, 2)    # projection + stride-2 downsample (space-to-depth path)
    print("KERNEL_OK")
</pallas_src>

<mosaic_0001>
module attributes {stable_mosaic.version = 11 : i64} {
  func.func @_block_kernel(%arg0: i32, %arg1: i32, %arg2: memref<1x20x18x4xbf16, #tpu.memory_space<vmem>>, %arg3: memref<9x4x128xbf16, #tpu.memory_space<vmem>>, %arg4: memref<1x128xf32, #tpu.memory_space<vmem>>, %arg5: memref<9x128x128xbf16, #tpu.memory_space<vmem>>, %arg6: memref<1x128xf32, #tpu.memory_space<vmem>>, %arg7: memref<4x128xbf16, #tpu.memory_space<vmem>>, %arg8: memref<1x128xf32, #tpu.memory_space<vmem>>, %arg9: memref<1x8x16x128xbf16, #tpu.memory_space<vmem>>, %arg10: memref<10x32x128xbf16, #tpu.memory_space<vmem>>) attributes {dimension_semantics = [#tpu.dimension_semantics<parallel>, #tpu.dimension_semantics<parallel>], iteration_bounds = array<i64: 2, 2>, scalar_prefetch = 0 : i64, scratch_operands = 1 : i64, tpu.core_type = #tpu.core_type<tc>, window_params = [{transform_indices = @transform_0, window_bounds = array<i64: 1, 20, 18, 4>}, {pipeline_mode = #tpu.pipeline_mode<synchronous>, transform_indices = @transform_1, window_bounds = array<i64: 9, 4, 128>}, {pipeline_mode = #tpu.pipeline_mode<synchronous>, transform_indices = @transform_2, window_bounds = array<i64: 1, 128>}, {pipeline_mode = #tpu.pipeline_mode<synchronous>, transform_indices = @transform_3, window_bounds = array<i64: 9, 128, 128>}, {pipeline_mode = #tpu.pipeline_mode<synchronous>, transform_indices = @transform_4, window_bounds = array<i64: 1, 128>}, {pipeline_mode = #tpu.pipeline_mode<synchronous>, transform_indices = @transform_5, window_bounds = array<i64: 4, 128>}, {pipeline_mode = #tpu.pipeline_mode<synchronous>, transform_indices = @transform_6, window_bounds = array<i64: 1, 128>}, {transform_indices = @transform_7, window_bounds = array<i64: 1, 8, 16, 128>}]} {
    %c8_i32 = arith.constant 8 : i32
    %0 = arith.muli %arg1, %c8_i32 : i32
    %1 = tpu.assume_multiple %0, 8 : i32
    %cst = arith.constant 0.000000e+00 : f32
    %2 = vector.broadcast %cst : f32 to vector<160x128xf32>
    %c0_i32 = arith.constant 0 : i32
    %3 = arith.addi %1, %c0_i32 : i32
    %c0 = arith.constant 0 : index
    %4 = arith.index_cast %3 : i32 to index
    %c0_0 = arith.constant 0 : index
    %c0_1 = arith.constant 0 : index
    %5 = vector.load %arg2[%c0, %4, %c0_0, %c0_1] : memref<1x20x18x4xbf16, #tpu.memory_space<vmem>>, vector<1x10x16x4xbf16>
    %6 = vector.shape_cast %5 : vector<1x10x16x4xbf16> to vector<10x16x4xbf16>
    %7 = vector.shape_cast %6 : vector<10x16x4xbf16> to vector<160x4xbf16>
    %c0_2 = arith.constant 0 : index
    %c0_3 = arith.constant 0 : index
    %c0_4 = arith.constant 0 : index
    %8 = vector.load %arg3[%c0_2, %c0_3, %c0_4] : memref<9x4x128xbf16, #tpu.memory_space<vmem>>, vector<1x4x128xbf16>
    %9 = vector.shape_cast %8 : vector<1x4x128xbf16> to vector<4x128xbf16>
    %cst_5 = arith.constant dense<0.000000e+00> : vector<160x128xf32>
    %10 = tpu.matmul %7, %9, %cst_5 {dimension_numbers = #tpu.dot_dimension_numbers<[1], [0], [0], [1], [0, 0, 1, 1], [], []>} : vector<160x4xbf16>, vector<4x128xbf16>, vector<160x128xf32> -> vector<160x128xf32>
    %11 = arith.addf %2, %10 : vector<160x128xf32>
    %c0_i32_6 = arith.constant 0 : i32
    %12 = arith.addi %1, %c0_i32_6 : i32
    %c0_7 = arith.constant 0 : index
    %13 = arith.index_cast %12 : i32 to index
    %c1 = arith.constant 1 : index
    %c0_8 = arith.constant 0 : index
    %14 = vector.load %arg2[%c0_7, %13, %c1, %c0_8] : memref<1x20x18x4xbf16, #tpu.memory_space<vmem>>, vector<1x10x16x4xbf16>
    %15 = vector.shape_cast %14 : vector<1x10x16x4xbf16> to vector<10x16x4xbf16>
    %16 = vector.shape_cast %15 : vector<10x16x4xbf16> to vector<160x4xbf16>
    %c1_9 = arith.constant 1 : index
    %c0_10 = arith.constant 0 : index
    %c0_11 = arith.constant 0 : index
    %17 = vector.load %arg3[%c1_9, %c0_10, %c0_11] : memref<9x4x128xbf16, #tpu.memory_space<vmem>>, vector<1x4x128xbf16>
    %18 = vector.shape_cast %17 : vector<1x4x128xbf16> to vector<4x128xbf16>
    %cst_12 = arith.constant dense<0.000000e+00> : vector<160x128xf32>
    %19 = tpu.matmul %16, %18, %cst_12 {dimension_numbers = #tpu.dot_dimension_numbers<[1], [0], [0], [1], [0, 0, 1, 1], [], []>} : vector<160x4xbf16>, vector<4x128xbf16>, vector<160x128xf32> -> vector<160x128xf32>
    %20 = arith.addf %11, %19 : vector<160x128xf32>
    %c0_i32_13 = arith.constant 0 : i32
    %21 = arith.addi %1, %c0_i32_13 : i32
    %c0_14 = arith.constant 0 : index
    %22 = arith.index_cast %21 : i32 to index
    %c2 = arith.constant 2 : index
    %c0_15 = arith.constant 0 : index
    %23 = vector.load %arg2[%c0_14, %22, %c2, %c0_15] : memref<1x20x18x4xbf16, #tpu.memory_space<vmem>>, vector<1x10x16x4xbf16>
    %24 = vector.shape_cast %23 : vector<1x10x16x4xbf16> to vector<10x16x4xbf16>
    %25 = vector.shape_cast %24 : vector<10x16x4xbf16> to vector<160x4xbf16>
    %c2_16 = arith.constant 2 : index
    %c0_17 = arith.constant 0 : index
    %c0_18 = arith.constant 0 : index
    %26 = vector.load %arg3[%c2_16, %c0_17, %c0_18] : memref<9x4x128xbf16, #tpu.memory_space<vmem>>, vector<1x4x128xbf16>
    %27 = vector.shape_cast %26 : vector<1x4x128xbf16> to vector<4x128xbf16>
    %cst_19 = arith.constant dense<0.000000e+00> : vector<160x128xf32>
    %28 = tpu.matmul %25, %27, %cst_19 {dimension_numbers = #tpu.dot_dimension_numbers<[1], [0], [0], [1], [0, 0, 1, 1], [], []>} : vector<160x4xbf16>, vector<4x128xbf16>, vector<160x128xf32> -> vector<160x128xf32>
    %29 = arith.addf %20, %28 : vector<160x128xf32>
    %c1_i32 = arith.constant 1 : i32
    %30 = arith.addi %1, %c1_i32 : i32
    %c0_20 = arith.constant 0 : index
    %31 = arith.index_cast %30 : i32 to index
    %c0_21 = arith.constant 0 : index
    %c0_22 = arith.constant 0 : index
    %32 = vector.load %arg2[%c0_20, %31, %c0_21, %c0_22] : memref<1x20x18x4xbf16, #tpu.memory_space<vmem>>, vector<1x10x16x4xbf16>
    %33 = vector.shape_cast %32 : vector<1x10x16x4xbf16> to vector<10x16x4xbf16>
    %34 = vector.shape_cast %33 : vector<10x16x4xbf16> to vector<160x4xbf16>
    %c3 = arith.constant 3 : index
    %c0_23 = arith.constant 0 : index
    %c0_24 = arith.constant 0 : index
    %35 = vector.load %arg3[%c3, %c0_23, %c0_24] : memref<9x4x128xbf16, #tpu.memory_space<vmem>>, vector<1x4x128xbf16>
    %36 = vector.shape_cast %35 : vector<1x4x128xbf16> to vector<4x128xbf16>
    %cst_25 = arith.constant dense<0.000000e+00> : vector<160x128xf32>
    %37 = tpu.matmul %34, %36, %cst_25 {dimension_numbers = #tpu.dot_dimension_numbers<[1], [0], [0], [1], [0, 0, 1, 1], [], []>} : vector<160x4xbf16>, vector<4x128xbf16>, vector<160x128xf32> -> vector<160x128xf32>
    %38 = arith.addf %29, %37 : vector<160x128xf32>
    %c1_i32_26 = arith.constant 1 : i32
    %39 = arith.addi %1, %c1_i32_26 : i32
    %c0_27 = arith.constant 0 : index
    %40 = arith.index_cast %39 : i32 to index
    %c1_28 = arith.constant 1 : index
    %c0_29 = arith.constant 0 : index
    %41 = vector.load %arg2[%c0_27, %40, %c1_28, %c0_29] : memref<1x20x18x4xbf16, #tpu.memory_space<vmem>>, vector<1x10x16x4xbf16>
    %42 = vector.shape_cast %41 : vector<1x10x16x4xbf16> to vector<10x16x4xbf16>
    %43 = vector.shape_cast %42 : vector<10x16x4xbf16> to vector<160x4xbf16>
    %c4 = arith.constant 4 : index
    %c0_30 = arith.constant 0 : index
    %c0_31 = arith.constant 0 : index
    %44 = vector.load %arg3[%c4, %c0_30, %c0_31] : memref<9x4x128xbf16, #tpu.memory_space<vmem>>, vector<1x4x128xbf16>
    %45 = vector.shape_cast %44 : vector<1x4x128xbf16> to vector<4x128xbf16>
    %cst_32 = arith.constant dense<0.000000e+00> : vector<160x128xf32>
    %46 = tpu.matmul %43, %45, %cst_32 {dimension_numbers = #tpu.dot_dimension_numbers<[1], [0], [0], [1], [0, 0, 1, 1], [], []>} : vector<160x4xbf16>, vector<4x128xbf16>, vector<160x128xf32> -> vector<160x128xf32>
    %47 = arith.addf %38, %46 : vector<160x128xf32>
    %c1_i32_33 = arith.constant 1 : i32
    %48 = arith.addi %1, %c1_i32_33 : i32
    %c0_34 = arith.constant 0 : index
    %49 = arith.index_cast %48 : i32 to index
    %c2_35 = arith.constant 2 : index
    %c0_36 = arith.constant 0 : index
    %50 = vector.load %arg2[%c0_34, %49, %c2_35, %c0_36] : memref<1x20x18x4xbf16, #tpu.memory_space<vmem>>, vector<1x10x16x4xbf16>
    %51 = vector.shape_cast %50 : vector<1x10x16x4xbf16> to vector<10x16x4xbf16>
    %52 = vector.shape_cast %51 : vector<10x16x4xbf16> to vector<160x4xbf16>
    %c5 = arith.constant 5 : index
    %c0_37 = arith.constant 0 : index
    %c0_38 = arith.constant 0 : index
    %53 = vector.load %arg3[%c5, %c0_37, %c0_38] : memref<9x4x128xbf16, #tpu.memory_space<vmem>>, vector<1x4x128xbf16>
    %54 = vector.shape_cast %53 : vector<1x4x128xbf16> to vector<4x128xbf16>
    %cst_39 = arith.constant dense<0.000000e+00> : vector<160x128xf32>
    %55 = tpu.matmul %52, %54, %cst_39 {dimension_numbers = #tpu.dot_dimension_numbers<[1], [0], [0], [1], [0, 0, 1, 1], [], []>} : vector<160x4xbf16>, vector<4x128xbf16>, vector<160x128xf32> -> vector<160x128xf32>
    %56 = arith.addf %47, %55 : vector<160x128xf32>
    %c2_i32 = arith.constant 2 : i32
    %57 = arith.addi %1, %c2_i32 : i32
    %c0_40 = arith.constant 0 : index
    %58 = arith.index_cast %57 : i32 to index
    %c0_41 = arith.constant 0 : index
    %c0_42 = arith.constant 0 : index
    %59 = vector.load %arg2[%c0_40, %58, %c0_41, %c0_42] : memref<1x20x18x4xbf16, #tpu.memory_space<vmem>>, vector<1x10x16x4xbf16>
    %60 = vector.shape_cast %59 : vector<1x10x16x4xbf16> to vector<10x16x4xbf16>
    %61 = vector.shape_cast %60 : vector<10x16x4xbf16> to vector<160x4xbf16>
    %c6 = arith.constant 6 : index
    %c0_43 = arith.constant 0 : index
    %c0_44 = arith.constant 0 : index
    %62 = vector.load %arg3[%c6, %c0_43, %c0_44] : memref<9x4x128xbf16, #tpu.memory_space<vmem>>, vector<1x4x128xbf16>
    %63 = vector.shape_cast %62 : vector<1x4x128xbf16> to vector<4x128xbf16>
    %cst_45 = arith.constant dense<0.000000e+00> : vector<160x128xf32>
    %64 = tpu.matmul %61, %63, %cst_45 {dimension_numbers = #tpu.dot_dimension_numbers<[1], [0], [0], [1], [0, 0, 1, 1], [], []>} : vector<160x4xbf16>, vector<4x128xbf16>, vector<160x128xf32> -> vector<160x128xf32>
    %65 = arith.addf %56, %64 : vector<160x128xf32>
    %c2_i32_46 = arith.constant 2 : i32
    %66 = arith.addi %1, %c2_i32_46 : i32
    %c0_47 = arith.constant 0 : index
    %67 = arith.index_cast %66 : i32 to index
    %c1_48 = arith.constant 1 : index
    %c0_49 = arith.constant 0 : index
    %68 = vector.load %arg2[%c0_47, %67, %c1_48, %c0_49] : memref<1x20x18x4xbf16, #tpu.memory_space<vmem>>, vector<1x10x16x4xbf16>
    %69 = vector.shape_cast %68 : vector<1x10x16x4xbf16> to vector<10x16x4xbf16>
    %70 = vector.shape_cast %69 : vector<10x16x4xbf16> to vector<160x4xbf16>
    %c7 = arith.constant 7 : index
    %c0_50 = arith.constant 0 : index
    %c0_51 = arith.constant 0 : index
    %71 = vector.load %arg3[%c7, %c0_50, %c0_51] : memref<9x4x128xbf16, #tpu.memory_space<vmem>>, vector<1x4x128xbf16>
    %72 = vector.shape_cast %71 : vector<1x4x128xbf16> to vector<4x128xbf16>
    %cst_52 = arith.constant dense<0.000000e+00> : vector<160x128xf32>
    %73 = tpu.matmul %70, %72, %cst_52 {dimension_numbers = #tpu.dot_dimension_numbers<[1], [0], [0], [1], [0, 0, 1, 1], [], []>} : vector<160x4xbf16>, vector<4x128xbf16>, vector<160x128xf32> -> vector<160x128xf32>
    %74 = arith.addf %65, %73 : vector<160x128xf32>
    %c2_i32_53 = arith.constant 2 : i32
    %75 = arith.addi %1, %c2_i32_53 : i32
    %c0_54 = arith.constant 0 : index
    %76 = arith.index_cast %75 : i32 to index
    %c2_55 = arith.constant 2 : index
    %c0_56 = arith.constant 0 : index
    %77 = vector.load %arg2[%c0_54, %76, %c2_55, %c0_56] : memref<1x20x18x4xbf16, #tpu.memory_space<vmem>>, vector<1x10x16x4xbf16>
    %78 = vector.shape_cast %77 : vector<1x10x16x4xbf16> to vector<10x16x4xbf16>
    %79 = vector.shape_cast %78 : vector<10x16x4xbf16> to vector<160x4xbf16>
    %c8 = arith.constant 8 : index
    %c0_57 = arith.constant 0 : index
    %c0_58 = arith.constant 0 : index
    %80 = vector.load %arg3[%c8, %c0_57, %c0_58] : memref<9x4x128xbf16, #tpu.memory_space<vmem>>, vector<1x4x128xbf16>
    %81 = vector.shape_cast %80 : vector<1x4x128xbf16> to vector<4x128xbf16>
    %cst_59 = arith.constant dense<0.000000e+00> : vector<160x128xf32>
    %82 = tpu.matmul %79, %81, %cst_59 {dimension_numbers = #tpu.dot_dimension_numbers<[1], [0], [0], [1], [0, 0, 1, 1], [], []>} : vector<160x4xbf16>, vector<4x128xbf16>, vector<160x128xf32> -> vector<160x128xf32>
    %83 = arith.addf %74, %82 : vector<160x128xf32>
    %c0_60 = arith.constant 0 : index
    %c0_61 = arith.constant 0 : index
    %84 = vector.load %arg4[%c0_60, %c0_61] : memref<1x128xf32, #tpu.memory_space<vmem>>, vector<1x128xf32>
    %85 = vector.broadcast %84 : vector<1x128xf32> to vector<160x128xf32>
    %86 = arith.addf %83, %85 : vector<160x128xf32>
    %cst_62 = arith.constant 0.00999999977 : f32
    %87 = vector.broadcast %cst_62 : f32 to vector<160x128xf32>
    %88 = arith.mulf %87, %86 : vector<160x128xf32>
    %89 = arith.maximumf %86, %88 : vector<160x128xf32>
    %90 = vector.shape_cast %89 : vector<160x128xf32> to vector<10x16x128xf32>
    %91 = arith.truncf %90 : vector<10x16x128xf32> to vector<10x16x128xbf16>
    %cst_63 = arith.constant 0.000000e+00 : bf16
    %92 = vector.broadcast %cst_63 : bf16 to vector<10x1x128xbf16>
    %c0_64 = arith.constant 0 : index
    %c7_65 = arith.constant 7 : index
    %c0_66 = arith.constant 0 : index
    %93 = vector.load %arg10[%c0_64, %c7_65, %c0_66] : memref<10x32x128xbf16, #tpu.memory_space<vmem>>, vector<10x1x128xbf16>
    tpu.vector_store %arg10[%c0_64, %c7_65, %c0_66], %92 {strides = array<i32>} : memref<10x32x128xbf16, #tpu.memory_space<vmem>>, vector<10x1x128xbf16>,
    %cst_67 = arith.constant 0.000000e+00 : bf16
    %94 = vector.broadcast %cst_67 : bf16 to vector<10x1x128xbf16>
    %c0_68 = arith.constant 0 : index
    %c24 = arith.constant 24 : index
    %c0_69 = arith.constant 0 : index
    %95 = vector.load %arg10[%c0_68, %c24, %c0_69] : memref<10x32x128xbf16, #tpu.memory_space<vmem>>, vector<10x1x128xbf16>
    tpu.vector_store %arg10[%c0_68, %c24, %c0_69], %94 {strides = array<i32>} : memref<10x32x128xbf16, #tpu.memory_space<vmem>>, vector<10x1x128xbf16>,
    %c0_70 = arith.constant 0 : index
    %c8_71 = arith.constant 8 : index
    %c0_72 = arith.constant 0 : index
    %96 = vector.load %arg10[%c0_70, %c8_71, %c0_72] : memref<10x32x128xbf16, #tpu.memory_space<vmem>>, vector<10x16x128xbf16>
    tpu.vector_store %arg10[%c0_70, %c8_71, %c0_72], %91 {strides = array<i32>} : memref<10x32x128xbf16, #tpu.memory_space<vmem>>, vector<10x16x128xbf16>,
    %c0_i32_73 = arith.constant 0 : i32
    %97 = arith.cmpi eq, %arg1, %c0_i32_73 : i32
    %98 = arith.extui %97 : i1 to i32
    %c0_i32_74 = arith.constant 0 : i32
    %99 = arith.cmpi ne, %98, %c0_i32_74 : i32
    scf.if %99 {
      %cst_156 = arith.constant 0.000000e+00 : bf16
      %180 = vector.broadcast %cst_156 : bf16 to vector<1x32x128xbf16>
      %c0_157 = arith.constant 0 : index
      %c0_158 = arith.constant 0 : index
      %c0_159 = arith.constant 0 : index
      %181 = vector.load %arg10[%c0_157, %c0_158, %c0_159] : memref<10x32x128xbf16, #tpu.memory_space<vmem>>, vector<1x32x128xbf16>
      tpu.vector_store %arg10[%c0_157, %c0_158, %c0_159], %180 {strides = array<i32>} : memref<10x32x128xbf16, #tpu.memory_space<vmem>>, vector<1x32x128xbf16>,
    } else {
    }
    %c1_i32_75 = arith.constant 1 : i32
    %100 = arith.cmpi eq, %arg1, %c1_i32_75 : i32
    %101 = arith.extui %100 : i1 to i32
    %c0_i32_76 = arith.constant 0 : i32
    %102 = arith.cmpi ne, %101, %c0_i32_76 : i32
    scf.if %102 {
      %cst_156 = arith.constant 0.000000e+00 : bf16
      %180 = vector.broadcast %cst_156 : bf16 to vector<1x32x128xbf16>
      %c9_157 = arith.constant 9 : index
      %c0_158 = arith.constant 0 : index
      %c0_159 = arith.constant 0 : index
      %181 = vector.load %arg10[%c9_157, %c0_158, %c0_159] : memref<10x32x128xbf16, #tpu.memory_space<vmem>>, vector<1x32x128xbf16>
      tpu.vector_store %arg10[%c9_157, %c0_158, %c0_159], %180 {strides = array<i32>} : memref<10x32x128xbf16, #tpu.memory_space<vmem>>, vector<1x32x128xbf16>,
    } else {
    }
    %cst_77 = arith.constant 0.000000e+00 : f32
    %103 = vector.broadcast %cst_77 : f32 to vector<128x128xf32>
    %c0_78 = arith.constant 0 : index
    %c7_79 = arith.constant 7 : index
    %c0_80 = arith.constant 0 : index
    %104 = vector.load %arg10[%c0_78, %c7_79, %c0_80] : memref<10x32x128xbf16, #tpu.memory_space<vmem>>, vector<8x16x128xbf16>
    %105 = vector.shape_cast %104 : vector<8x16x128xbf16> to vector<128x128xbf16>
    %c0_81 = arith.constant 0 : index
    %c0_82 = arith.constant 0 : index
    %c0_83 = arith.constant 0 : index
    %106 = vector.load %arg5[%c0_81, %c0_82, %c0_83] : memref<9x128x128xbf16, #tpu.memory_space<vmem>>, vector<1x128x128xbf16>
    %107 = vector.shape_cast %106 : vector<1x128x128xbf16> to vector<128x128xbf16>
    %cst_84 = arith.constant dense<0.000000e+00> : vector<128x128xf32>
    %108 = tpu.matmul %105, %107, %cst_84 {dimension_numbers = #tpu.dot_dimension_numbers<[1], [0], [0], [1], [0, 0, 1, 1], [], []>} : vector<128x128xbf16>, vector<128x128xbf16>, vector<128x128xf32> -> vector<128x128xf32>
    %109 = arith.addf %103, %108 : vector<128x128xf32>
    %c0_85 = arith.constant 0 : index
    %c8_86 = arith.constant 8 : index
    %c0_87 = arith.constant 0 : index
    %110 = vector.load %arg10[%c0_85, %c8_86, %c0_87] : memref<10x32x128xbf16, #tpu.memory_space<vmem>>, vector<8x16x128xbf16>
    %111 = vector.shape_cast %110 : vector<8x16x128xbf16> to vector<128x128xbf16>
    %c1_88 = arith.constant 1 : index
    %c0_89 = arith.constant 0 : index
    %c0_90 = arith.constant 0 : index
    %112 = vector.load %arg5[%c1_88, %c0_89, %c0_90] : memref<9x128x128xbf16, #tpu.memory_space<vmem>>, vector<1x128x128xbf16>
    %113 = vector.shape_cast %112 : vector<1x128x128xbf16> to vector<128x128xbf16>
    %cst_91 = arith.constant dense<0.000000e+00> : vector<128x128xf32>
    %114 = tpu.matmul %111, %113, %cst_91 {dimension_numbers = #tpu.dot_dimension_numbers<[1], [0], [0], [1], [0, 0, 1, 1], [], []>} : vector<128x128xbf16>, vector<128x128xbf16>, vector<128x128xf32> -> vector<128x128xf32>
    %115 = arith.addf %109, %114 : vector<128x128xf32>
    %c0_92 = arith.constant 0 : index
    %c9 = arith.constant 9 : index
    %c0_93 = arith.constant 0 : index
    %116 = vector.load %arg10[%c0_92, %c9, %c0_93] : memref<10x32x128xbf16, #tpu.memory_space<vmem>>, vector<8x16x128xbf16>
    %117 = vector.shape_cast %116 : vector<8x16x128xbf16> to vector<128x128xbf16>
    %c2_94 = arith.constant 2 : index
    %c0_95 = arith.constant 0 : index
    %c0_96 = arith.constant 0 : index
    %118 = vector.load %arg5[%c2_94, %c0_95, %c0_96] : memref<9x128x128xbf16, #tpu.memory_space<vmem>>, vector<1x128x128xbf16>
    %119 = vector.shape_cast %118 : vector<1x128x128xbf16> to vector<128x128xbf16>
    %cst_97 = arith.constant dense<0.000000e+00> : vector<128x128xf32>
    %120 = tpu.matmul %117, %119, %cst_97 {dimension_numbers = #tpu.dot_dimension_numbers<[1], [0], [0], [1], [0, 0, 1, 1], [], []>} : vector<128x128xbf16>, vector<128x128xbf16>, vector<128x128xf32> -> vector<128x128xf32>
    %121 = arith.addf %115, %120 : vector<128x128xf32>
    %c1_98 = arith.constant 1 : index
    %c7_99 = arith.constant 7 : index
    %c0_100 = arith.constant 0 : index
    %122 = vector.load %arg10[%c1_98, %c7_99, %c0_100] : memref<10x32x128xbf16, #tpu.memory_space<vmem>>, vector<8x16x128xbf16>
    %123 = vector.shape_cast %122 : vector<8x16x128xbf16> to vector<128x128xbf16>
    %c3_101 = arith.constant 3 : index
    %c0_102 = arith.constant 0 : index
    %c0_103 = arith.constant 0 : index
    %124 = vector.load %arg5[%c3_101, %c0_102, %c0_103] : memref<9x128x128xbf16, #tpu.memory_space<vmem>>, vector<1x128x128xbf16>
    %125 = vector.shape_cast %124 : vector<1x128x128xbf16> to vector<128x128xbf16>
    %cst_104 = arith.constant dense<0.000000e+00> : vector<128x128xf32>
    %126 = tpu.matmul %123, %125, %cst_104 {dimension_numbers = #tpu.dot_dimension_numbers<[1], [0], [0], [1], [0, 0, 1, 1], [], []>} : vector<128x128xbf16>, vector<128x128xbf16>, vector<128x128xf32> -> vector<128x128xf32>
    %127 = arith.addf %121, %126 : vector<128x128xf32>
    %c1_105 = arith.constant 1 : index
    %c8_106 = arith.constant 8 : index
    %c0_107 = arith.constant 0 : index
    %128 = vector.load %arg10[%c1_105, %c8_106, %c0_107] : memref<10x32x128xbf16, #tpu.memory_space<vmem>>, vector<8x16x128xbf16>
    %129 = vector.shape_cast %128 : vector<8x16x128xbf16> to vector<128x128xbf16>
    %c4_108 = arith.constant 4 : index
    %c0_109 = arith.constant 0 : index
    %c0_110 = arith.constant 0 : index
    %130 = vector.load %arg5[%c4_108, %c0_109, %c0_110] : memref<9x128x128xbf16, #tpu.memory_space<vmem>>, vector<1x128x128xbf16>
    %131 = vector.shape_cast %130 : vector<1x128x128xbf16> to vector<128x128xbf16>
    %cst_111 = arith.constant dense<0.000000e+00> : vector<128x128xf32>
    %132 = tpu.matmul %129, %131, %cst_111 {dimension_numbers = #tpu.dot_dimension_numbers<[1], [0], [0], [1], [0, 0, 1, 1], [], []>} : vector<128x128xbf16>, vector<128x128xbf16>, vector<128x128xf32> -> vector<128x128xf32>
    %133 = arith.addf %127, %132 : vector<128x128xf32>
    %c1_112 = arith.constant 1 : index
    %c9_113 = arith.constant 9 : index
    %c0_114 = arith.constant 0 : index
    %134 = vector.load %arg10[%c1_112, %c9_113, %c0_114] : memref<10x32x128xbf16, #tpu.memory_space<vmem>>, vector<8x16x128xbf16>
    %135 = vector.shape_cast %134 : vector<8x16x128xbf16> to vector<128x128xbf16>
    %c5_115 = arith.constant 5 : index
    %c0_116 = arith.constant 0 : index
    %c0_117 = arith.constant 0 : index
    %136 = vector.load %arg5[%c5_115, %c0_116, %c0_117] : memref<9x128x128xbf16, #tpu.memory_space<vmem>>, vector<1x128x128xbf16>
    %137 = vector.shape_cast %136 : vector<1x128x128xbf16> to vector<128x128xbf16>
    %cst_118 = arith.constant dense<0.000000e+00> : vector<128x128xf32>
    %138 = tpu.matmul %135, %137, %cst_118 {dimension_numbers = #tpu.dot_dimension_numbers<[1], [0], [0], [1], [0, 0, 1, 1], [], []>} : vector<128x128xbf16>, vector<128x128xbf16>, vector<128x128xf32> -> vector<128x128xf32>
    %139 = arith.addf %133, %138 : vector<128x128xf32>
    %c2_119 = arith.constant 2 : index
    %c7_120 = arith.constant 7 : index
    %c0_121 = arith.constant 0 : index
    %140 = vector.load %arg10[%c2_119, %c7_120, %c0_121] : memref<10x32x128xbf16, #tpu.memory_space<vmem>>, vector<8x16x128xbf16>
    %141 = vector.shape_cast %140 : vector<8x16x128xbf16> to vector<128x128xbf16>
    %c6_122 = arith.constant 6 : index
    %c0_123 = arith.constant 0 : index
    %c0_124 = arith.constant 0 : index
    %142 = vector.load %arg5[%c6_122, %c0_123, %c0_124] : memref<9x128x128xbf16, #tpu.memory_space<vmem>>, vector<1x128x128xbf16>
    %143 = vector.shape_cast %142 : vector<1x128x128xbf16> to vector<128x128xbf16>
    %cst_125 = arith.constant dense<0.000000e+00> : vector<128x128xf32>
    %144 = tpu.matmul %141, %143, %cst_125 {dimension_numbers = #tpu.dot_dimension_numbers<[1], [0], [0], [1], [0, 0, 1, 1], [], []>} : vector<128x128xbf16>, vector<128x128xbf16>, vector<128x128xf32> -> vector<128x128xf32>
    %145 = arith.addf %139, %144 : vector<128x128xf32>
    %c2_126 = arith.constant 2 : index
    %c8_127 = arith.constant 8 : index
    %c0_128 = arith.constant 0 : index
    %146 = vector.load %arg10[%c2_126, %c8_127, %c0_128] : memref<10x32x128xbf16, #tpu.memory_space<vmem>>, vector<8x16x128xbf16>
    %147 = vector.shape_cast %146 : vector<8x16x128xbf16> to vector<128x128xbf16>
    %c7_129 = arith.constant 7 : index
    %c0_130 = arith.constant 0 : index
    %c0_131 = arith.constant 0 : index
    %148 = vector.load %arg5[%c7_129, %c0_130, %c0_131] : memref<9x128x128xbf16, #tpu.memory_space<vmem>>, vector<1x128x128xbf16>
    %149 = vector.shape_cast %148 : vector<1x128x128xbf16> to vector<128x128xbf16>
    %cst_132 = arith.constant dense<0.000000e+00> : vector<128x128xf32>
    %150 = tpu.matmul %147, %149, %cst_132 {dimension_numbers = #tpu.dot_dimension_numbers<[1], [0], [0], [1], [0, 0, 1, 1], [], []>} : vector<128x128xbf16>, vector<128x128xbf16>, vector<128x128xf32> -> vector<128x128xf32>
    %151 = arith.addf %145, %150 : vector<128x128xf32>
    %c2_133 = arith.constant 2 : index
    %c9_134 = arith.constant 9 : index
    %c0_135 = arith.constant 0 : index
    %152 = vector.load %arg10[%c2_133, %c9_134, %c0_135] : memref<10x32x128xbf16, #tpu.memory_space<vmem>>, vector<8x16x128xbf16>
    %153 = vector.shape_cast %152 : vector<8x16x128xbf16> to vector<128x128xbf16>
    %c8_136 = arith.constant 8 : index
    %c0_137 = arith.constant 0 : index
    %c0_138 = arith.constant 0 : index
    %154 = vector.load %arg5[%c8_136, %c0_137, %c0_138] : memref<9x128x128xbf16, #tpu.memory_space<vmem>>, vector<1x128x128xbf16>
    %155 = vector.shape_cast %154 : vector<1x128x128xbf16> to vector<128x128xbf16>
    %cst_139 = arith.constant dense<0.000000e+00> : vector<128x128xf32>
    %156 = tpu.matmul %153, %155, %cst_139 {dimension_numbers = #tpu.dot_dimension_numbers<[1], [0], [0], [1], [0, 0, 1, 1], [], []>} : vector<128x128xbf16>, vector<128x128xbf16>, vector<128x128xf32> -> vector<128x128xf32>
    %157 = arith.addf %151, %156 : vector<128x128xf32>
    %c0_140 = arith.constant 0 : index
    %c0_141 = arith.constant 0 : index
    %158 = vector.load %arg6[%c0_140, %c0_141] : memref<1x128xf32, #tpu.memory_space<vmem>>, vector<1x128xf32>
    %159 = vector.broadcast %158 : vector<1x128xf32> to vector<128x128xf32>
    %160 = arith.addf %157, %159 : vector<128x128xf32>
    %c2_i32_142 = arith.constant 2 : i32
    %161 = arith.addi %1, %c2_i32_142 : i32
    %c0_143 = arith.constant 0 : index
    %162 = arith.index_cast %161 : i32 to index
    %c1_144 = arith.constant 1 : index
    %c0_145 = arith.constant 0 : index
    %163 = vector.load %arg2[%c0_143, %162, %c1_144, %c0_145] : memref<1x20x18x4xbf16, #tpu.memory_space<vmem>>, vector<1x8x16x4xbf16>
    %164 = vector.shape_cast %163 : vector<1x8x16x4xbf16> to vector<8x16x4xbf16>
    %165 = vector.shape_cast %164 : vector<8x16x4xbf16> to vector<128x4xbf16>
    %c0_146 = arith.constant 0 : index
    %c0_147 = arith.constant 0 : index
    %166 = vector.load %arg7[%c0_146, %c0_147] : memref<4x128xbf16, #tpu.memory_space<vmem>>, vector<4x128xbf16>
    %cst_148 = arith.constant dense<0.000000e+00> : vector<128x128xf32>
    %167 = tpu.matmul %165, %166, %cst_148 {dimension_numbers = #tpu.dot_dimension_numbers<[1], [0], [0], [1], [0, 0, 1, 1], [], []>} : vector<128x4xbf16>, vector<4x128xbf16>, vector<128x128xf32> -> vector<128x128xf32>
    %c0_149 = arith.constant 0 : index
    %c0_150 = arith.constant 0 : index
    %168 = vector.load %arg8[%c0_149, %c0_150] : memref<1x128xf32, #tpu.memory_space<vmem>>, vector<1x128xf32>
    %169 = vector.broadcast %168 : vector<1x128xf32> to vector<128x128xf32>
    %170 = arith.addf %167, %169 : vector<128x128xf32>
    %171 = arith.addf %160, %170 : vector<128x128xf32>
    %cst_151 = arith.constant 0.00999999977 : f32
    %172 = vector.broadcast %cst_151 : f32 to vector<128x128xf32>
    %173 = arith.mulf %172, %171 : vector<128x128xf32>
    %174 = arith.maximumf %171, %173 : vector<128x128xf32>
    %175 = vector.shape_cast %174 : vector<128x128xf32> to vector<8x16x128xf32>
    %176 = arith.truncf %175 : vector<8x16x128xf32> to vector<8x16x128xbf16>
    %c0_152 = arith.constant 0 : index
    %c0_153 = arith.constant 0 : index
    %c0_154 = arith.constant 0 : index
    %c0_155 = arith.constant 0 : index
    %177 = vector.load %arg9[%c0_152, %c0_153, %c0_154, %c0_155] : memref<1x8x16x128xbf16, #tpu.memory_space<vmem>>, vector<1x8x16x128xbf16>
    %178 = vector.shape_cast %177 : vector<1x8x16x128xbf16> to vector<8x16x128xbf16>
    %179 = vector.shape_cast %176 : vector<8x16x128xbf16> to vector<1x8x16x128xbf16>
    tpu.vector_store %arg9[%c0_152, %c0_153, %c0_154, %c0_155], %179 {strides = array<i32>} : memref<1x8x16x128xbf16, #tpu.memory_space<vmem>>, vector<1x8x16x128xbf16>,
    return
  }
  func.func @transform_0(%arg0: i32, %arg1: i32) -> (i32, i32, i32, i32) {
    %c0_i32 = arith.constant 0 : i32
    %c0_i32_0 = arith.constant 0 : i32
    %c0_i32_1 = arith.constant 0 : i32
    %c0_i32_2 = arith.constant 0 : i32
    return %arg0, %c0_i32, %c0_i32_0, %c0_i32_1 : i32, i32, i32, i32
  }
  func.func @transform_1(%arg0: i32, %arg1: i32) -> (i32, i32, i32) {
    %c0_i32 = arith.constant 0 : i32
    %c0_i32_0 = arith.constant 0 : i32
    %c0_i32_1 = arith.constant 0 : i32
    %c0_i32_2 = arith.constant 0 : i32
    return %c0_i32, %c0_i32_0, %c0_i32_1 : i32, i32, i32
  }
  func.func @transform_2(%arg0: i32, %arg1: i32) -> (i32, i32) {
    %c0_i32 = arith.constant 0 : i32
    %c0_i32_0 = arith.constant 0 : i32
    %c0_i32_1 = arith.constant 0 : i32
    return %c0_i32, %c0_i32_0 : i32, i32
  }
  func.func @transform_3(%arg0: i32, %arg1: i32) -> (i32, i32, i32) {
    %c0_i32 = arith.constant 0 : i32
    %c0_i32_0 = arith.constant 0 : i32
    %c0_i32_1 = arith.constant 0 : i32
    %c0_i32_2 = arith.constant 0 : i32
    return %c0_i32, %c0_i32_0, %c0_i32_1 : i32, i32, i32
  }
  func.func @transform_4(%arg0: i32, %arg1: i32) -> (i32, i32) {
    %c0_i32 = arith.constant 0 : i32
    %c0_i32_0 = arith.constant 0 : i32
    %c0_i32_1 = arith.constant 0 : i32
    return %c0_i32, %c0_i32_0 : i32, i32
  }
  func.func @transform_5(%arg0: i32, %arg1: i32) -> (i32, i32) {
    %c0_i32 = arith.constant 0 : i32
    %c0_i32_0 = arith.constant 0 : i32
    %c0_i32_1 = arith.constant 0 : i32
    return %c0_i32, %c0_i32_0 : i32, i32
  }
  func.func @transform_6(%arg0: i32, %arg1: i32) -> (i32, i32) {
    %c0_i32 = arith.constant 0 : i32
    %c0_i32_0 = arith.constant 0 : i32
    %c0_i32_1 = arith.constant 0 : i32
    return %c0_i32, %c0_i32_0 : i32, i32
  }
  func.func @transform_7(%arg0: i32, %arg1: i32) -> (i32, i32, i32, i32) {
    %c0_i32 = arith.constant 0 : i32
    %c0_i32_0 = arith.constant 0 : i32
    %c0_i32_1 = arith.constant 0 : i32
    return %arg0, %arg1, %c0_i32, %c0_i32_0 : i32, i32, i32, i32
  }
}

</mosaic_0001>

<llo_original>
// kernel: tpu_custom_call.1
$region0: #{tpu_custom_call.1}
  #allocation0 [shape = 'u32[]', space=smem, size = 0x4, offset = 0x4, fixed_abs, tag = 'smem constant byte address 0x4 - core index']
  #allocation1 [shape = 'u32[144,128]{1,0:T(1,128)}', space=vmem, size = 0x12000, scoped, tag = 'internal scratch']
  #allocation2 [shape = 'bf16[10,32,128]{2,1,0:T(16,128)(2,1)}', space=vmem, size = 0x14000, scoped, tag = 'scratch operand']
  %s0 = inlined_call_operand.vmem [shape: bf16[2,20,18,4], index: 0, kind: input, shape index: {}]
  %s1 = inlined_call_operand.vmem [shape: bf16[9,4,128], index: 1, kind: input, shape index: {}]
  %s2 = inlined_call_operand.vmem [shape: f32[1,128], index: 2, kind: input, shape index: {}]
  %s3 = inlined_call_operand.hbm [shape: bf16[9,128,128], index: 3, kind: input, shape index: {}]
  %s4 = inlined_call_operand.vmem [shape: f32[1,128], index: 4, kind: input, shape index: {}]
  %s5 = inlined_call_operand.vmem [shape: bf16[4,128], index: 5, kind: input, shape index: {}]
  %s6 = inlined_call_operand.vmem [shape: f32[1,128], index: 6, kind: input, shape index: {}]
  %s7 = inlined_call_operand.hbm [shape: bf16[2,16,16,128], index: 7, kind: output, shape index: {}]
  %s8 = sld [smem:[#allocation0]]
  $region73: #{tpu_custom_call.1} parent=0
    _
  %s10 = ssub.s32 1, %s8
  %s11 = scalar_select 0, %s10, %s8
  $region1: #{tpu_custom_call.1} parent=0
    #allocation3 [shape = 'u8[294912]{0}', space=vmem, size = 0x48000, scoped, tag = 'input window, operand 3, single buffered']
    #allocation4 [shape = 's32[2]{0}', space=sflag, size = 0x8, scoped, tag = 'scoped memory for tpu_custom_call.1']
    #allocation5 [shape = 's32[2]{0}', space=sflag, size = 0x8, scoped, tag = 'scoped memory for tpu_custom_call.1']
    #allocation6 [shape = 'u8[65536]{0}', space=vmem, size = 0x10000, scoped, tag = 'output window, operand 0']
    %12 = vsyncpa [#allocation4], 0
    %13 = vsyncpa [#allocation5], 0
    %s14 = scalar_lea.sflag [#allocation5], 1
    %15 = vsyncpa %s14, 0
    loop: start=0, step=1, limit=6
    $region2: #{tpu_custom_call.1} parent=1 // loop_pre_header
      _
    $region3: #{tpu_custom_call.1} parent=1 // loop_header
      %s17 = sphi 0, %s21
      %p18 = scmp.ge.s32.totalorder %s17, 6
      %s24 = sphi 0, %s36
      %s25 = sphi 0, %s32
      %s26 = sphi 0, %s24
      %s27 = sphi 0, %s25
      %s28 = sphi 0, %s26
      %s29 = sphi 0, %s27
      %s39 = sphi 0, %s41
      %s42 = sphi 0, %s39
      %s43 = sphi 0, %s42
      %s59 = sphi 0, %s43
      %s63 = sphi 0, %s63
      %s65 = sphi 0, %s63
      %s66 = sphi 0, %s65
      %s80 = sphi 0, %s66
      %s84 = sphi 0, %s84
      %s86 = sphi 0, %s84
      %s87 = sphi 0, %s86
      %s101 = sphi 0, %s87
      %s105 = sphi 0, %s105
      %s107 = sphi 0, %s105
      %s108 = sphi 0, %s107
      %s122 = sphi 0, %s108
      %s126 = sphi 0, %s126
      %s128 = sphi 0, %s126
      %s129 = sphi 0, %s128
      %s143 = sphi 0, %s129
      %s147 = sphi 0, %s147
      %s149 = sphi 0, %s147
      %s150 = sphi 0, %s149
      %s164 = sphi 0, %s150
      %s168 = sphi 0, %s168
      %s170 = sphi 0, %s168
      %s171 = sphi 0, %s170
      %s185 = sphi 0, %s171
      %s193 = sphi 0, %s195
      %s196 = sphi 0, %s193
      %s197 = sphi 0, %s196
      %s213 = sphi 0, %s197
    $region4: #{tpu_custom_call.1} parent=1 // loop_header_branch
      %20 = sbr.rel (%p18) target = $region8
    $region5: #{tpu_custom_call.1} parent=1 // loop_body
      %s22 = ssub.s32 %s17, 1
      %s23 = ssub.s32 %s17, 2
      %s30 = sadd.s32 1, %s25
      %p31 = scmp.ge.s32.totalorder %s30, 2
      %s32 = scalar_select %p31, 0, %s30
      %s33 = sadd.s32 1, %s24
      %s34 = scalar_select %p31, %s33, %s24
      %p35 = scmp.ge.s32.totalorder %s34, 2
      %s36 = scalar_select %p35, 0, %s34
      %s37 = ssub.s32 %s24, %s36
      %p38 = scmp.eq.s32.totalorder %s37, 0
      %s40 = sadd.s32 %s39, 1
      %s41 = scalar_select %p38, %s39, %s40
      %p44 = pneg %p38
      %p45 = scmp.eq.s32.totalorder %s17, 3
      %p46 = por %p44, %p45
      %p47 = scmp.ne.s32.totalorder %s39, %s42
      %p48 = scmp.eq.s32.totalorder %s17, 0
      %p49 = por %p47, %p48
      %p50 = scmp.ne.s32.totalorder %s39, %s42
      %p51 = scmp.eq.s32.totalorder %s22, 3
      %p52 = por %p50, %p51
      %p53 = scmp.ne.s32.totalorder %s42, %s43
      %p54 = scmp.eq.s32.totalorder %s22, 0
      %p55 = por %p53, %p54
      %p56 = scmp.ne.s32.totalorder %s42, %s43
      %p57 = scmp.eq.s32.totalorder %s23, 3
      %p58 = por %p56, %p57
      %p60 = scmp.ne.s32.totalorder %s43, %s59
      %p61 = scmp.eq.s32.totalorder %s23, 0
      %p62 = por %p60, %p61
      %s64 = sadd.s32 %s63, 1
      %p67 = scmp.eq.s32.totalorder %s17, 3
      %p68 = scmp.ne.s32.totalorder %s63, %s65
      %p69 = scmp.eq.s32.totalorder %s17, 0
      %p70 = por %p68, %p69
      %p71 = scmp.ne.s32.totalorder %s63, %s65
      %p72 = scmp.eq.s32.totalorder %s22, 3
      %p73 = por %p71, %p72
      %p74 = scmp.ne.s32.totalorder %s65, %s66
      %p75 = scmp.eq.s32.totalorder %s22, 0
      %p76 = por %p74, %p75
      %p77 = scmp.ne.s32.totalorder %s65, %s66
      %p78 = scmp.eq.s32.totalorder %s23, 3
      %p79 = por %p77, %p78
      %p81 = scmp.ne.s32.totalorder %s66, %s80
      %p82 = scmp.eq.s32.totalorder %s23, 0
      %p83 = por %p81, %p82
      %s85 = sadd.s32 %s84, 1
      %p88 = scmp.eq.s32.totalorder %s17, 3
      %p89 = scmp.ne.s32.totalorder %s84, %s86
      %p90 = scmp.eq.s32.totalorder %s17, 0
      %p91 = por %p89, %p90
      %p92 = scmp.ne.s32.totalorder %s84, %s86
      %p93 = scmp.eq.s32.totalorder %s22, 3
      %p94 = por %p92, %p93
      %p95 = scmp.ne.s32.totalorder %s86, %s87
      %p96 = scmp.eq.s32.totalorder %s22, 0
      %p97 = por %p95, %p96
      %p98 = scmp.ne.s32.totalorder %s86, %s87
      %p99 = scmp.eq.s32.totalorder %s23, 3
      %p100 = por %p98, %p99
      %p102 = scmp.ne.s32.totalorder %s87, %s101
      %p103 = scmp.eq.s32.totalorder %s23, 0
      %p104 = por %p102, %p103
      %s106 = sadd.s32 %s105, 1
      %p109 = scmp.eq.s32.totalorder %s17, 3
      %p110 = scmp.ne.s32.totalorder %s105, %s107
      %p111 = scmp.eq.s32.totalorder %s17, 0
      %p112 = por %p110, %p111
      %p113 = scmp.ne.s32.totalorder %s105, %s107
      %p114 = scmp.eq.s32.totalorder %s22, 3
      %p115 = por %p113, %p114
      %p116 = scmp.ne.s32.totalorder %s107, %s108
      %p117 = scmp.eq.s32.totalorder %s22, 0
      %p118 = por %p116, %p117
      %p119 = scmp.ne.s32.totalorder %s107, %s108
      %p120 = scmp.eq.s32.totalorder %s23, 3
      %p121 = por %p119, %p120
      %p123 = scmp.ne.s32.totalorder %s108, %s122
      %p124 = scmp.eq.s32.totalorder %s23, 0
      %p125 = por %p123, %p124
      %s127 = sadd.s32 %s126, 1
      %p130 = scmp.eq.s32.totalorder %s17, 3
      %p131 = scmp.ne.s32.totalorder %s126, %s128
      %p132 = scmp.eq.s32.totalorder %s17, 0
      %p133 = por %p131, %p132
      %p134 = scmp.ne.s32.totalorder %s126, %s128
      %p135 = scmp.eq.s32.totalorder %s22, 3
      %p136 = por %p134, %p135
      %p137 = scmp.ne.s32.totalorder %s128, %s129
      %p138 = scmp.eq.s32.totalorder %s22, 0
      %p139 = por %p137, %p138
      %p140 = scmp.ne.s32.totalorder %s128, %s129
      %p141 = scmp.eq.s32.totalorder %s23, 3
      %p142 = por %p140, %p141
      %p144 = scmp.ne.s32.totalorder %s129, %s143
      %p145 = scmp.eq.s32.totalorder %s23, 0
      %p146 = por %p144, %p145
      %s148 = sadd.s32 %s147, 1
      %p151 = scmp.eq.s32.totalorder %s17, 3
      %p152 = scmp.ne.s32.totalorder %s147, %s149
      %p153 = scmp.eq.s32.totalorder %s17, 0
      %p154 = por %p152, %p153
      %p155 = scmp.ne.s32.totalorder %s147, %s149
      %p156 = scmp.eq.s32.totalorder %s22, 3
      %p157 = por %p155, %p156
      %p158 = scmp.ne.s32.totalorder %s149, %s150
      %p159 = scmp.eq.s32.totalorder %s22, 0
      %p160 = por %p158, %p159
      %p161 = scmp.ne.s32.totalorder %s149, %s150
      %p162 = scmp.eq.s32.totalorder %s23, 3
      %p163 = por %p161, %p162
      %p165 = scmp.ne.s32.totalorder %s150, %s164
      %p166 = scmp.eq.s32.totalorder %s23, 0
      %p167 = por %p165, %p166
      %s169 = sadd.s32 %s168, 1
      %p172 = scmp.eq.s32.totalorder %s17, 3
      %p173 = scmp.ne.s32.totalorder %s168, %s170
      %p174 = scmp.eq.s32.totalorder %s17, 0
      %p175 = por %p173, %p174
      %p176 = scmp.ne.s32.totalorder %s168, %s170
      %p177 = scmp.eq.s32.totalorder %s22, 3
      %p178 = por %p176, %p177
      %p179 = scmp.ne.s32.totalorder %s170, %s171
      %p180 = scmp.eq.s32.totalorder %s22, 0
      %p181 = por %p179, %p180
      %p182 = scmp.ne.s32.totalorder %s170, %s171
      %p183 = scmp.eq.s32.totalorder %s23, 3
      %p184 = por %p182, %p183
      %p186 = scmp.ne.s32.totalorder %s171, %s185
      %p187 = scmp.eq.s32.totalorder %s23, 0
      %p188 = por %p186, %p187
      %s189 = ssub.s32 %s24, %s36
      %s190 = ssub.s32 %s25, %s32
      %s191 = sor.u32 %s189, %s190
      %p192 = scmp.eq.s32.totalorder %s191, 0
      %s194 = sadd.s32 %s193, 1
      %s195 = scalar_select %p192, %s193, %s194
      %p198 = pneg %p192
      %p199 = scmp.eq.s32.totalorder %s17, 3
      %p200 = por %p198, %p199
      %p201 = scmp.ne.s32.totalorder %s193, %s196
      %p202 = scmp.eq.s32.totalorder %s17, 0
      %p203 = por %p201, %p202
      %p204 = scmp.ne.s32.totalorder %s193, %s196
      %p205 = scmp.eq.s32.totalorder %s22, 3
      %p206 = por %p204, %p205
      %p207 = scmp.ne.s32.totalorder %s196, %s197
      %p208 = scmp.eq.s32.totalorder %s22, 0
      %p209 = por %p207, %p208
      %p210 = scmp.ne.s32.totalorder %s196, %s197
      %p211 = scmp.eq.s32.totalorder %s23, 3
      %p212 = por %p210, %p211
      %p214 = scmp.ne.s32.totalorder %s197, %s213
      %p215 = scmp.eq.s32.totalorder %s23, 0
      %p216 = por %p214, %p215
      %p217 = scmp.le.s32.totalorder 1, %s17
      %p218 = scmp.lt.s32.totalorder %s17, 5
      %p219 = pnand %p217, %p218
      %p220 = pneg %p219
      // Predicated region
      $region9: #{tpu_custom_call.1} parent=5 // pred_check
        _
      $region10: #{tpu_custom_call.1} parent=5 // pred_check_branch
        %222 = sbr.rel (%p219) target = $region12
      $region11: #{tpu_custom_call.1} parent=5 // pred_region
        %s223 = ssub.s32 %s17, 1
        // Predicated region
        $region13: #{tpu_custom_call.1} parent=11 // pred_check
          %p224 = pneg %p76
        $region14: #{tpu_custom_call.1} parent=11 // pred_check_branch
          %226 = sbr.rel (%p224) target = $region16
        $region15: #{tpu_custom_call.1} parent=11 // pred_region
          _
        $region16: #{tpu_custom_call.1} parent=11 // pred_fallthru
          _
        // Predicated region
        $region17: #{tpu_custom_call.1} parent=11 // pred_check
          %p227 = pneg %p97
        $region18: #{tpu_custom_call.1} parent=11 // pred_check_branch
          %229 = sbr.rel (%p227) target = $region20
        $region19: #{tpu_custom_call.1} parent=11 // pred_region
          _
        $region20: #{tpu_custom_call.1} parent=11 // pred_fallthru
          _
        // Predicated region
        $region21: #{tpu_custom_call.1} parent=11 // pred_check
          %p230 = pneg %p118
        $region22: #{tpu_custom_call.1} parent=11 // pred_check_branch
          %232 = sbr.rel (%p230) target = $region24
        $region23: #{tpu_custom_call.1} parent=11 // pred_region
          %s234 = ssub.s32 9216, 9216
          %235 = vsyncadd [#allocation4], %s234
          %s236 = sshll.u32 [#allocation3], 4
          %s237 = int_to_ptr.vmem [resolvable:$true] %s236
          %242 = dma.hbm_to_vmem [thread:$0]  %s3, 9216, %s237, [#allocation4], 64, 64, 4
        $region24: #{tpu_custom_call.1} parent=11 // pred_fallthru
          _
        // Predicated region
        $region25: #{tpu_custom_call.1} parent=11 // pred_check
          %p243 = pneg %p139
        $region26: #{tpu_custom_call.1} parent=11 // pred_check_branch
          %245 = sbr.rel (%p243) target = $region28
        $region27: #{tpu_custom_call.1} parent=11 // pred_region
          _
        $region28: #{tpu_custom_call.1} parent=11 // pred_fallthru
          _
        // Predicated region
        $region29: #{tpu_custom_call.1} parent=11 // pred_check
          %p246 = pneg %p160
        $region30: #{tpu_custom_call.1} parent=11 // pred_check_branch
          %248 = sbr.rel (%p246) target = $region32
        $region31: #{tpu_custom_call.1} parent=11 // pred_region
          _
        $region32: #{tpu_custom_call.1} parent=11 // pred_fallthru
          _
        // Predicated region
        $region33: #{tpu_custom_call.1} parent=11 // pred_check
          %p249 = pneg %p181
        $region34: #{tpu_custom_call.1} parent=11 // pred_check_branch
          %251 = sbr.rel (%p249) target = $region36
        $region35: #{tpu_custom_call.1} parent=11 // pred_region
          _
        $region36: #{tpu_custom_call.1} parent=11 // pred_fallthru
          _
      $region12: #{tpu_custom_call.1} parent=5 // pred_fallthru
        _
      %p252 = scmp.lt.s32.totalorder %s17, 4
      // Predicated region
      $region37: #{tpu_custom_call.1} parent=5 // pred_check
        %p253 = pneg %p252
      $region38: #{tpu_custom_call.1} parent=5 // pred_check_branch
        %255 = sbr.rel (%p253) target = $region40
      $region39: #{tpu_custom_call.1} parent=5 // pred_region
        // Predicated region
        $region41: #{tpu_custom_call.1} parent=39 // pred_check
          %p256 = pneg %p49
        $region42: #{tpu_custom_call.1} parent=39 // pred_check_branch
          %258 = sbr.rel (%p256) target = $region44
        $region43: #{tpu_custom_call.1} parent=39 // pred_region
          %p259 = scmp.lt.s32.totalorder %s24, 1
          %s260 = scalar_select %p259, %s24, 1
          %s261 = smul.addr %s260, 60
          %s262 = smul.addr %s261, 4
          %s263 = scalar_lea.vmem %s0, %s262
        $region44: #{tpu_custom_call.1} parent=39 // pred_fallthru
          _
      $region40: #{tpu_custom_call.1} parent=5 // pred_fallthru
        _
      %p264 = scmp.le.s32.totalorder 1, %s17
      %p265 = scmp.lt.s32.totalorder %s17, 5
      %p266 = pnand %p264, %p265
      %p267 = pneg %p266
      // Predicated region
      $region45: #{tpu_custom_call.1} parent=5 // pred_check
        _
      $region46: #{tpu_custom_call.1} parent=5 // pred_check_branch
        %269 = sbr.rel (%p266) target = $region48
      $region47: #{tpu_custom_call.1} parent=5 // pred_region
        %s270 = ssub.s32 %s17, 1
        // Predicated region
        $region49: #{tpu_custom_call.1} parent=47 // pred_check
          %p271 = pneg %p118
        $region50: #{tpu_custom_call.1} parent=47 // pred_check_branch
          %273 = sbr.rel (%p271) target = $region52
        $region51: #{tpu_custom_call.1} parent=47 // pred_region
          %274 = dma.done [#allocation4], 9216
        $region52: #{tpu_custom_call.1} parent=47 // pred_fallthru
          _
        %p275 = scmp.lt.s32.totalorder %s26, 1
        %s276 = scalar_select %p275, %s26, 1
        %s277 = smul.addr %s276, 60
        %s278 = smul.addr %s277, 4
        %s279 = scalar_lea.vmem %s0, %s278
        %p280 = pneg %p55
        %p281 = pneg %p52
        %p282 = pneg %p76
        %p283 = pneg %p73
        %p284 = pneg %p97
        %p285 = pneg %p94
        %p286 = pneg %p118
        %p287 = pneg %p115
        %p288 = pneg %p139
        %p289 = pneg %p136
        %p290 = pneg %p160
        %p291 = pneg %p157
        %p292 = pneg %p181
        %p293 = pneg %p178
        %p294 = pneg %p209
        %p295 = pneg %p206
        %s296 = sand.u32 %s196, 1
        %s297 = scalar_lea.sflag [#allocation5], %s296
        %s298 = sand.u32 %s196, 1
        %s299 = smul.addr %s298, 64
        %s300 = scalar_lea.vmem [#allocation6], %s299
        %p301 = scmp.lt.s32.totalorder %s26, 1
        %s302 = scalar_select %p301, %s26, 1
        %s303 = smul.addr %s302, 60
        %s304 = smul.addr %s303, 4
        %s305 = scalar_lea.vmem %s0, %s304
        %s306 = smul.u32 8, %s27
        %s308 = smul.u32 %s27, 8
        %s309 = smul.u32 %s308, 3
        %s310 = smul.addr %s309, 4
        %s311 = scalar_lea.vmem %s305, %s310
        %v312 = vld [vmem:[%s311] sm:$0xf]
        %v313 = vld [vmem:[%s311 + $0x4] sm:$0xf]
        %v314 = vld [vmem:[%s311 + $0xc] sm:$0xf]
        %v315 = vld [vmem:[%s311 + $0x10] sm:$0xf]
        %v316 = vld [vmem:[%s311 + $0x18] sm:$0xf]
        %v317 = vld [vmem:[%s311 + $0x1c] sm:$0xf]
        %v318 = vld [vmem:[%s311 + $0x24] sm:$0xf]
        %v319 = vld [vmem:[%s311 + $0x28] sm:$0xf]
        %v320 = vld [vmem:[%s311 + $0x30] sm:$0xf]
        %v321 = vld [vmem:[%s311 + $0x34] sm:$0xf]
        %v322 = vld [vmem:[%s311 + $0x3c] sm:$0xf]
        %v323 = vld [vmem:[%s311 + $0x40] sm:$0xf]
        %v324 = vld [vmem:[%s311 + $0x48] sm:$0xf]
        %v325 = vld [vmem:[%s311 + $0x4c] sm:$0xf]
        %v326 = vld [vmem:[%s311 + $0x54] sm:$0xf]
        %v327 = vld [vmem:[%s311 + $0x58] sm:$0xf]
        %v328 = vld [vmem:[%s311 + $0x60] sm:$0xf]
        %v329 = vld [vmem:[%s311 + $0x64] sm:$0xf]
        %v330 = vld [vmem:[%s311 + $0x6c] sm:$0xf]
        %v331 = vld [vmem:[%s311 + $0x70] sm:$0xf]
        %v332 = vld [vmem:[%s1] sm:$0x3]
        %v333 = vld [vmem:[%s311 + $0x8] sm:$0x1]
        %v334 = vld [vmem:[%s311 + $0x14] sm:$0x1]
        %v335 = vld [vmem:[%s311 + $0x20] sm:$0x1]
        %v336 = vld [vmem:[%s311 + $0x2c] sm:$0x1]
        %v337 = vld [vmem:[%s311 + $0x38] sm:$0x1]
        %v338 = vld [vmem:[%s311 + $0x44] sm:$0x1]
        %v339 = vld [vmem:[%s311 + $0x50] sm:$0x1]
        %v340 = vld [vmem:[%s311 + $0x5c] sm:$0x1]
        %v341 = vld [vmem:[%s311 + $0x68] sm:$0x1]
        %v342 = vld [vmem:[%s311 + $0x74] sm:$0x1]
        %vm343 = vsmask.f32 3328
        %vm344 = vsmask.f32 7440
        %vm345 = vmor %vm343, %vm344
        %v347 = vshrl.u32 %v312, 16
        %v349 = vrot.slane %v347, 4
        %v350 = vshll.u32 %v312, 16
        %v352 = vrot.slane %v350, 5
        %v353 = vor.u32 %v349, %v352
        %v354 = vrot.slane %v353, 4
        %v356 = vshll.u32 %v313, 16
        %v358 = vrot.slane %v356, 5
        %v359 = vsel %vm345, %v354, %v358
        %v360 = vshrl.u32 %v313, 16
        %v362 = vrot.slane %v360, 4
        %v363 = vor.u32 %v362, %v358
        %v364 = vrot.slane %v363, 4
        %v366 = vshll.u32 %v333, 16
        %v368 = vrot.slane %v366, 5
        %v369 = vsel %vm345, %v364, %v368
        %v371 = vshrl.u32 %v314, 16
        %v373 = vrot.slane %v371, 4
        %v374 = vshll.u32 %v314, 16
        %v376 = vrot.slane %v374, 5
        %v377 = vor.u32 %v373, %v376
        %v378 = vrot.slane %v377, 4
        %v380 = vshll.u32 %v315, 16
        %v382 = vrot.slane %v380, 5
        %v383 = vsel %vm345, %v378, %v382
        %v384 = vshrl.u32 %v315, 16
        %v386 = vrot.slane %v384, 4
        %v387 = vor.u32 %v386, %v382
        %v388 = vrot.slane %v387, 4
        %v390 = vshll.u32 %v334, 16
        %v392 = vrot.slane %v390, 5
        %v393 = vsel %vm345, %v388, %v392
        %v395 = vshrl.u32 %v316, 16
        %v397 = vrot.slane %v395, 4
        %v398 = vshll.u32 %v316, 16
        %v400 = vrot.slane %v398, 5
        %v401 = vor.u32 %v397, %v400
        %v402 = vrot.slane %v401, 4
        %v404 = vshll.u32 %v317, 16
        %v406 = vrot.slane %v404, 5
        %v407 = vsel %vm345, %v402, %v406
        %v408 = vshrl.u32 %v317, 16
        %v410 = vrot.slane %v408, 4
        %v411 = vor.u32 %v410, %v406
        %v412 = vrot.slane %v411, 4
        %v414 = vshll.u32 %v335, 16
        %v416 = vrot.slane %v414, 5
        %v417 = vsel %vm345, %v412, %v416
        %v419 = vshrl.u32 %v318, 16
        %v421 = vrot.slane %v419, 4
        %v422 = vshll.u32 %v318, 16
        %v424 = vrot.slane %v422, 5
        %v425 = vor.u32 %v421, %v424
        %v426 = vrot.slane %v425, 4
        %v428 = vshll.u32 %v319, 16
        %v430 = vrot.slane %v428, 5
        %v431 = vsel %vm345, %v426, %v430
        %v432 = vshrl.u32 %v319, 16
        %v434 = vrot.slane %v432, 4
        %v435 = vor.u32 %v434, %v430
        %v436 = vrot.slane %v435, 4
        %v438 = vshll.u32 %v336, 16
        %v440 = vrot.slane %v438, 5
        %v441 = vsel %vm345, %v436, %v440
        %v443 = vshrl.u32 %v320, 16
        %v445 = vrot.slane %v443, 4
        %v446 = vshll.u32 %v320, 16
        %v448 = vrot.slane %v446, 5
        %v449 = vor.u32 %v445, %v448
        %v450 = vrot.slane %v449, 4
        %v452 = vshll.u32 %v321, 16
        %v454 = vrot.slane %v452, 5
        %v455 = vsel %vm345, %v450, %v454
        %v456 = vshrl.u32 %v321, 16
        %v458 = vrot.slane %v456, 4
        %v459 = vor.u32 %v458, %v454
        %v460 = vrot.slane %v459, 4
        %v462 = vshll.u32 %v337, 16
        %v464 = vrot.slane %v462, 5
        %v465 = vsel %vm345, %v460, %v464
        %v467 = vshrl.u32 %v322, 16
        %v469 = vrot.slane %v467, 4
        %v470 = vshll.u32 %v322, 16
        %v472 = vrot.slane %v470, 5
        %v473 = vor.u32 %v469, %v472
        %v474 = vrot.slane %v473, 4
        %v476 = vshll.u32 %v323, 16
        %v478 = vrot.slane %v476, 5
        %v479 = vsel %vm345, %v474, %v478
        %v480 = vshrl.u32 %v323, 16
        %v482 = vrot.slane %v480, 4
        %v483 = vor.u32 %v482, %v478
        %v484 = vrot.slane %v483, 4
        %v486 = vshll.u32 %v338, 16
        %v488 = vrot.slane %v486, 5
        %v489 = vsel %vm345, %v484, %v488
        %v491 = vshrl.u32 %v324, 16
        %v493 = vrot.slane %v491, 4
        %v494 = vshll.u32 %v324, 16
        %v496 = vrot.slane %v494, 5
        %v497 = vor.u32 %v493, %v496
        %v498 = vrot.slane %v497, 4
        %v500 = vshll.u32 %v325, 16
        %v502 = vrot.slane %v500, 5
        %v503 = vsel %vm345, %v498, %v502
        %v504 = vshrl.u32 %v325, 16
        %v506 = vrot.slane %v504, 4
        %v507 = vor.u32 %v506, %v502
        %v508 = vrot.slane %v507, 4
        %v510 = vshll.u32 %v339, 16
        %v512 = vrot.slane %v510, 5
        %v513 = vsel %vm345, %v508, %v512
        %v515 = vshrl.u32 %v326, 16
        %v517 = vrot.slane %v515, 4
        %v518 = vshll.u32 %v326, 16
        %v520 = vrot.slane %v518, 5
        %v521 = vor.u32 %v517, %v520
        %v522 = vrot.slane %v521, 4
        %v524 = vshll.u32 %v327, 16
        %v526 = vrot.slane %v524, 5
        %v527 = vsel %vm345, %v522, %v526
        %v528 = vshrl.u32 %v327, 16
        %v530 = vrot.slane %v528, 4
        %v531 = vor.u32 %v530, %v526
        %v532 = vrot.slane %v531, 4
        %v534 = vshll.u32 %v340, 16
        %v536 = vrot.slane %v534, 5
        %v537 = vsel %vm345, %v532, %v536
        %v539 = vshrl.u32 %v328, 16
        %v541 = vrot.slane %v539, 4
        %v542 = vshll.u32 %v328, 16
        %v544 = vrot.slane %v542, 5
        %v545 = vor.u32 %v541, %v544
        %v546 = vrot.slane %v545, 4
        %v548 = vshll.u32 %v329, 16
        %v550 = vrot.slane %v548, 5
        %v551 = vsel %vm345, %v546, %v550
        %v552 = vshrl.u32 %v329, 16
        %v554 = vrot.slane %v552, 4
        %v555 = vor.u32 %v554, %v550
        %v556 = vrot.slane %v555, 4
        %v558 = vshll.u32 %v341, 16
        %v560 = vrot.slane %v558, 5
        %v561 = vsel %vm345, %v556, %v560
        %v563 = vshrl.u32 %v330, 16
        %v565 = vrot.slane %v563, 4
        %v566 = vshll.u32 %v330, 16
        %v568 = vrot.slane %v566, 5
        %v569 = vor.u32 %v565, %v568
        %v570 = vrot.slane %v569, 4
        %v572 = vshll.u32 %v331, 16
        %v574 = vrot.slane %v572, 5
        %v575 = vsel %vm345, %v570, %v574
        %v576 = vshrl.u32 %v331, 16
        %v578 = vrot.slane %v576, 4
        %v579 = vor.u32 %v578, %v574
        %v580 = vrot.slane %v579, 4
        %v582 = vshll.u32 %v342, 16
        %v584 = vrot.slane %v582, 5
        %v585 = vsel %vm345, %v580, %v584
        %s586 = scalar_lea.vmem %s1, 2
        %v587 = vld [vmem:[%s586] sm:$0x3]
        %v588 = vunpack.c.l.b16 %v359
        %v589 = vunpack.c.l.b16 %v369
        %v590 = vunpack.c.l.b16 %v383
        %v591 = vunpack.c.l.b16 %v393
        %v592 = vunpack.c.l.b16 %v407
        %v593 = vunpack.c.l.b16 %v417
        %v594 = vunpack.c.l.b16 %v431
        %v595 = vunpack.c.l.b16 %v441
        %v596 = vunpack.c.l.b16 %v455
        %v597 = vunpack.c.l.b16 %v465
        %v598 = vunpack.c.l.b16 %v479
        %v599 = vunpack.c.l.b16 %v489
        %v600 = vunpack.c.l.b16 %v503
        %v601 = vunpack.c.l.b16 %v513
        %v602 = vunpack.c.l.b16 %v527
        %v603 = vunpack.c.l.b16 %v537
        %v604 = vunpack.c.l.b16 %v551
        %v605 = vunpack.c.l.b16 %v561
        %v606 = vunpack.c.l.b16 %v575
        %v607 = vunpack.c.l.b16 %v585
        %v608 = vpack.c.b16 %v589, %v588
        %v609 = vpack.c.b16 %v591, %v590
        %v610 = vpack.c.b16 %v593, %v592
        %v611 = vpack.c.b16 %v595, %v594
        %v612 = vpack.c.b16 %v597, %v596
        %v613 = vpack.c.b16 %v599, %v598
        %v614 = vpack.c.b16 %v601, %v600
        %v615 = vpack.c.b16 %v603, %v602
        %v616 = vpack.c.b16 %v605, %v604
        %v617 = vpack.c.b16 %v607, %v606
        %vm618 = vcmask 31744
        %v620 = vsel %vm618, %v608, 0
        %v623 = vsel %vm618, %v609, 0
        %v626 = vsel %vm618, %v610, 0
        %v629 = vsel %vm618, %v611, 0
        %v632 = vsel %vm618, %v612, 0
        %v635 = vsel %vm618, %v613, 0
        %v638 = vsel %vm618, %v614, 0
        %v641 = vsel %vm618, %v615, 0
        %v644 = vsel %vm618, %v616, 0
        %v647 = vsel %vm618, %v617, 0
        %vm649 = vcmask 1041408
        %v651 = vsel %vm649, %v587, 0
        %653 = vmatprep.subr.bf16.mxu0 0
        %654 = vmatpush1.bf16.msra.mxu0 %v651
        %655 = vmatprep.subr.bf16.mxu0 0
        %656 = vmatpush1.bf16.msra.mxu0 0
        %657 = vmatprep.subr.bf16.mxu0 0
        %658 = vmatpush1.bf16.msra.mxu0 0
        %659 = vmatprep.subr.bf16.mxu0 0
        %660 = vmatpush1.bf16.msra.mxu0 0
        %661 = vmatprep.subr.bf16.mxu0 0
        %662 = vmatpush1.bf16.msra.mxu0 0
        %663 = vmatprep.subr.bf16.mxu0 0
        %664 = vmatpush1.bf16.msra.mxu0 0
        %665 = vmatprep.subr.bf16.mxu0 0
        %666 = vmatpush1.bf16.msra.mxu0 0
        %667 = vmatprep.subr.bf16.mxu0 0
        %668 = vmatpush1.bf16.msra.mxu0 0
        %669 = vmatprep.subr.bf16.mxu0 0
        %670 = vmatpush1.bf16.msra.mxu0 0
        %671 = vmatprep.subr.bf16.mxu0 0
        %672 = vmatpush1.bf16.msra.mxu0 0
        %673 = vmatprep.subr.bf16.mxu0 0
        %674 = vmatpush1.bf16.msra.mxu0 0
        %675 = vmatprep.subr.bf16.mxu0 0
        %676 = vmatpush1.bf16.msra.mxu0 0
        %677 = vmatprep.subr.bf16.mxu0 0
        %678 = vmatpush1.bf16.msra.mxu0 0
        %679 = vmatprep.subr.bf16.mxu0 0
        %680 = vmatpush1.bf16.msra.mxu0 0
        %681 = vmatprep.subr.bf16.mxu0 0
        %682 = vmatpush1.bf16.msra.mxu0 0
        %683 = vmatprep.subr.bf16.mxu0 0
        %684 = vmatpush1.bf16.msra.mxu0 0
        %685 = vmatprep.mubr.bf16.mxu0 0
        %686 = vmatmul.mubr.bf16.gmra.mrb[0].mxu0 %v620
        %v687 = vpop.f32.mrb[0].mxu0
        %v688 = vadd.f32 0.0, %v687
        %v689 = vpop.f32.mrb[0].mxu0
        %v690 = vpop.f32.mrb[0].mxu0
        %v691 = vadd.f32 0.0, %v690
        %v692 = vpop.f32.mrb[0].mxu0
        %693 = vmatprep.mubr.bf16.mxu0 0
        %694 = vmatmul.mubr.bf16.gmra.mrb[0].mxu0 %v623
        %v695 = vpop.f32.mrb[0].mxu0
        %v696 = vadd.f32 0.0, %v695
        %v697 = vpop.f32.mrb[0].mxu0
        %v698 = vpop.f32.mrb[0].mxu0
        %v699 = vadd.f32 0.0, %v698
        %v700 = vpop.f32.mrb[0].mxu0
        %701 = vmatprep.mubr.bf16.mxu0 0
        %702 = vmatmul.mubr.bf16.gmra.mrb[0].mxu0 %v626
        %v703 = vpop.f32.mrb[0].mxu0
        %v704 = vadd.f32 0.0, %v703
        %v705 = vpop.f32.mrb[0].mxu0
        %v706 = vpop.f32.mrb[0].mxu0
        %v707 = vadd.f32 0.0, %v706
        %v708 = vpop.f32.mrb[0].mxu0
        %709 = vmatprep.mubr.bf16.mxu0 0
        %710 = vmatmul.mubr.bf16.gmra.mrb[0].mxu0 %v629
        %v711 = vpop.f32.mrb[0].mxu0
        %v712 = vadd.f32 0.0, %v711
        %v713 = vpop.f32.mrb[0].mxu0
        %v714 = vpop.f32.mrb[0].mxu0
        %v715 = vadd.f32 0.0, %v714
        %v716 = vpop.f32.mrb[0].mxu0
        %717 = vmatprep.mubr.bf16.mxu0 0
        %718 = vmatmul.mubr.bf16.gmra.mrb[0].mxu0 %v632
        %v719 = vpop.f32.mrb[0].mxu0
        %v720 = vadd.f32 0.0, %v719
        %v721 = vpop.f32.mrb[0].mxu0
        %v722 = vpop.f32.mrb[0].mxu0
        %v723 = vadd.f32 0.0, %v722
        %v724 = vpop.f32.mrb[0].mxu0
        %725 = vmatprep.mubr.bf16.mxu0 0
        %726 = vmatmul.mubr.bf16.gmra.mrb[0].mxu0 %v635
        %v727 = vpop.f32.mrb[0].mxu0
        %v728 = vadd.f32 0.0, %v727
        %v729 = vpop.f32.mrb[0].mxu0
        %v730 = vpop.f32.mrb[0].mxu0
        %v731 = vadd.f32 0.0, %v730
        %v732 = vpop.f32.mrb[0].mxu0
        %733 = vmatprep.mubr.bf16.mxu0 0
        %734 = vmatmul.mubr.bf16.gmra.mrb[0].mxu0 %v638
        %v735 = vpop.f32.mrb[0].mxu0
        %v736 = vadd.f32 0.0, %v735
        %v737 = vpop.f32.mrb[0].mxu0
        %v738 = vpop.f32.mrb[0].mxu0
        %v739 = vadd.f32 0.0, %v738
        %v740 = vpop.f32.mrb[0].mxu0
        %741 = vmatprep.mubr.bf16.mxu0 0
        %742 = vmatmul.mubr.bf16.gmra.mrb[0].mxu0 %v641
        %v743 = vpop.f32.mrb[0].mxu0
        %v744 = vadd.f32 0.0, %v743
        %v745 = vpop.f32.mrb[0].mxu0
        %v746 = vpop.f32.mrb[0].mxu0
        %v747 = vadd.f32 0.0, %v746
        %v748 = vpop.f32.mrb[0].mxu0
        %749 = vmatprep.mubr.bf16.mxu0 0
        %750 = vmatmul.mubr.bf16.gmra.mrb[0].mxu0 %v644
        %v751 = vpop.f32.mrb[0].mxu0
        %v752 = vadd.f32 0.0, %v751
        %v753 = vpop.f32.mrb[0].mxu0
        %v754 = vpop.f32.mrb[0].mxu0
        %v755 = vadd.f32 0.0, %v754
        %v756 = vpop.f32.mrb[0].mxu0
        %757 = vmatprep.mubr.bf16.mxu0 0
        %758 = vmatmul.mubr.bf16.gmra.mrb[0].mxu0 %v647
        %v759 = vpop.f32.mrb[0].mxu0
        %v760 = vadd.f32 0.0, %v759
        %v761 = vpop.f32.mrb[0].mxu0
        %v762 = vpop.f32.mrb[0].mxu0
        %v763 = vadd.f32 0.0, %v762
        %v764 = vpop.f32.mrb[0].mxu0
        %765 = vdwg.mxu0
        %v786 = vunpack.c.l.b16 %v312
        %v787 = vunpack.c.l.b16 %v313
        %v788 = vunpack.c.l.b16 %v314
        %v789 = vunpack.c.l.b16 %v315
        %v790 = vunpack.c.l.b16 %v316
        %v791 = vunpack.c.l.b16 %v317
        %v792 = vunpack.c.l.b16 %v318
        %v793 = vunpack.c.l.b16 %v319
        %v794 = vunpack.c.l.b16 %v320
        %v795 = vunpack.c.l.b16 %v321
        %v796 = vunpack.c.l.b16 %v322
        %v797 = vunpack.c.l.b16 %v323
        %v798 = vunpack.c.l.b16 %v324
        %v799 = vunpack.c.l.b16 %v325
        %v800 = vunpack.c.l.b16 %v326
        %v801 = vunpack.c.l.b16 %v327
        %v802 = vunpack.c.l.b16 %v328
        %v803 = vunpack.c.l.b16 %v329
        %v804 = vunpack.c.l.b16 %v330
        %v805 = vunpack.c.l.b16 %v331
        %v806 = vpack.c.b16 %v787, %v786
        %v807 = vpack.c.b16 %v789, %v788
        %v808 = vpack.c.b16 %v791, %v790
        %v809 = vpack.c.b16 %v793, %v792
        %v810 = vpack.c.b16 %v795, %v794
        %v811 = vpack.c.b16 %v797, %v796
        %v812 = vpack.c.b16 %v799, %v798
        %v813 = vpack.c.b16 %v801, %v800
        %v814 = vpack.c.b16 %v803, %v802
        %v815 = vpack.c.b16 %v805, %v804
        %v817 = vsel %vm618, %v806, 0
        %v820 = vsel %vm618, %v807, 0
        %v823 = vsel %vm618, %v808, 0
        %v826 = vsel %vm618, %v809, 0
        %v829 = vsel %vm618, %v810, 0
        %v832 = vsel %vm618, %v811, 0
        %v835 = vsel %vm618, %v812, 0
        %v838 = vsel %vm618, %v813, 0
        %v841 = vsel %vm618, %v814, 0
        %v844 = vsel %vm618, %v815, 0
        %v847 = vsel %vm649, %v332, 0
        %849 = vmatprep.subr.bf16.mxu0 0
        %850 = vmatpush1.bf16.msra.mxu0 %v847
        %851 = vmatprep.subr.bf16.mxu0 0
        %852 = vmatpush1.bf16.msra.mxu0 0
        %853 = vmatprep.subr.bf16.mxu0 0
        %854 = vmatpush1.bf16.msra.mxu0 0
        %855 = vmatprep.subr.bf16.mxu0 0
        %856 = vmatpush1.bf16.msra.mxu0 0
        %857 = vmatprep.subr.bf16.mxu0 0
        %858 = vmatpush1.bf16.msra.mxu0 0
        %859 = vmatprep.subr.bf16.mxu0 0
        %860 = vmatpush1.bf16.msra.mxu0 0
        %861 = vmatprep.subr.bf16.mxu0 0
        %862 = vmatpush1.bf16.msra.mxu0 0
        %863 = vmatprep.subr.bf16.mxu0 0
        %864 = vmatpush1.bf16.msra.mxu0 0
        %865 = vmatprep.subr.bf16.mxu0 0
        %866 = vmatpush1.bf16.msra.mxu0 0
        %867 = vmatprep.subr.bf16.mxu0 0
        %868 = vmatpush1.bf16.msra.mxu0 0
        %869 = vmatprep.subr.bf16.mxu0 0
        %870 = vmatpush1.bf16.msra.mxu0 0
        %871 = vmatprep.subr.bf16.mxu0 0
        %872 = vmatpush1.bf16.msra.mxu0 0
        %873 = vmatprep.subr.bf16.mxu0 0
        %874 = vmatpush1.bf16.msra.mxu0 0
        %875 = vmatprep.subr.bf16.mxu0 0
        %876 = vmatpush1.bf16.msra.mxu0 0
        %877 = vmatprep.subr.bf16.mxu0 0
        %878 = vmatpush1.bf16.msra.mxu0 0
        %879 = vmatprep.subr.bf16.mxu0 0
        %880 = vmatpush1.bf16.msra.mxu0 0
        %881 = vmatprep.mubr.bf16.mxu0 0
        %882 = vmatmul.mubr.bf16.gmra.mrb[0].mxu0 %v817
        %v883 = vpop.f32.mrb[0].mxu0
        %v884 = vadd.f32 %v688, %v883
        %v885 = vpop.f32.mrb[0].mxu0
        %v886 = vpop.f32.mrb[0].mxu0
        %v887 = vadd.f32 %v691, %v886
        %v888 = vpop.f32.mrb[0].mxu0
        %889 = vmatprep.mubr.bf16.mxu0 0
        %890 = vmatmul.mubr.bf16.gmra.mrb[0].mxu0 %v820
        %v891 = vpop.f32.mrb[0].mxu0
        %v892 = vadd.f32 %v696, %v891
        %v893 = vpop.f32.mrb[0].mxu0
        %v894 = vpop.f32.mrb[0].mxu0
        %v895 = vadd.f32 %v699, %v894
        %v896 = vpop.f32.mrb[0].mxu0
        %897 = vmatprep.mubr.bf16.mxu0 0
        %898 = vmatmul.mubr.bf16.gmra.mrb[0].mxu0 %v823
        %v899 = vpop.f32.mrb[0].mxu0
        %v900 = vadd.f32 %v704, %v899
        %v901 = vpop.f32.mrb[0].mxu0
        %v902 = vpop.f32.mrb[0].mxu0
        %v903 = vadd.f32 %v707, %v902
        %v904 = vpop.f32.mrb[0].mxu0
        %905 = vmatprep.mubr.bf16.mxu0 0
        %906 = vmatmul.mubr.bf16.gmra.mrb[0].mxu0 %v826
        %v907 = vpop.f32.mrb[0].mxu0
        %v908 = vadd.f32 %v712, %v907
        %v909 = vpop.f32.mrb[0].mxu0
        %v910 = vpop.f32.mrb[0].mxu0
        %v911 = vadd.f32 %v715, %v910
        %v912 = vpop.f32.mrb[0].mxu0
        %913 = vmatprep.mubr.bf16.mxu0 0
        %914 = vmatmul.mubr.bf16.gmra.mrb[0].mxu0 %v829
        %v915 = vpop.f32.mrb[0].mxu0
        %v916 = vadd.f32 %v720, %v915
        %v917 = vpop.f32.mrb[0].mxu0
        %v918 = vpop.f32.mrb[0].mxu0
        %v919 = vadd.f32 %v723, %v918
        %v920 = vpop.f32.mrb[0].mxu0
        %921 = vmatprep.mubr.bf16.mxu0 0
        %922 = vmatmul.mubr.bf16.gmra.mrb[0].mxu0 %v832
        %v923 = vpop.f32.mrb[0].mxu0
        %v924 = vadd.f32 %v728, %v923
        %v925 = vpop.f32.mrb[0].mxu0
        %v926 = vpop.f32.mrb[0].mxu0
        %v927 = vadd.f32 %v731, %v926
        %v928 = vpop.f32.mrb[0].mxu0
        %929 = vmatprep.mubr.bf16.mxu0 0
        %930 = vmatmul.mubr.bf16.gmra.mrb[0].mxu0 %v835
        %v931 = vpop.f32.mrb[0].mxu0
        %v932 = vadd.f32 %v736, %v931
        %v933 = vpop.f32.mrb[0].mxu0
        %v934 = vpop.f32.mrb[0].mxu0
        %v935 = vadd.f32 %v739, %v934
        %v936 = vpop.f32.mrb[0].mxu0
        %937 = vmatprep.mubr.bf16.mxu0 0
        %938 = vmatmul.mubr.bf16.gmra.mrb[0].mxu0 %v838
        %v939 = vpop.f32.mrb[0].mxu0
        %v940 = vadd.f32 %v744, %v939
        %v941 = vpop.f32.mrb[0].mxu0
        %v942 = vpop.f32.mrb[0].mxu0
        %v943 = vadd.f32 %v747, %v942
        %v944 = vpop.f32.mrb[0].mxu0
        %945 = vmatprep.mubr.bf16.mxu0 0
        %946 = vmatmul.mubr.bf16.gmra.mrb[0].mxu0 %v841
        %v947 = vpop.f32.mrb[0].mxu0
        %v948 = vadd.f32 %v752, %v947
        %v949 = vpop.f32.mrb[0].mxu0
        %v950 = vpop.f32.mrb[0].mxu0
        %v951 = vadd.f32 %v755, %v950
        %v952 = vpop.f32.mrb[0].mxu0
        %953 = vmatprep.mubr.bf16.mxu0 0
        %954 = vmatmul.mubr.bf16.gmra.mrb[0].mxu0 %v844
        %v955 = vpop.f32.mrb[0].mxu0
        %v956 = vadd.f32 %v760, %v955
        %v957 = vpop.f32.mrb[0].mxu0
        %v958 = vpop.f32.mrb[0].mxu0
        %v959 = vadd.f32 %v763, %v958
        %v960 = vpop.f32.mrb[0].mxu0
        %961 = vdwg.mxu0
        %v962 = vld [vmem:[%s311] sm:$0xe]
        %v963 = vld [vmem:[%s311 + $0xc] sm:$0xe]
        %v964 = vld [vmem:[%s311 + $0x18] sm:$0xe]
        %v965 = vld [vmem:[%s311 + $0x24] sm:$0xe]
        %v966 = vld [vmem:[%s311 + $0x30] sm:$0xe]
        %v967 = vld [vmem:[%s311 + $0x3c] sm:$0xe]
        %v968 = vld [vmem:[%s311 + $0x48] sm:$0xe]
        %v969 = vld [vmem:[%s311 + $0x54] sm:$0xe]
        %v970 = vld [vmem:[%s311 + $0x60] sm:$0xe]
        %v971 = vld [vmem:[%s311 + $0x6c] sm:$0xe]
        %vm992 = vcmask 1042432
        %vm993 = vcmask 1046532
        %vm994 = vmor %vm992, %vm993
        %v995 = vrot.slane %v962, 5
        %v996 = vrot.slane %v995, 4
        %v997 = vrot.slane %v313, 5
        %v998 = vsel %vm994, %v996, %v997
        %v999 = vrot.slane %v997, 4
        %v1000 = vrot.slane %v333, 5
        %v1001 = vsel %vm994, %v999, %v1000
        %v1002 = vrot.slane %v963, 5
        %v1003 = vrot.slane %v1002, 4
        %v1004 = vrot.slane %v315, 5
        %v1005 = vsel %vm994, %v1003, %v1004
        %v1006 = vrot.slane %v1004, 4
        %v1007 = vrot.slane %v334, 5
        %v1008 = vsel %vm994, %v1006, %v1007
        %v1009 = vrot.slane %v964, 5
        %v1010 = vrot.slane %v1009, 4
        %v1011 = vrot.slane %v317, 5
        %v1012 = vsel %vm994, %v1010, %v1011
        %v1013 = vrot.slane %v1011, 4
        %v1014 = vrot.slane %v335, 5
        %v1015 = vsel %vm994, %v1013, %v1014
        %v1016 = vrot.slane %v965, 5
        %v1017 = vrot.slane %v1016, 4
        %v1018 = vrot.slane %v319, 5
        %v1019 = vsel %vm994, %v1017, %v1018
        %v1020 = vrot.slane %v1018, 4
        %v1021 = vrot.slane %v336, 5
        %v1022 = vsel %vm994, %v1020, %v1021
        %v1023 = vrot.slane %v966, 5
        %v1024 = vrot.slane %v1023, 4
        %v1025 = vrot.slane %v321, 5
        %v1026 = vsel %vm994, %v1024, %v1025
        %v1027 = vrot.slane %v1025, 4
        %v1028 = vrot.slane %v337, 5
        %v1029 = vsel %vm994, %v1027, %v1028
        %v1030 = vrot.slane %v967, 5
        %v1031 = vrot.slane %v1030, 4
        %v1032 = vrot.slane %v323, 5
        %v1033 = vsel %vm994, %v1031, %v1032
        %v1034 = vrot.slane %v1032, 4
        %v1035 = vrot.slane %v338, 5
        %v1036 = vsel %vm994, %v1034, %v1035
        %v1037 = vrot.slane %v968, 5
        %v1038 = vrot.slane %v1037, 4
        %v1039 = vrot.slane %v325, 5
        %v1040 = vsel %vm994, %v1038, %v1039
        %v1041 = vrot.slane %v1039, 4
        %v1042 = vrot.slane %v339, 5
        %v1043 = vsel %vm994, %v1041, %v1042
        %v1044 = vrot.slane %v969, 5
        %v1045 = vrot.slane %v1044, 4
        %v1046 = vrot.slane %v327, 5
        %v1047 = vsel %vm994, %v1045, %v1046
        %v1048 = vrot.slane %v1046, 4
        %v1049 = vrot.slane %v340, 5
        %v1050 = vsel %vm994, %v1048, %v1049
        %v1051 = vrot.slane %v970, 5
        %v1052 = vrot.slane %v1051, 4
        %v1053 = vrot.slane %v329, 5
        %v1054 = vsel %vm994, %v1052, %v1053
        %v1055 = vrot.slane %v1053, 4
        %v1056 = vrot.slane %v341, 5
        %v1057 = vsel %vm994, %v1055, %v1056
        %v1058 = vrot.slane %v971, 5
        %v1059 = vrot.slane %v1058, 4
        %v1060 = vrot.slane %v331, 5
        %v1061 = vsel %vm994, %v1059, %v1060
        %v1062 = vrot.slane %v1060, 4
        %v1063 = vrot.slane %v342, 5
        %v1064 = vsel %vm994, %v1062, %v1063
        %s1065 = scalar_lea.vmem %s1, 4
        %v1066 = vld [vmem:[%s1065] sm:$0x3]
        %v1067 = vunpack.c.l.b16 %v998
        %v1068 = vunpack.c.l.b16 %v1001
        %v1069 = vunpack.c.l.b16 %v1005
        %v1070 = vunpack.c.l.b16 %v1008
        %v1071 = vunpack.c.l.b16 %v1012
        %v1072 = vunpack.c.l.b16 %v1015
        %v1073 = vunpack.c.l.b16 %v1019
        %v1074 = vunpack.c.l.b16 %v1022
        %v1075 = vunpack.c.l.b16 %v1026
        %v1076 = vunpack.c.l.b16 %v1029
        %v1077 = vunpack.c.l.b16 %v1033
        %v1078 = vunpack.c.l.b16 %v1036
        %v1079 = vunpack.c.l.b16 %v1040
        %v1080 = vunpack.c.l.b16 %v1043
        %v1081 = vunpack.c.l.b16 %v1047
        %v1082 = vunpack.c.l.b16 %v1050
        %v1083 = vunpack.c.l.b16 %v1054
        %v1084 = vunpack.c.l.b16 %v1057
        %v1085 = vunpack.c.l.b16 %v1061
        %v1086 = vunpack.c.l.b16 %v1064
        %v1087 = vpack.c.b16 %v1068, %v1067
        %v1088 = vpack.c.b16 %v1070, %v1069
        %v1089 = vpack.c.b16 %v1072, %v1071
        %v1090 = vpack.c.b16 %v1074, %v1073
        %v1091 = vpack.c.b16 %v1076, %v1075
        %v1092 = vpack.c.b16 %v1078, %v1077
        %v1093 = vpack.c.b16 %v1080, %v1079
        %v1094 = vpack.c.b16 %v1082, %v1081
        %v1095 = vpack.c.b16 %v1084, %v1083
        %v1096 = vpack.c.b16 %v1086, %v1085
        %v1098 = vsel %vm618, %v1087, 0
        %v1101 = vsel %vm618, %v1088, 0
        %v1104 = vsel %vm618, %v1089, 0
        %v1107 = vsel %vm618, %v1090, 0
        %v1110 = vsel %vm618, %v1091, 0
        %v1113 = vsel %vm618, %v1092, 0
        %v1116 = vsel %vm618, %v1093, 0
        %v1119 = vsel %vm618, %v1094, 0
        %v1122 = vsel %vm618, %v1095, 0
        %v1125 = vsel %vm618, %v1096, 0
        %v1128 = vsel %vm649, %v1066, 0
        %1130 = vmatprep.subr.bf16.mxu0 0
        %1131 = vmatpush1.bf16.msra.mxu0 %v1128
        %1132 = vmatprep.subr.bf16.mxu0 0
        %1133 = vmatpush1.bf16.msra.mxu0 0
        %1134 = vmatprep.subr.bf16.mxu0 0
        %1135 = vmatpush1.bf16.msra.mxu0 0
        %1136 = vmatprep.subr.bf16.mxu0 0
        %1137 = vmatpush1.bf16.msra.mxu0 0
        %1138 = vmatprep.subr.bf16.mxu0 0
        %1139 = vmatpush1.bf16.msra.mxu0 0
        %1140 = vmatprep.subr.bf16.mxu0 0
        %1141 = vmatpush1.bf16.msra.mxu0 0
        %1142 = vmatprep.subr.bf16.mxu0 0
        %1143 = vmatpush1.bf16.msra.mxu0 0
        %1144 = vmatprep.subr.bf16.mxu0 0
        %1145 = vmatpush1.bf16.msra.mxu0 0
        %1146 = vmatprep.subr.bf16.mxu0 0
        %1147 = vmatpush1.bf16.msra.mxu0 0
        %1148 = vmatprep.subr.bf16.mxu0 0
        %1149 = vmatpush1.bf16.msra.mxu0 0
        %1150 = vmatprep.subr.bf16.mxu0 0
        %1151 = vmatpush1.bf16.msra.mxu0 0
        %1152 = vmatprep.subr.bf16.mxu0 0
        %1153 = vmatpush1.bf16.msra.mxu0 0
        %1154 = vmatprep.subr.bf16.mxu0 0
        %1155 = vmatpush1.bf16.msra.mxu0 0
        %1156 = vmatprep.subr.bf16.mxu0 0
        %1157 = vmatpush1.bf16.msra.mxu0 0
        %1158 = vmatprep.subr.bf16.mxu0 0
        %1159 = vmatpush1.bf16.msra.mxu0 0
        %1160 = vmatprep.subr.bf16.mxu0 0
        %1161 = vmatpush1.bf16.msra.mxu0 0
        %1162 = vmatprep.mubr.bf16.mxu0 0
        %1163 = vmatmul.mubr.bf16.gmra.mrb[0].mxu0 %v1098
        %v1164 = vpop.f32.mrb[0].mxu0
        %v1165 = vadd.f32 0.0, %v1164
        %v1166 = vpop.f32.mrb[0].mxu0
        %v1167 = vpop.f32.mrb[0].mxu0
        %v1168 = vadd.f32 0.0, %v1167
        %v1169 = vpop.f32.mrb[0].mxu0
        %1170 = vmatprep.mubr.bf16.mxu0 0
        %1171 = vmatmul.mubr.bf16.gmra.mrb[0].mxu0 %v1101
        %v1172 = vpop.f32.mrb[0].mxu0
        %v1173 = vadd.f32 0.0, %v1172
        %v1174 = vpop.f32.mrb[0].mxu0
        %v1175 = vpop.f32.mrb[0].mxu0
        %v1176 = vadd.f32 0.0, %v1175
        %v1177 = vpop.f32.mrb[0].mxu0
        %1178 = vmatprep.mubr.bf16.mxu0 0
        %1179 = vmatmul.mubr.bf16.gmra.mrb[0].mxu0 %v1104
        %v1180 = vpop.f32.mrb[0].mxu0
        %v1181 = vadd.f32 0.0, %v1180
        %v1182 = vpop.f32.mrb[0].mxu0
        %v1183 = vpop.f32.mrb[0].mxu0
        %v1184 = vadd.f32 0.0, %v1183
        %v1185 = vpop.f32.mrb[0].mxu0
        %1186 = vmatprep.mubr.bf16.mxu0 0
        %1187 = vmatmul.mubr.bf16.gmra.mrb[0].mxu0 %v1107
        %v1188 = vpop.f32.mrb[0].mxu0
        %v1189 = vadd.f32 0.0, %v1188
        %v1190 = vpop.f32.mrb[0].mxu0
        %v1191 = vpop.f32.mrb[0].mxu0
        %v1192 = vadd.f32 0.0, %v1191
        %v1193 = vpop.f32.mrb[0].mxu0
        %1194 = vmatprep.mubr.bf16.mxu0 0
        %1195 = vmatmul.mubr.bf16.gmra.mrb[0].mxu0 %v1110
        %v1196 = vpop.f32.mrb[0].mxu0
        %v1197 = vadd.f32 0.0, %v1196
        %v1198 = vpop.f32.mrb[0].mxu0
        %v1199 = vpop.f32.mrb[0].mxu0
        %v1200 = vadd.f32 0.0, %v1199
        %v1201 = vpop.f32.mrb[0].mxu0
        %1202 = vmatprep.mubr.bf16.mxu0 0
        %1203 = vmatmul.mubr.bf16.gmra.mrb[0].mxu0 %v1113
        %v1204 = vpop.f32.mrb[0].mxu0
        %v1205 = vadd.f32 0.0, %v1204
        %v1206 = vpop.f32.mrb[0].mxu0
        %v1207 = vpop.f32.mrb[0].mxu0
        %v1208 = vadd.f32 0.0, %v1207
        %v1209 = vpop.f32.mrb[0].mxu0
        %1210 = vmatprep.mubr.bf16.mxu0 0
        %1211 = vmatmul.mubr.bf16.gmra.mrb[0].mxu0 %v1116
        %v1212 = vpop.f32.mrb[0].mxu0
        %v1213 = vadd.f32 0.0, %v1212
        %v1214 = vpop.f32.mrb[0].mxu0
        %v1215 = vpop.f32.mrb[0].mxu0
        %v1216 = vadd.f32 0.0, %v1215
        %v1217 = vpop.f32.mrb[0].mxu0
        %1218 = vmatprep.mubr.bf16.mxu0 0
        %1219 = vmatmul.mubr.bf16.gmra.mrb[0].mxu0 %v1119
        %v1220 = vpop.f32.mrb[0].mxu0
        %v1221 = vadd.f32 0.0, %v1220
        %v1222 = vpop.f32.mrb[0].mxu0
        %v1223 = vpop.f32.mrb[0].mxu0
        %v1224 = vadd.f32 0.0, %v1223
        %v1225 = vpop.f32.mrb[0].mxu0
        %1226 = vmatprep.mubr.bf16.mxu0 0
        %1227 = vmatmul.mubr.bf16.gmra.mrb[0].mxu0 %v1122
        %v1228 = vpop.f32.mrb[0].mxu0
        %v1229 = vadd.f32 0.0, %v1228
        %v1230 = vpop.f32.mrb[0].mxu0
        %v1231 = vpop.f32.mrb[0].mxu0
        %v1232 = vadd.f32 0.0, %v1231
        %v1233 = vpop.f32.mrb[0].mxu0
        %1234 = vmatprep.mubr.bf16.mxu0 0
        %1235 = vmatmul.mubr.bf16.gmra.mrb[0].mxu0 %v1125
        %v1236 = vpop.f32.mrb[0].mxu0
        %v1237 = vadd.f32 0.0, %v1236
        %v1238 = vpop.f32.mrb[0].mxu0
        %v1239 = vpop.f32.mrb[0].mxu0
        %v1240 = vadd.f32 0.0, %v1239
        %v1241 = vpop.f32.mrb[0].mxu0
        %1242 = vdwg.mxu0
        %v1243 = vadd.f32 %v884, %v1165
        %v1244 = vadd.f32 %v887, %v1168
        %v1245 = vadd.f32 %v892, %v1173
        %v1246 = vadd.f32 %v895, %v1176
        %v1247 = vadd.f32 %v900, %v1181
        %v1248 = vadd.f32 %v903, %v1184
        %v1249 = vadd.f32 %v908, %v1189
        %v1250 = vadd.f32 %v911, %v1192
        %v1251 = vadd.f32 %v916, %v1197
        %v1252 = vadd.f32 %v919, %v1200
        %v1253 = vadd.f32 %v924, %v1205
        %v1254 = vadd.f32 %v927, %v1208
        %v1255 = vadd.f32 %v932, %v1213
        %v1256 = vadd.f32 %v935, %v1216
        %v1257 = vadd.f32 %v940, %v1221
        %v1258 = vadd.f32 %v943, %v1224
        %v1259 = vadd.f32 %v948, %v1229
        %v1260 = vadd.f32 %v951, %v1232
        %v1261 = vadd.f32 %v956, %v1237
        %v1262 = vadd.f32 %v959, %v1240
        %s1263 = sadd.s32 %s308, 1
        %s1264 = smul.u32 %s1263, 3
        %s1265 = smul.addr %s1264, 4
        %s1266 = scalar_lea.vmem %s305, %s1265
        %v1267 = vld [vmem:[%s1266] sm:$0xf]
        %v1268 = vld [vmem:[%s1266 + $0x4] sm:$0xf]
        %v1269 = vld [vmem:[%s1266 + $0xc] sm:$0xf]
        %v1270 = vld [vmem:[%s1266 + $0x10] sm:$0xf]
        %v1271 = vld [vmem:[%s1266 + $0x18] sm:$0xf]
        %v1272 = vld [vmem:[%s1266 + $0x1c] sm:$0xf]
        %v1273 = vld [vmem:[%s1266 + $0x24] sm:$0xf]
        %v1274 = vld [vmem:[%s1266 + $0x28] sm:$0xf]
        %v1275 = vld [vmem:[%s1266 + $0x30] sm:$0xf]
        %v1276 = vld [vmem:[%s1266 + $0x34] sm:$0xf]
        %v1277 = vld [vmem:[%s1266 + $0x3c] sm:$0xf]
        %v1278 = vld [vmem:[%s1266 + $0x40] sm:$0xf]
        %v1279 = vld [vmem:[%s1266 + $0x48] sm:$0xf]
        %v1280 = vld [vmem:[%s1266 + $0x4c] sm:$0xf]
        %v1281 = vld [vmem:[%s1266 + $0x54] sm:$0xf]
        %v1282 = vld [vmem:[%s1266 + $0x58] sm:$0xf]
        %v1283 = vld [vmem:[%s1266 + $0x60] sm:$0xf]
        %v1284 = vld [vmem:[%s1266 + $0x64] sm:$0xf]
        %v1285 = vld [vmem:[%s1266 + $0x6c] sm:$0xf]
        %v1286 = vld [vmem:[%s1266 + $0x70] sm:$0xf]
        %s1287 = scalar_lea.vmem %s1, 6
        %v1288 = vld [vmem:[%s1287] sm:$0x3]
        %v1309 = vunpack.c.l.b16 %v1267
        %v1310 = vunpack.c.l.b16 %v1268
        %v1311 = vunpack.c.l.b16 %v1269
        %v1312 = vunpack.c.l.b16 %v1270
        %v1313 = vunpack.c.l.b16 %v1271
        %v1314 = vunpack.c.l.b16 %v1272
        %v1315 = vunpack.c.l.b16 %v1273
        %v1316 = vunpack.c.l.b16 %v1274
        %v1317 = vunpack.c.l.b16 %v1275
        %v1318 = vunpack.c.l.b16 %v1276
        %v1319 = vunpack.c.l.b16 %v1277
        %v1320 = vunpack.c.l.b16 %v1278
        %v1321 = vunpack.c.l.b16 %v1279
        %v1322 = vunpack.c.l.b16 %v1280
        %v1323 = vunpack.c.l.b16 %v1281
        %v1324 = vunpack.c.l.b16 %v1282
        %v1325 = vunpack.c.l.b16 %v1283
        %v1326 = vunpack.c.l.b16 %v1284
        %v1327 = vunpack.c.l.b16 %v1285
        %v1328 = vunpack.c.l.b16 %v1286
        %v1329 = vpack.c.b16 %v1310, %v1309
        %v1330 = vpack.c.b16 %v1312, %v1311
        %v1331 = vpack.c.b16 %v1314, %v1313
        %v1332 = vpack.c.b16 %v1316, %v1315
        %v1333 = vpack.c.b16 %v1318, %v1317
        %v1334 = vpack.c.b16 %v1320, %v1319
        %v1335 = vpack.c.b16 %v1322, %v1321
        %v1336 = vpack.c.b16 %v1324, %v1323
        %v1337 = vpack.c.b16 %v1326, %v1325
        %v1338 = vpack.c.b16 %v1328, %v1327
        %v1340 = vsel %vm618, %v1329, 0
        %v1343 = vsel %vm618, %v1330, 0
        %v1346 = vsel %vm618, %v1331, 0
        %v1349 = vsel %vm618, %v1332, 0
        %v1352 = vsel %vm618, %v1333, 0
        %v1355 = vsel %vm618, %v1334, 0
        %v1358 = vsel %vm618, %v1335, 0
        %v1361 = vsel %vm618, %v1336, 0
        %v1364 = vsel %vm618, %v1337, 0
        %v1367 = vsel %vm618, %v1338, 0
        %v1370 = vsel %vm649, %v1288, 0
        %1372 = vmatprep.subr.bf16.mxu0 0
        %1373 = vmatpush1.bf16.msra.mxu0 %v1370
        %1374 = vmatprep.subr.bf16.mxu0 0
        %1375 = vmatpush1.bf16.msra.mxu0 0
        %1376 = vmatprep.subr.bf16.mxu0 0
        %1377 = vmatpush1.bf16.msra.mxu0 0
        %1378 = vmatprep.subr.bf16.mxu0 0
        %1379 = vmatpush1.bf16.msra.mxu0 0
        %1380 = vmatprep.subr.bf16.mxu0 0
        %1381 = vmatpush1.bf16.msra.mxu0 0
        %1382 = vmatprep.subr.bf16.mxu0 0
        %1383 = vmatpush1.bf16.msra.mxu0 0
        %1384 = vmatprep.subr.bf16.mxu0 0
        %1385 = vmatpush1.bf16.msra.mxu0 0
        %1386 = vmatprep.subr.bf16.mxu0 0
        %1387 = vmatpush1.bf16.msra.mxu0 0
        %1388 = vmatprep.subr.bf16.mxu0 0
        %1389 = vmatpush1.bf16.msra.mxu0 0
        %1390 = vmatprep.subr.bf16.mxu0 0
        %1391 = vmatpush1.bf16.msra.mxu0 0
        %1392 = vmatprep.subr.bf16.mxu0 0
        %1393 = vmatpush1.bf16.msra.mxu0 0
        %1394 = vmatprep.subr.bf16.mxu0 0
        %1395 = vmatpush1.bf16.msra.mxu0 0
        %1396 = vmatprep.subr.bf16.mxu0 0
        %1397 = vmatpush1.bf16.msra.mxu0 0
        %1398 = vmatprep.subr.bf16.mxu0 0
        %1399 = vmatpush1.bf16.msra.mxu0 0
        %1400 = vmatprep.subr.bf16.mxu0 0
        %1401 = vmatpush1.bf16.msra.mxu0 0
        %1402 = vmatprep.subr.bf16.mxu0 0
        %1403 = vmatpush1.bf16.msra.mxu0 0
        %1404 = vmatprep.mubr.bf16.mxu0 0
        %1405 = vmatmul.mubr.bf16.gmra.mrb[0].mxu0 %v1340
        %v1406 = vpop.f32.mrb[0].mxu0
        %v1407 = vadd.f32 0.0, %v1406
        %v1408 = vpop.f32.mrb[0].mxu0
        %v1409 = vpop.f32.mrb[0].mxu0
        %v1410 = vadd.f32 0.0, %v1409
        %v1411 = vpop.f32.mrb[0].mxu0
        %1412 = vmatprep.mubr.bf16.mxu0 0
        %1413 = vmatmul.mubr.bf16.gmra.mrb[0].mxu0 %v1343
        %v1414 = vpop.f32.mrb[0].mxu0
        %v1415 = vadd.f32 0.0, %v1414
        %v1416 = vpop.f32.mrb[0].mxu0
        %v1417 = vpop.f32.mrb[0].mxu0
        %v1418 = vadd.f32 0.0, %v1417
        %v1419 = vpop.f32.mrb[0].mxu0
        %1420 = vmatprep.mubr.bf16.mxu0 0
        %1421 = vmatmul.mubr.bf16.gmra.mrb[0].mxu0 %v1346
        %v1422 = vpop.f32.mrb[0].mxu0
        %v1423 = vadd.f32 0.0, %v1422
        %v1424 = vpop.f32.mrb[0].mxu0
        %v1425 = vpop.f32.mrb[0].mxu0
        %v1426 = vadd.f32 0.0, %v1425
        %v1427 = vpop.f32.mrb[0].mxu0
        %1428 = vmatprep.mubr.bf16.mxu0 0
        %1429 = vmatmul.mubr.bf16.gmra.mrb[0].mxu0 %v1349
        %v1430 = vpop.f32.mrb[0].mxu0
        %v1431 = vadd.f32 0.0, %v1430
        %v1432 = vpop.f32.mrb[0].mxu0
        %v1433 = vpop.f32.mrb[0].mxu0
        %v1434 = vadd.f32 0.0, %v1433
        %v1435 = vpop.f32.mrb[0].mxu0
        %1436 = vmatprep.mubr.bf16.mxu0 0
        %1437 = vmatmul.mubr.bf16.gmra.mrb[0].mxu0 %v1352
        %v1438 = vpop.f32.mrb[0].mxu0
        %v1439 = vadd.f32 0.0, %v1438
        %v1440 = vpop.f32.mrb[0].mxu0
        %v1441 = vpop.f32.mrb[0].mxu0
        %v1442 = vadd.f32 0.0, %v1441
        %v1443 = vpop.f32.mrb[0].mxu0
        %1444 = vmatprep.mubr.bf16.mxu0 0
        %1445 = vmatmul.mubr.bf16.gmra.mrb[0].mxu0 %v1355
        %v1446 = vpop.f32.mrb[0].mxu0
        %v1447 = vadd.f32 0.0, %v1446
        %v1448 = vpop.f32.mrb[0].mxu0
        %v1449 = vpop.f32.mrb[0].mxu0
        %v1450 = vadd.f32 0.0, %v1449
        %v1451 = vpop.f32.mrb[0].mxu0
        %1452 = vmatprep.mubr.bf16.mxu0 0
        %1453 = vmatmul.mubr.bf16.gmra.mrb[0].mxu0 %v1358
        %v1454 = vpop.f32.mrb[0].mxu0
        %v1455 = vadd.f32 0.0, %v1454
        %v1456 = vpop.f32.mrb[0].mxu0
        %v1457 = vpop.f32.mrb[0].mxu0
        %v1458 = vadd.f32 0.0, %v1457
        %v1459 = vpop.f32.mrb[0].mxu0
        %1460 = vmatprep.mubr.bf16.mxu0 0
        %1461 = vmatmul.mubr.bf16.gmra.mrb[0].mxu0 %v1361
        %v1462 = vpop.f32.mrb[0].mxu0
        %v1463 = vadd.f32 0.0, %v1462
        %v1464 = vpop.f32.mrb[0].mxu0
        %v1465 = vpop.f32.mrb[0].mxu0
        %v1466 = vadd.f32 0.0, %v1465
        %v1467 = vpop.f32.mrb[0].mxu0
        %1468 = vmatprep.mubr.bf16.mxu0 0
        %1469 = vmatmul.mubr.bf16.gmra.mrb[0].mxu0 %v1364
        %v1470 = vpop.f32.mrb[0].mxu0
        %v1471 = vadd.f32 0.0, %v1470
        %v1472 = vpop.f32.mrb[0].mxu0
        %v1473 = vpop.f32.mrb[0].mxu0
        %v1474 = vadd.f32 0.0, %v1473
        %v1475 = vpop.f32.mrb[0].mxu0
        %1476 = vmatprep.mubr.bf16.mxu0 0
        %1477 = vmatmul.mubr.bf16.gmra.mrb[0].mxu0 %v1367
        %v1478 = vpop.f32.mrb[0].mxu0
        %v1479 = vadd.f32 0.0, %v1478
        %v1480 = vpop.f32.mrb[0].mxu0
        %v1481 = vpop.f32.mrb[0].mxu0
        %v1482 = vadd.f32 0.0, %v1481
        %v1483 = vpop.f32.mrb[0].mxu0
        %1484 = vdwg.mxu0
        %v1485 = vadd.f32 %v1243, %v1407
        %v1486 = vadd.f32 %v1244, %v1410
        %v1487 = vadd.f32 %v1245, %v1415
        %v1488 = vadd.f32 %v1246, %v1418
        %v1489 = vadd.f32 %v1247, %v1423
        %v1490 = vadd.f32 %v1248, %v1426
        %v1491 = vadd.f32 %v1249, %v1431
        %v1492 = vadd.f32 %v1250, %v1434
        %v1493 = vadd.f32 %v1251, %v1439
        %v1494 = vadd.f32 %v1252, %v1442
        %v1495 = vadd.f32 %v1253, %v1447
        %v1496 = vadd.f32 %v1254, %v1450
        %v1497 = vadd.f32 %v1255, %v1455
        %v1498 = vadd.f32 %v1256, %v1458
        %v1499 = vadd.f32 %v1257, %v1463
        %v1500 = vadd.f32 %v1258, %v1466
        %v1501 = vadd.f32 %v1259, %v1471
        %v1502 = vadd.f32 %v1260, %v1474
        %v1503 = vadd.f32 %v1261, %v1479
        %v1504 = vadd.f32 %v1262, %v1482
        %v1505 = vld [vmem:[%s1266] sm:$0xf]
        %v1506 = vld [vmem:[%s1266 + $0x4] sm:$0xf]
        %v1507 = vld [vmem:[%s1266 + $0x8] sm:$0x1]
        %v1508 = vld [vmem:[%s1266 + $0xc] sm:$0xf]
        %v1509 = vld [vmem:[%s1266 + $0x10] sm:$0xf]
        %v1510 = vld [vmem:[%s1266 + $0x14] sm:$0x1]
        %v1511 = vld [vmem:[%s1266 + $0x18] sm:$0xf]
        %v1512 = vld [vmem:[%s1266 + $0x1c] sm:$0xf]
        %v1513 = vld [vmem:[%s1266 + $0x20] sm:$0x1]
        %v1514 = vld [vmem:[%s1266 + $0x24] sm:$0xf]
        %v1515 = vld [vmem:[%s1266 + $0x28] sm:$0xf]
        %v1516 = vld [vmem:[%s1266 + $0x2c] sm:$0x1]
        %v1517 = vld [vmem:[%s1266 + $0x30] sm:$0xf]
        %v1518 = vld [vmem:[%s1266 + $0x34] sm:$0xf]
        %v1519 = vld [vmem:[%s1266 + $0x38] sm:$0x1]
        %v1520 = vld [vmem:[%s1266 + $0x3c] sm:$0xf]
        %v1521 = vld [vmem:[%s1266 + $0x40] sm:$0xf]
        %v1522 = vld [vmem:[%s1266 + $0x44] sm:$0x1]
        %v1523 = vld [vmem:[%s1266 + $0x48] sm:$0xf]
        %v1524 = vld [vmem:[%s1266 + $0x4c] sm:$0xf]
        %v1525 = vld [vmem:[%s1266 + $0x50] sm:$0x1]
        %v1526 = vld [vmem:[%s1266 + $0x54] sm:$0xf]
        %v1527 = vld [vmem:[%s1266 + $0x58] sm:$0xf]
        %v1528 = vld [vmem:[%s1266 + $0x5c] sm:$0x1]
        %v1529 = vld [vmem:[%s1266 + $0x60] sm:$0xf]
        %v1530 = vld [vmem:[%s1266 + $0x64] sm:$0xf]
        %v1531 = vld [vmem:[%s1266 + $0x68] sm:$0x1]
        %v1532 = vld [vmem:[%s1266 + $0x6c] sm:$0xf]
        %v1533 = vld [vmem:[%s1266 + $0x70] sm:$0xf]
        %v1534 = vld [vmem:[%s1266 + $0x74] sm:$0x1]
        %v1536 = vshrl.u32 %v1505, 16
        %v1538 = vrot.slane %v1536, 4
        %v1539 = vshll.u32 %v1505, 16
        %v1541 = vrot.slane %v1539, 5
        %v1542 = vor.u32 %v1538, %v1541
        %v1543 = vrot.slane %v1542, 4
        %v1545 = vshll.u32 %v1506, 16
        %v1547 = vrot.slane %v1545, 5
        %v1548 = vsel %vm345, %v1543, %v1547
        %v1549 = vshrl.u32 %v1506, 16
        %v1551 = vrot.slane %v1549, 4
        %v1552 = vor.u32 %v1551, %v1547
        %v1553 = vrot.slane %v1552, 4
        %v1555 = vshll.u32 %v1507, 16
        %v1557 = vrot.slane %v1555, 5
        %v1558 = vsel %vm345, %v1553, %v1557
        %v1560 = vshrl.u32 %v1508, 16
        %v1562 = vrot.slane %v1560, 4
        %v1563 = vshll.u32 %v1508, 16
        %v1565 = vrot.slane %v1563, 5
        %v1566 = vor.u32 %v1562, %v1565
        %v1567 = vrot.slane %v1566, 4
        %v1569 = vshll.u32 %v1509, 16
        %v1571 = vrot.slane %v1569, 5
        %v1572 = vsel %vm345, %v1567, %v1571
        %v1573 = vshrl.u32 %v1509, 16
        %v1575 = vrot.slane %v1573, 4
        %v1576 = vor.u32 %v1575, %v1571
        %v1577 = vrot.slane %v1576, 4
        %v1579 = vshll.u32 %v1510, 16
        %v1581 = vrot.slane %v1579, 5
        %v1582 = vsel %vm345, %v1577, %v1581
        %v1584 = vshrl.u32 %v1511, 16
        %v1586 = vrot.slane %v1584, 4
        %v1587 = vshll.u32 %v1511, 16
        %v1589 = vrot.slane %v1587, 5
        %v1590 = vor.u32 %v1586, %v1589
        %v1591 = vrot.slane %v1590, 4
        %v1593 = vshll.u32 %v1512, 16
        %v1595 = vrot.slane %v1593, 5
        %v1596 = vsel %vm345, %v1591, %v1595
        %v1597 = vshrl.u32 %v1512, 16
        %v1599 = vrot.slane %v1597, 4
        %v1600 = vor.u32 %v1599, %v1595
        %v1601 = vrot.slane %v1600, 4
        %v1603 = vshll.u32 %v1513, 16
        %v1605 = vrot.slane %v1603, 5
        %v1606 = vsel %vm345, %v1601, %v1605
        %v1608 = vshrl.u32 %v1514, 16
        %v1610 = vrot.slane %v1608, 4
        %v1611 = vshll.u32 %v1514, 16
        %v1613 = vrot.slane %v1611, 5
        %v1614 = vor.u32 %v1610, %v1613
        %v1615 = vrot.slane %v1614, 4
        %v1617 = vshll.u32 %v1515, 16
        %v1619 = vrot.slane %v1617, 5
        %v1620 = vsel %vm345, %v1615, %v1619
        %v1621 = vshrl.u32 %v1515, 16
        %v1623 = vrot.slane %v1621, 4
        %v1624 = vor.u32 %v1623, %v1619
        %v1625 = vrot.slane %v1624, 4
        %v1627 = vshll.u32 %v1516, 16
        %v1629 = vrot.slane %v1627, 5
        %v1630 = vsel %vm345, %v1625, %v1629
        %v1632 = vshrl.u32 %v1517, 16
        %v1634 = vrot.slane %v1632, 4
        %v1635 = vshll.u32 %v1517, 16
        %v1637 = vrot.slane %v1635, 5
        %v1638 = vor.u32 %v1634, %v1637
        %v1639 = vrot.slane %v1638, 4
        %v1641 = vshll.u32 %v1518, 16
        %v1643 = vrot.slane %v1641, 5
        %v1644 = vsel %vm345, %v1639, %v1643
        %v1645 = vshrl.u32 %v1518, 16
        %v1647 = vrot.slane %v1645, 4
        %v1648 = vor.u32 %v1647, %v1643
        %v1649 = vrot.slane %v1648, 4
        %v1651 = vshll.u32 %v1519, 16
        %v1653 = vrot.slane %v1651, 5
        %v1654 = vsel %vm345, %v1649, %v1653
        %v1656 = vshrl.u32 %v1520, 16
        %v1658 = vrot.slane %v1656, 4
        %v1659 = vshll.u32 %v1520, 16
        %v1661 = vrot.slane %v1659, 5
        %v1662 = vor.u32 %v1658, %v1661
        %v1663 = vrot.slane %v1662, 4
        %v1665 = vshll.u32 %v1521, 16
        %v1667 = vrot.slane %v1665, 5
        %v1668 = vsel %vm345, %v1663, %v1667
        %v1669 = vshrl.u32 %v1521, 16
        %v1671 = vrot.slane %v1669, 4
        %v1672 = vor.u32 %v1671, %v1667
        %v1673 = vrot.slane %v1672, 4
        %v1675 = vshll.u32 %v1522, 16
        %v1677 = vrot.slane %v1675, 5
        %v1678 = vsel %vm345, %v1673, %v1677
        %v1680 = vshrl.u32 %v1523, 16
        %v1682 = vrot.slane %v1680, 4
        %v1683 = vshll.u32 %v1523, 16
        %v1685 = vrot.slane %v1683, 5
        %v1686 = vor.u32 %v1682, %v1685
        %v1687 = vrot.slane %v1686, 4
        %v1689 = vshll.u32 %v1524, 16
        %v1691 = vrot.slane %v1689, 5
        %v1692 = vsel %vm345, %v1687, %v1691
        %v1693 = vshrl.u32 %v1524, 16
        %v1695 = vrot.slane %v1693, 4
        %v1696 = vor.u32 %v1695, %v1691
        %v1697 = vrot.slane %v1696, 4
        %v1699 = vshll.u32 %v1525, 16
        %v1701 = vrot.slane %v1699, 5
        %v1702 = vsel %vm345, %v1697, %v1701
        %v1704 = vshrl.u32 %v1526, 16
        %v1706 = vrot.slane %v1704, 4
        %v1707 = vshll.u32 %v1526, 16
        %v1709 = vrot.slane %v1707, 5
        %v1710 = vor.u32 %v1706, %v1709
        %v1711 = vrot.slane %v1710, 4
        %v1713 = vshll.u32 %v1527, 16
        %v1715 = vrot.slane %v1713, 5
        %v1716 = vsel %vm345, %v1711, %v1715
        %v1717 = vshrl.u32 %v1527, 16
        %v1719 = vrot.slane %v1717, 4
        %v1720 = vor.u32 %v1719, %v1715
        %v1721 = vrot.slane %v1720, 4
        %v1723 = vshll.u32 %v1528, 16
        %v1725 = vrot.slane %v1723, 5
        %v1726 = vsel %vm345, %v1721, %v1725
        %v1728 = vshrl.u32 %v1529, 16
        %v1730 = vrot.slane %v1728, 4
        %v1731 = vshll.u32 %v1529, 16
        %v1733 = vrot.slane %v1731, 5
        %v1734 = vor.u32 %v1730, %v1733
        %v1735 = vrot.slane %v1734, 4
        %v1737 = vshll.u32 %v1530, 16
        %v1739 = vrot.slane %v1737, 5
        %v1740 = vsel %vm345, %v1735, %v1739
        %v1741 = vshrl.u32 %v1530, 16
        %v1743 = vrot.slane %v1741, 4
        %v1744 = vor.u32 %v1743, %v1739
        %v1745 = vrot.slane %v1744, 4
        %v1747 = vshll.u32 %v1531, 16
        %v1749 = vrot.slane %v1747, 5
        %v1750 = vsel %vm345, %v1745, %v1749
        %v1752 = vshrl.u32 %v1532, 16
        %v1754 = vrot.slane %v1752, 4
        %v1755 = vshll.u32 %v1532, 16
        %v1757 = vrot.slane %v1755, 5
        %v1758 = vor.u32 %v1754, %v1757
        %v1759 = vrot.slane %v1758, 4
        %v1761 = vshll.u32 %v1533, 16
        %v1763 = vrot.slane %v1761, 5
        %v1764 = vsel %vm345, %v1759, %v1763
        %v1765 = vshrl.u32 %v1533, 16
        %v1767 = vrot.slane %v1765, 4
        %v1768 = vor.u32 %v1767, %v1763
        %v1769 = vrot.slane %v1768, 4
        %v1771 = vshll.u32 %v1534, 16
        %v1773 = vrot.slane %v1771, 5
        %v1774 = vsel %vm345, %v1769, %v1773
        %s1775 = scalar_lea.vmem %s1, 8
        %v1776 = vld [vmem:[%s1775] sm:$0x3]
        %v1777 = vunpack.c.l.b16 %v1548
        %v1778 = vunpack.c.l.b16 %v1558
        %v1779 = vunpack.c.l.b16 %v1572
        %v1780 = vunpack.c.l.b16 %v1582
        %v1781 = vunpack.c.l.b16 %v1596
        %v1782 = vunpack.c.l.b16 %v1606
        %v1783 = vunpack.c.l.b16 %v1620
        %v1784 = vunpack.c.l.b16 %v1630
        %v1785 = vunpack.c.l.b16 %v1644
        %v1786 = vunpack.c.l.b16 %v1654
        %v1787 = vunpack.c.l.b16 %v1668
        %v1788 = vunpack.c.l.b16 %v1678
        %v1789 = vunpack.c.l.b16 %v1692
        %v1790 = vunpack.c.l.b16 %v1702
        %v1791 = vunpack.c.l.b16 %v1716
        %v1792 = vunpack.c.l.b16 %v1726
        %v1793 = vunpack.c.l.b16 %v1740
        %v1794 = vunpack.c.l.b16 %v1750
        %v1795 = vunpack.c.l.b16 %v1764
        %v1796 = vunpack.c.l.b16 %v1774
        %v1797 = vpack.c.b16 %v1778, %v1777
        %v1798 = vpack.c.b16 %v1780, %v1779
        %v1799 = vpack.c.b16 %v1782, %v1781
        %v1800 = vpack.c.b16 %v1784, %v1783
        %v1801 = vpack.c.b16 %v1786, %v1785
        %v1802 = vpack.c.b16 %v1788, %v1787
        %v1803 = vpack.c.b16 %v1790, %v1789
        %v1804 = vpack.c.b16 %v1792, %v1791
        %v1805 = vpack.c.b16 %v1794, %v1793
        %v1806 = vpack.c.b16 %v1796, %v1795
        %v1808 = vsel %vm618, %v1797, 0
        %v1811 = vsel %vm618, %v1798, 0
        %v1814 = vsel %vm618, %v1799, 0
        %v1817 = vsel %vm618, %v1800, 0
        %v1820 = vsel %vm618, %v1801, 0
        %v1823 = vsel %vm618, %v1802, 0
        %v1826 = vsel %vm618, %v1803, 0
        %v1829 = vsel %vm618, %v1804, 0
        %v1832 = vsel %vm618, %v1805, 0
        %v1835 = vsel %vm618, %v1806, 0
        %v1838 = vsel %vm649, %v1776, 0
        %1840 = vmatprep.subr.bf16.mxu0 0
        %1841 = vmatpush1.bf16.msra.mxu0 %v1838
        %1842 = vmatprep.subr.bf16.mxu0 0
        %1843 = vmatpush1.bf16.msra.mxu0 0
        %1844 = vmatprep.subr.bf16.mxu0 0
        %1845 = vmatpush1.bf16.msra.mxu0 0
        %1846 = vmatprep.subr.bf16.mxu0 0
        %1847 = vmatpush1.bf16.msra.mxu0 0
        %1848 = vmatprep.subr.bf16.mxu0 0
        %1849 = vmatpush1.bf16.msra.mxu0 0
        %1850 = vmatprep.subr.bf16.mxu0 0
        %1851 = vmatpush1.bf16.msra.mxu0 0
        %1852 = vmatprep.subr.bf16.mxu0 0
        %1853 = vmatpush1.bf16.msra.mxu0 0
        %1854 = vmatprep.subr.bf16.mxu0 0
        %1855 = vmatpush1.bf16.msra.mxu0 0
        %1856 = vmatprep.subr.bf16.mxu0 0
        %1857 = vmatpush1.bf16.msra.mxu0 0
        %1858 = vmatprep.subr.bf16.mxu0 0
        %1859 = vmatpush1.bf16.msra.mxu0 0
        %1860 = vmatprep.subr.bf16.mxu0 0
        %1861 = vmatpush1.bf16.msra.mxu0 0
        %1862 = vmatprep.subr.bf16.mxu0 0
        %1863 = vmatpush1.bf16.msra.mxu0 0
        %1864 = vmatprep.subr.bf16.mxu0 0
        %1865 = vmatpush1.bf16.msra.mxu0 0
        %1866 = vmatprep.subr.bf16.mxu0 0
        %1867 = vmatpush1.bf16.msra.mxu0 0
        %1868 = vmatprep.subr.bf16.mxu0 0
        %1869 = vmatpush1.bf16.msra.mxu0 0
        %1870 = vmatprep.subr.bf16.mxu0 0
        %1871 = vmatpush1.bf16.msra.mxu0 0
        %1872 = vmatprep.mubr.bf16.mxu0 0
        %1873 = vmatmul.mubr.bf16.gmra.mrb[0].mxu0 %v1808
        %v1874 = vpop.f32.mrb[0].mxu0
        %v1875 = vadd.f32 0.0, %v1874
        %v1876 = vpop.f32.mrb[0].mxu0
        %v1877 = vpop.f32.mrb[0].mxu0
        %v1878 = vadd.f32 0.0, %v1877
        %v1879 = vpop.f32.mrb[0].mxu0
        %1880 = vmatprep.mubr.bf16.mxu0 0
        %1881 = vmatmul.mubr.bf16.gmra.mrb[0].mxu0 %v1811
        %v1882 = vpop.f32.mrb[0].mxu0
        %v1883 = vadd.f32 0.0, %v1882
        %v1884 = vpop.f32.mrb[0].mxu0
        %v1885 = vpop.f32.mrb[0].mxu0
        %v1886 = vadd.f32 0.0, %v1885
        %v1887 = vpop.f32.mrb[0].mxu0
        %1888 = vmatprep.mubr.bf16.mxu0 0
        %1889 = vmatmul.mubr.bf16.gmra.mrb[0].mxu0 %v1814
        %v1890 = vpop.f32.mrb[0].mxu0
        %v1891 = vadd.f32 0.0, %v1890
        %v1892 = vpop.f32.mrb[0].mxu0
        %v1893 = vpop.f32.mrb[0].mxu0
        %v1894 = vadd.f32 0.0, %v1893
        %v1895 = vpop.f32.mrb[0].mxu0
        %1896 = vmatprep.mubr.bf16.mxu0 0
        %1897 = vmatmul.mubr.bf16.gmra.mrb[0].mxu0 %v1817
        %v1898 = vpop.f32.mrb[0].mxu0
        %v1899 = vadd.f32 0.0, %v1898
        %v1900 = vpop.f32.mrb[0].mxu0
        %v1901 = vpop.f32.mrb[0].mxu0
        %v1902 = vadd.f32 0.0, %v1901
        %v1903 = vpop.f32.mrb[0].mxu0
        %1904 = vmatprep.mubr.bf16.mxu0 0
        %1905 = vmatmul.mubr.bf16.gmra.mrb[0].mxu0 %v1820
        %v1906 = vpop.f32.mrb[0].mxu0
        %v1907 = vadd.f32 0.0, %v1906
        %v1908 = vpop.f32.mrb[0].mxu0
        %v1909 = vpop.f32.mrb[0].mxu0
        %v1910 = vadd.f32 0.0, %v1909
        %v1911 = vpop.f32.mrb[0].mxu0
        %1912 = vmatprep.mubr.bf16.mxu0 0
        %1913 = vmatmul.mubr.bf16.gmra.mrb[0].mxu0 %v1823
        %v1914 = vpop.f32.mrb[0].mxu0
        %v1915 = vadd.f32 0.0, %v1914
        %v1916 = vpop.f32.mrb[0].mxu0
        %v1917 = vpop.f32.mrb[0].mxu0
        %v1918 = vadd.f32 0.0, %v1917
        %v1919 = vpop.f32.mrb[0].mxu0
        %1920 = vmatprep.mubr.bf16.mxu0 0
        %1921 = vmatmul.mubr.bf16.gmra.mrb[0].mxu0 %v1826
        %v1922 = vpop.f32.mrb[0].mxu0
        %v1923 = vadd.f32 0.0, %v1922
        %v1924 = vpop.f32.mrb[0].mxu0
        %v1925 = vpop.f32.mrb[0].mxu0
        %v1926 = vadd.f32 0.0, %v1925
        %v1927 = vpop.f32.mrb[0].mxu0
        %1928 = vmatprep.mubr.bf16.mxu0 0
        %1929 = vmatmul.mubr.bf16.gmra.mrb[0].mxu0 %v1829
        %v1930 = vpop.f32.mrb[0].mxu0
        %v1931 = vadd.f32 0.0, %v1930
        %v1932 = vpop.f32.mrb[0].mxu0
        %v1933 = vpop.f32.mrb[0].mxu0
        %v1934 = vadd.f32 0.0, %v1933
        %v1935 = vpop.f32.mrb[0].mxu0
        %1936 = vmatprep.mubr.bf16.mxu0 0
        %1937 = vmatmul.mubr.bf16.gmra.mrb[0].mxu0 %v1832
        %v1938 = vpop.f32.mrb[0].mxu0
        %v1939 = vadd.f32 0.0, %v1938
        %v1940 = vpop.f32.mrb[0].mxu0
        %v1941 = vpop.f32.mrb[0].mxu0
        %v1942 = vadd.f32 0.0, %v1941
        %v1943 = vpop.f32.mrb[0].mxu0
        %1944 = vmatprep.mubr.bf16.mxu0 0
        %1945 = vmatmul.mubr.bf16.gmra.mrb[0].mxu0 %v1835
        %v1946 = vpop.f32.mrb[0].mxu0
        %v1947 = vadd.f32 0.0, %v1946
        %v1948 = vpop.f32.mrb[0].mxu0
        %v1949 = vpop.f32.mrb[0].mxu0
        %v1950 = vadd.f32 0.0, %v1949
        %v1951 = vpop.f32.mrb[0].mxu0
        %1952 = vdwg.mxu0
        %v1953 = vadd.f32 %v1485, %v1875
        %v1954 = vadd.f32 %v1486, %v1878
        %v1955 = vadd.f32 %v1487, %v1883
        %v1956 = vadd.f32 %v1488, %v1886
        %v1957 = vadd.f32 %v1489, %v1891
        %v1958 = vadd.f32 %v1490, %v1894
        %v1959 = vadd.f32 %v1491, %v1899
        %v1960 = vadd.f32 %v1492, %v1902
        %v1961 = vadd.f32 %v1493, %v1907
        %v1962 = vadd.f32 %v1494, %v1910
        %v1963 = vadd.f32 %v1495, %v1915
        %v1964 = vadd.f32 %v1496, %v1918
        %v1965 = vadd.f32 %v1497, %v1923
        %v1966 = vadd.f32 %v1498, %v1926
        %v1967 = vadd.f32 %v1499, %v1931
        %v1968 = vadd.f32 %v1500, %v1934
        %v1969 = vadd.f32 %v1501, %v1939
        %v1970 = vadd.f32 %v1502, %v1942
        %v1971 = vadd.f32 %v1503, %v1947
        %v1972 = vadd.f32 %v1504, %v1950
        %v1973 = vld [vmem:[%s1266] sm:$0xe]
        %v1974 = vld [vmem:[%s1266 + $0xc] sm:$0xe]
        %v1975 = vld [vmem:[%s1266 + $0x18] sm:$0xe]
        %v1976 = vld [vmem:[%s1266 + $0x24] sm:$0xe]
        %v1977 = vld [vmem:[%s1266 + $0x30] sm:$0xe]
        %v1978 = vld [vmem:[%s1266 + $0x3c] sm:$0xe]
        %v1979 = vld [vmem:[%s1266 + $0x48] sm:$0xe]
        %v1980 = vld [vmem:[%s1266 + $0x54] sm:$0xe]
        %v1981 = vld [vmem:[%s1266 + $0x60] sm:$0xe]
        %v1982 = vld [vmem:[%s1266 + $0x6c] sm:$0xe]
        %v2013 = vrot.slane %v1973, 5
        %v2014 = vrot.slane %v2013, 4
        %v2015 = vrot.slane %v1506, 5
        %v2016 = vsel %vm994, %v2014, %v2015
        %v2017 = vrot.slane %v2015, 4
        %v2018 = vrot.slane %v1507, 5
        %v2019 = vsel %vm994, %v2017, %v2018
        %v2020 = vrot.slane %v1974, 5
        %v2021 = vrot.slane %v2020, 4
        %v2022 = vrot.slane %v1509, 5
        %v2023 = vsel %vm994, %v2021, %v2022
        %v2024 = vrot.slane %v2022, 4
        %v2025 = vrot.slane %v1510, 5
        %v2026 = vsel %vm994, %v2024, %v2025
        %v2027 = vrot.slane %v1975, 5
        %v2028 = vrot.slane %v2027, 4
        %v2029 = vrot.slane %v1512, 5
        %v2030 = vsel %vm994, %v2028, %v2029
        %v2031 = vrot.slane %v2029, 4
        %v2032 = vrot.slane %v1513, 5
        %v2033 = vsel %vm994, %v2031, %v2032
        %v2034 = vrot.slane %v1976, 5
        %v2035 = vrot.slane %v2034, 4
        %v2036 = vrot.slane %v1515, 5
        %v2037 = vsel %vm994, %v2035, %v2036
        %v2038 = vrot.slane %v2036, 4
        %v2039 = vrot.slane %v1516, 5
        %v2040 = vsel %vm994, %v2038, %v2039
        %v2041 = vrot.slane %v1977, 5
        %v2042 = vrot.slane %v2041, 4
        %v2043 = vrot.slane %v1518, 5
        %v2044 = vsel %vm994, %v2042, %v2043
        %v2045 = vrot.slane %v2043, 4
        %v2046 = vrot.slane %v1519, 5
        %v2047 = vsel %vm994, %v2045, %v2046
        %v2048 = vrot.slane %v1978, 5
        %v2049 = vrot.slane %v2048, 4
        %v2050 = vrot.slane %v1521, 5
        %v2051 = vsel %vm994, %v2049, %v2050
        %v2052 = vrot.slane %v2050, 4
        %v2053 = vrot.slane %v1522, 5
        %v2054 = vsel %vm994, %v2052, %v2053
        %v2055 = vrot.slane %v1979, 5
        %v2056 = vrot.slane %v2055, 4
        %v2057 = vrot.slane %v1524, 5
        %v2058 = vsel %vm994, %v2056, %v2057
        %v2059 = vrot.slane %v2057, 4
        %v2060 = vrot.slane %v1525, 5
        %v2061 = vsel %vm994, %v2059, %v2060
        %v2062 = vrot.slane %v1980, 5
        %v2063 = vrot.slane %v2062, 4
        %v2064 = vrot.slane %v1527, 5
        %v2065 = vsel %vm994, %v2063, %v2064
        %v2066 = vrot.slane %v2064, 4
        %v2067 = vrot.slane %v1528, 5
        %v2068 = vsel %vm994, %v2066, %v2067
        %v2069 = vrot.slane %v1981, 5
        %v2070 = vrot.slane %v2069, 4
        %v2071 = vrot.slane %v1530, 5
        %v2072 = vsel %vm994, %v2070, %v2071
        %v2073 = vrot.slane %v2071, 4
        %v2074 = vrot.slane %v1531, 5
        %v2075 = vsel %vm994, %v2073, %v2074
        %v2076 = vrot.slane %v1982, 5
        %v2077 = vrot.slane %v2076, 4
        %v2078 = vrot.slane %v1533, 5
        %v2079 = vsel %vm994, %v2077, %v2078
        %v2080 = vrot.slane %v2078, 4
        %v2081 = vrot.slane %v1534, 5
        %v2082 = vsel %vm994, %v2080, %v2081
        %s2083 = scalar_lea.vmem %s1, 10
        %v2084 = vld [vmem:[%s2083] sm:$0x3]
        %v2085 = vunpack.c.l.b16 %v2016
        %v2086 = vunpack.c.l.b16 %v2019
        %v2087 = vunpack.c.l.b16 %v2023
        %v2088 = vunpack.c.l.b16 %v2026
        %v2089 = vunpack.c.l.b16 %v2030
        %v2090 = vunpack.c.l.b16 %v2033
        %v2091 = vunpack.c.l.b16 %v2037
        %v2092 = vunpack.c.l.b16 %v2040
        %v2093 = vunpack.c.l.b16 %v2044
        %v2094 = vunpack.c.l.b16 %v2047
        %v2095 = vunpack.c.l.b16 %v2051
        %v2096 = vunpack.c.l.b16 %v2054
        %v2097 = vunpack.c.l.b16 %v2058
        %v2098 = vunpack.c.l.b16 %v2061
        %v2099 = vunpack.c.l.b16 %v2065
        %v2100 = vunpack.c.l.b16 %v2068
        %v2101 = vunpack.c.l.b16 %v2072
        %v2102 = vunpack.c.l.b16 %v2075
        %v2103 = vunpack.c.l.b16 %v2079
        %v2104 = vunpack.c.l.b16 %v2082
        %v2105 = vpack.c.b16 %v2086, %v2085
        %v2106 = vpack.c.b16 %v2088, %v2087
        %v2107 = vpack.c.b16 %v2090, %v2089
        %v2108 = vpack.c.b16 %v2092, %v2091
        %v2109 = vpack.c.b16 %v2094, %v2093
        %v2110 = vpack.c.b16 %v2096, %v2095
        %v2111 = vpack.c.b16 %v2098, %v2097
        %v2112 = vpack.c.b16 %v2100, %v2099
        %v2113 = vpack.c.b16 %v2102, %v2101
        %v2114 = vpack.c.b16 %v2104, %v2103
        %v2116 = vsel %vm618, %v2105, 0
        %v2119 = vsel %vm618, %v2106, 0
        %v2122 = vsel %vm618, %v2107, 0
        %v2125 = vsel %vm618, %v2108, 0
        %v2128 = vsel %vm618, %v2109, 0
        %v2131 = vsel %vm618, %v2110, 0
        %v2134 = vsel %vm618, %v2111, 0
        %v2137 = vsel %vm618, %v2112, 0
        %v2140 = vsel %vm618, %v2113, 0
        %v2143 = vsel %vm618, %v2114, 0
        %v2146 = vsel %vm649, %v2084, 0
        %2148 = vmatprep.subr.bf16.mxu0 0
        %2149 = vmatpush1.bf16.msra.mxu0 %v2146
        %2150 = vmatprep.subr.bf16.mxu0 0
        %2151 = vmatpush1.bf16.msra.mxu0 0
        %2152 = vmatprep.subr.bf16.mxu0 0
        %2153 = vmatpush1.bf16.msra.mxu0 0
        %2154 = vmatprep.subr.bf16.mxu0 0
        %2155 = vmatpush1.bf16.msra.mxu0 0
        %2156 = vmatprep.subr.bf16.mxu0 0
        %2157 = vmatpush1.bf16.msra.mxu0 0
        %2158 = vmatprep.subr.bf16.mxu0 0
        %2159 = vmatpush1.bf16.msra.mxu0 0
        %2160 = vmatprep.subr.bf16.mxu0 0
        %2161 = vmatpush1.bf16.msra.mxu0 0
        %2162 = vmatprep.subr.bf16.mxu0 0
        %2163 = vmatpush1.bf16.msra.mxu0 0
        %2164 = vmatprep.subr.bf16.mxu0 0
        %2165 = vmatpush1.bf16.msra.mxu0 0
        %2166 = vmatprep.subr.bf16.mxu0 0
        %2167 = vmatpush1.bf16.msra.mxu0 0
        %2168 = vmatprep.subr.bf16.mxu0 0
        %2169 = vmatpush1.bf16.msra.mxu0 0
        %2170 = vmatprep.subr.bf16.mxu0 0
        %2171 = vmatpush1.bf16.msra.mxu0 0
        %2172 = vmatprep.subr.bf16.mxu0 0
        %2173 = vmatpush1.bf16.msra.mxu0 0
        %2174 = vmatprep.subr.bf16.mxu0 0
        %2175 = vmatpush1.bf16.msra.mxu0 0
        %2176 = vmatprep.subr.bf16.mxu0 0
        %2177 = vmatpush1.bf16.msra.mxu0 0
        %2178 = vmatprep.subr.bf16.mxu0 0
        %2179 = vmatpush1.bf16.msra.mxu0 0
        %2180 = vmatprep.mubr.bf16.mxu0 0
        %2181 = vmatmul.mubr.bf16.gmra.mrb[0].mxu0 %v2116
        %v2182 = vpop.f32.mrb[0].mxu0
        %v2183 = vadd.f32 0.0, %v2182
        %v2184 = vpop.f32.mrb[0].mxu0
        %v2185 = vpop.f32.mrb[0].mxu0
        %v2186 = vadd.f32 0.0, %v2185
        %v2187 = vpop.f32.mrb[0].mxu0
        %2188 = vmatprep.mubr.bf16.mxu0 0
        %2189 = vmatmul.mubr.bf16.gmra.mrb[0].mxu0 %v2119
        %v2190 = vpop.f32.mrb[0].mxu0
        %v2191 = vadd.f32 0.0, %v2190
        %v2192 = vpop.f32.mrb[0].mxu0
        %v2193 = vpop.f32.mrb[0].mxu0
        %v2194 = vadd.f32 0.0, %v2193
        %v2195 = vpop.f32.mrb[0].mxu0
        %2196 = vmatprep.mubr.bf16.mxu0 0
        %2197 = vmatmul.mubr.bf16.gmra.mrb[0].mxu0 %v2122
        %v2198 = vpop.f32.mrb[0].mxu0
        %v2199 = vadd.f32 0.0, %v2198
        %v2200 = vpop.f32.mrb[0].mxu0
        %v2201 = vpop.f32.mrb[0].mxu0
        %v2202 = vadd.f32 0.0, %v2201
        %v2203 = vpop.f32.mrb[0].mxu0
        %2204 = vmatprep.mubr.bf16.mxu0 0
        %2205 = vmatmul.mubr.bf16.gmra.mrb[0].mxu0 %v2125
        %v2206 = vpop.f32.mrb[0].mxu0
        %v2207 = vadd.f32 0.0, %v2206
        %v2208 = vpop.f32.mrb[0].mxu0
        %v2209 = vpop.f32.mrb[0].mxu0
        %v2210 = vadd.f32 0.0, %v2209
        %v2211 = vpop.f32.mrb[0].mxu0
        %2212 = vmatprep.mubr.bf16.mxu0 0
        %2213 = vmatmul.mubr.bf16.gmra.mrb[0].mxu0 %v2128
        %v2214 = vpop.f32.mrb[0].mxu0
        %v2215 = vadd.f32 0.0, %v2214
        %v2216 = vpop.f32.mrb[0].mxu0
        %v2217 = vpop.f32.mrb[0].mxu0
        %v2218 = vadd.f32 0.0, %v2217
        %v2219 = vpop.f32.mrb[0].mxu0
        %2220 = vmatprep.mubr.bf16.mxu0 0
        %2221 = vmatmul.mubr.bf16.gmra.mrb[0].mxu0 %v2131
        %v2222 = vpop.f32.mrb[0].mxu0
        %v2223 = vadd.f32 0.0, %v2222
        %v2224 = vpop.f32.mrb[0].mxu0
        %v2225 = vpop.f32.mrb[0].mxu0
        %v2226 = vadd.f32 0.0, %v2225
        %v2227 = vpop.f32.mrb[0].mxu0
        %2228 = vmatprep.mubr.bf16.mxu0 0
        %2229 = vmatmul.mubr.bf16.gmra.mrb[0].mxu0 %v2134
        %v2230 = vpop.f32.mrb[0].mxu0
        %v2231 = vadd.f32 0.0, %v2230
        %v2232 = vpop.f32.mrb[0].mxu0
        %v2233 = vpop.f32.mrb[0].mxu0
        %v2234 = vadd.f32 0.0, %v2233
        %v2235 = vpop.f32.mrb[0].mxu0
        %2236 = vmatprep.mubr.bf16.mxu0 0
        %2237 = vmatmul.mubr.bf16.gmra.mrb[0].mxu0 %v2137
        %v2238 = vpop.f32.mrb[0].mxu0
        %v2239 = vadd.f32 0.0, %v2238
        %v2240 = vpop.f32.mrb[0].mxu0
        %v2241 = vpop.f32.mrb[0].mxu0
        %v2242 = vadd.f32 0.0, %v2241
        %v2243 = vpop.f32.mrb[0].mxu0
        %2244 = vmatprep.mubr.bf16.mxu0 0
        %2245 = vmatmul.mubr.bf16.gmra.mrb[0].mxu0 %v2140
        %v2246 = vpop.f32.mrb[0].mxu0
        %v2247 = vadd.f32 0.0, %v2246
        %v2248 = vpop.f32.mrb[0].mxu0
        %v2249 = vpop.f32.mrb[0].mxu0
        %v2250 = vadd.f32 0.0, %v2249
        %v2251 = vpop.f32.mrb[0].mxu0
        %2252 = vmatprep.mubr.bf16.mxu0 0
        %2253 = vmatmul.mubr.bf16.gmra.mrb[0].mxu0 %v2143
        %v2254 = vpop.f32.mrb[0].mxu0
        %v2255 = vadd.f32 0.0, %v2254
        %v2256 = vpop.f32.mrb[0].mxu0
        %v2257 = vpop.f32.mrb[0].mxu0
        %v2258 = vadd.f32 0.0, %v2257
        %v2259 = vpop.f32.mrb[0].mxu0
        %2260 = vdwg.mxu0
        %v2261 = vadd.f32 %v1953, %v2183
        %v2262 = vadd.f32 %v1954, %v2186
        %v2263 = vadd.f32 %v1955, %v2191
        %v2264 = vadd.f32 %v1956, %v2194
        %v2265 = vadd.f32 %v1957, %v2199
        %v2266 = vadd.f32 %v1958, %v2202
        %v2267 = vadd.f32 %v1959, %v2207
        %v2268 = vadd.f32 %v1960, %v2210
        %v2269 = vadd.f32 %v1961, %v2215
        %v2270 = vadd.f32 %v1962, %v2218
        %v2271 = vadd.f32 %v1963, %v2223
        %v2272 = vadd.f32 %v1964, %v2226
        %v2273 = vadd.f32 %v1965, %v2231
        %v2274 = vadd.f32 %v1966, %v2234
        %v2275 = vadd.f32 %v1967, %v2239
        %v2276 = vadd.f32 %v1968, %v2242
        %v2277 = vadd.f32 %v1969, %v2247
        %v2278 = vadd.f32 %v1970, %v2250
        %v2279 = vadd.f32 %v1971, %v2255
        %v2280 = vadd.f32 %v1972, %v2258
        %s2281 = sadd.s32 %s308, 2
        %s2282 = smul.u32 %s2281, 3
        %s2283 = smul.addr %s2282, 4
        %s2284 = scalar_lea.vmem %s305, %s2283
        %v2285 = vld [vmem:[%s2284] sm:$0xf]
        %v2286 = vld [vmem:[%s2284 + $0x4] sm:$0xf]
        %v2287 = vld [vmem:[%s2284 + $0xc] sm:$0xf]
        %v2288 = vld [vmem:[%s2284 + $0x10] sm:$0xf]
        %v2289 = vld [vmem:[%s2284 + $0x18] sm:$0xf]
        %v2290 = vld [vmem:[%s2284 + $0x1c] sm:$0xf]
        %v2291 = vld [vmem:[%s2284 + $0x24] sm:$0xf]
        %v2292 = vld [vmem:[%s2284 + $0x28] sm:$0xf]
        %v2293 = vld [vmem:[%s2284 + $0x30] sm:$0xf]
        %v2294 = vld [vmem:[%s2284 + $0x34] sm:$0xf]
        %v2295 = vld [vmem:[%s2284 + $0x3c] sm:$0xf]
        %v2296 = vld [vmem:[%s2284 + $0x40] sm:$0xf]
        %v2297 = vld [vmem:[%s2284 + $0x48] sm:$0xf]
        %v2298 = vld [vmem:[%s2284 + $0x4c] sm:$0xf]
        %v2299 = vld [vmem:[%s2284 + $0x54] sm:$0xf]
        %v2300 = vld [vmem:[%s2284 + $0x58] sm:$0xf]
        %v2301 = vld [vmem:[%s2284 + $0x60] sm:$0xf]
        %v2302 = vld [vmem:[%s2284 + $0x64] sm:$0xf]
        %v2303 = vld [vmem:[%s2284 + $0x6c] sm:$0xf]
        %v2304 = vld [vmem:[%s2284 + $0x70] sm:$0xf]
        %s2305 = scalar_lea.vmem %s1, 12
        %v2306 = vld [vmem:[%s2305] sm:$0x3]
        %v2327 = vunpack.c.l.b16 %v2285
        %v2328 = vunpack.c.l.b16 %v2286
        %v2329 = vunpack.c.l.b16 %v2287
        %v2330 = vunpack.c.l.b16 %v2288
        %v2331 = vunpack.c.l.b16 %v2289
        %v2332 = vunpack.c.l.b16 %v2290
        %v2333 = vunpack.c.l.b16 %v2291
        %v2334 = vunpack.c.l.b16 %v2292
        %v2335 = vunpack.c.l.b16 %v2293
        %v2336 = vunpack.c.l.b16 %v2294
        %v2337 = vunpack.c.l.b16 %v2295
        %v2338 = vunpack.c.l.b16 %v2296
        %v2339 = vunpack.c.l.b16 %v2297
        %v2340 = vunpack.c.l.b16 %v2298
        %v2341 = vunpack.c.l.b16 %v2299
        %v2342 = vunpack.c.l.b16 %v2300
        %v2343 = vunpack.c.l.b16 %v2301
        %v2344 = vunpack.c.l.b16 %v2302
        %v2345 = vunpack.c.l.b16 %v2303
        %v2346 = vunpack.c.l.b16 %v2304
        %v2347 = vpack.c.b16 %v2328, %v2327
        %v2348 = vpack.c.b16 %v2330, %v2329
        %v2349 = vpack.c.b16 %v2332, %v2331
        %v2350 = vpack.c.b16 %v2334, %v2333
        %v2351 = vpack.c.b16 %v2336, %v2335
        %v2352 = vpack.c.b16 %v2338, %v2337
        %v2353 = vpack.c.b16 %v2340, %v2339
        %v2354 = vpack.c.b16 %v2342, %v2341
        %v2355 = vpack.c.b16 %v2344, %v2343
        %v2356 = vpack.c.b16 %v2346, %v2345
        %v2358 = vsel %vm618, %v2347, 0
        %v2361 = vsel %vm618, %v2348, 0
        %v2364 = vsel %vm618, %v2349, 0
        %v2367 = vsel %vm618, %v2350, 0
        %v2370 = vsel %vm618, %v2351, 0
        %v2373 = vsel %vm618, %v2352, 0
        %v2376 = vsel %vm618, %v2353, 0
        %v2379 = vsel %vm618, %v2354, 0
        %v2382 = vsel %vm618, %v2355, 0
        %v2385 = vsel %vm618, %v2356, 0
        %v2388 = vsel %vm649, %v2306, 0
        %2390 = vmatprep.subr.bf16.mxu0 0
        %2391 = vmatpush1.bf16.msra.mxu0 %v2388
        %2392 = vmatprep.subr.bf16.mxu0 0
        %2393 = vmatpush1.bf16.msra.mxu0 0
        %2394 = vmatprep.subr.bf16.mxu0 0
        %2395 = vmatpush1.bf16.msra.mxu0 0
        %2396 = vmatprep.subr.bf16.mxu0 0
        %2397 = vmatpush1.bf16.msra.mxu0 0
        %2398 = vmatprep.subr.bf16.mxu0 0
        %2399 = vmatpush1.bf16.msra.mxu0 0
        %2400 = vmatprep.subr.bf16.mxu0 0
        %2401 = vmatpush1.bf16.msra.mxu0 0
        %2402 = vmatprep.subr.bf16.mxu0 0
        %2403 = vmatpush1.bf16.msra.mxu0 0
        %2404 = vmatprep.subr.bf16.mxu0 0
        %2405 = vmatpush1.bf16.msra.mxu0 0
        %2406 = vmatprep.subr.bf16.mxu0 0
        %2407 = vmatpush1.bf16.msra.mxu0 0
        %2408 = vmatprep.subr.bf16.mxu0 0
        %2409 = vmatpush1.bf16.msra.mxu0 0
        %2410 = vmatprep.subr.bf16.mxu0 0
        %2411 = vmatpush1.bf16.msra.mxu0 0
        %2412 = vmatprep.subr.bf16.mxu0 0
        %2413 = vmatpush1.bf16.msra.mxu0 0
        %2414 = vmatprep.subr.bf16.mxu0 0
        %2415 = vmatpush1.bf16.msra.mxu0 0
        %2416 = vmatprep.subr.bf16.mxu0 0
        %2417 = vmatpush1.bf16.msra.mxu0 0
        %2418 = vmatprep.subr.bf16.mxu0 0
        %2419 = vmatpush1.bf16.msra.mxu0 0
        %2420 = vmatprep.subr.bf16.mxu0 0
        %2421 = vmatpush1.bf16.msra.mxu0 0
        %2422 = vmatprep.mubr.bf16.mxu0 0
        %2423 = vmatmul.mubr.bf16.gmra.mrb[0].mxu0 %v2358
        %v2424 = vpop.f32.mrb[0].mxu0
        %v2425 = vadd.f32 0.0, %v2424
        %v2426 = vpop.f32.mrb[0].mxu0
        %v2427 = vpop.f32.mrb[0].mxu0
        %v2428 = vadd.f32 0.0, %v2427
        %v2429 = vpop.f32.mrb[0].mxu0
        %2430 = vmatprep.mubr.bf16.mxu0 0
        %2431 = vmatmul.mubr.bf16.gmra.mrb[0].mxu0 %v2361
        %v2432 = vpop.f32.mrb[0].mxu0
        %v2433 = vadd.f32 0.0, %v2432
        %v2434 = vpop.f32.mrb[0].mxu0
        %v2435 = vpop.f32.mrb[0].mxu0
        %v2436 = vadd.f32 0.0, %v2435
        %v2437 = vpop.f32.mrb[0].mxu0
        %2438 = vmatprep.mubr.bf16.mxu0 0
        %2439 = vmatmul.mubr.bf16.gmra.mrb[0].mxu0 %v2364
        %v2440 = vpop.f32.mrb[0].mxu0
        %v2441 = vadd.f32 0.0, %v2440
        %v2442 = vpop.f32.mrb[0].mxu0
        %v2443 = vpop.f32.mrb[0].mxu0
        %v2444 = vadd.f32 0.0, %v2443
        %v2445 = vpop.f32.mrb[0].mxu0
        %2446 = vmatprep.mubr.bf16.mxu0 0
        %2447 = vmatmul.mubr.bf16.gmra.mrb[0].mxu0 %v2367
        %v2448 = vpop.f32.mrb[0].mxu0
        %v2449 = vadd.f32 0.0, %v2448
        %v2450 = vpop.f32.mrb[0].mxu0
        %v2451 = vpop.f32.mrb[0].mxu0
        %v2452 = vadd.f32 0.0, %v2451
        %v2453 = vpop.f32.mrb[0].mxu0
        %2454 = vmatprep.mubr.bf16.mxu0 0
        %2455 = vmatmul.mubr.bf16.gmra.mrb[0].mxu0 %v2370
        %v2456 = vpop.f32.mrb[0].mxu0
        %v2457 = vadd.f32 0.0, %v2456
        %v2458 = vpop.f32.mrb[0].mxu0
        %v2459 = vpop.f32.mrb[0].mxu0
        %v2460 = vadd.f32 0.0, %v2459
        %v2461 = vpop.f32.mrb[0].mxu0
        %2462 = vmatprep.mubr.bf16.mxu0 0
        %2463 = vmatmul.mubr.bf16.gmra.mrb[0].mxu0 %v2373
        %v2464 = vpop.f32.mrb[0].mxu0
        %v2465 = vadd.f32 0.0, %v2464
        %v2466 = vpop.f32.mrb[0].mxu0
        %v2467 = vpop.f32.mrb[0].mxu0
        %v2468 = vadd.f32 0.0, %v2467
        %v2469 = vpop.f32.mrb[0].mxu0
        %2470 = vmatprep.mubr.bf16.mxu0 0
        %2471 = vmatmul.mubr.bf16.gmra.mrb[0].mxu0 %v2376
        %v2472 = vpop.f32.mrb[0].mxu0
        %v2473 = vadd.f32 0.0, %v2472
        %v2474 = vpop.f32.mrb[0].mxu0
        %v2475 = vpop.f32.mrb[0].mxu0
        %v2476 = vadd.f32 0.0, %v2475
        %v2477 = vpop.f32.mrb[0].mxu0
        %2478 = vmatprep.mubr.bf16.mxu0 0
        %2479 = vmatmul.mubr.bf16.gmra.mrb[0].mxu0 %v2379
        %v2480 = vpop.f32.mrb[0].mxu0
        %v2481 = vadd.f32 0.0, %v2480
        %v2482 = vpop.f32.mrb[0].mxu0
        %v2483 = vpop.f32.mrb[0].mxu0
        %v2484 = vadd.f32 0.0, %v2483
        %v2485 = vpop.f32.mrb[0].mxu0
        %2486 = vmatprep.mubr.bf16.mxu0 0
        %2487 = vmatmul.mubr.bf16.gmra.mrb[0].mxu0 %v2382
        %v2488 = vpop.f32.mrb[0].mxu0
        %v2489 = vadd.f32 0.0, %v2488
        %v2490 = vpop.f32.mrb[0].mxu0
        %v2491 = vpop.f32.mrb[0].mxu0
        %v2492 = vadd.f32 0.0, %v2491
        %v2493 = vpop.f32.mrb[0].mxu0
        %2494 = vmatprep.mubr.bf16.mxu0 0
        %2495 = vmatmul.mubr.bf16.gmra.mrb[0].mxu0 %v2385
        %v2496 = vpop.f32.mrb[0].mxu0
        %v2497 = vadd.f32 0.0, %v2496
        %v2498 = vpop.f32.mrb[0].mxu0
        %v2499 = vpop.f32.mrb[0].mxu0
        %v2500 = vadd.f32 0.0, %v2499
        %v2501 = vpop.f32.mrb[0].mxu0
        %2502 = vdwg.mxu0
        %v2503 = vadd.f32 %v2261, %v2425
        %v2504 = vadd.f32 %v2262, %v2428
        %v2505 = vadd.f32 %v2263, %v2433
        %v2506 = vadd.f32 %v2264, %v2436
        %v2507 = vadd.f32 %v2265, %v2441
        %v2508 = vadd.f32 %v2266, %v2444
        %v2509 = vadd.f32 %v2267, %v2449
        %v2510 = vadd.f32 %v2268, %v2452
        %v2511 = vadd.f32 %v2269, %v2457
        %v2512 = vadd.f32 %v2270, %v2460
        %v2513 = vadd.f32 %v2271, %v2465
        %v2514 = vadd.f32 %v2272, %v2468
        %v2515 = vadd.f32 %v2273, %v2473
        %v2516 = vadd.f32 %v2274, %v2476
        %v2517 = vadd.f32 %v2275, %v2481
        %v2518 = vadd.f32 %v2276, %v2484
        %v2519 = vadd.f32 %v2277, %v2489
        %v2520 = vadd.f32 %v2278, %v2492
        %v2521 = vadd.f32 %v2279, %v2497
        %v2522 = vadd.f32 %v2280, %v2500
        %v2523 = vld [vmem:[%s2284] sm:$0xf]
        %v2524 = vld [vmem:[%s2284 + $0x4] sm:$0xf]
        %v2525 = vld [vmem:[%s2284 + $0x8] sm:$0x1]
        %v2526 = vld [vmem:[%s2284 + $0xc] sm:$0xf]
        %v2527 = vld [vmem:[%s2284 + $0x10] sm:$0xf]
        %v2528 = vld [vmem:[%s2284 + $0x14] sm:$0x1]
        %v2529 = vld [vmem:[%s2284 + $0x18] sm:$0xf]
        %v2530 = vld [vmem:[%s2284 + $0x1c] sm:$0xf]
        %v2531 = vld [vmem:[%s2284 + $0x20] sm:$0x1]
        %v2532 = vld [vmem:[%s2284 + $0x24] sm:$0xf]
        %v2533 = vld [vmem:[%s2284 + $0x28] sm:$0xf]
        %v2534 = vld [vmem:[%s2284 + $0x2c] sm:$0x1]
        %v2535 = vld [vmem:[%s2284 + $0x30] sm:$0xf]
        %v2536 = vld [vmem:[%s2284 + $0x34] sm:$0xf]
        %v2537 = vld [vmem:[%s2284 + $0x38] sm:$0x1]
        %v2538 = vld [vmem:[%s2284 + $0x3c] sm:$0xf]
        %v2539 = vld [vmem:[%s2284 + $0x40] sm:$0xf]
        %v2540 = vld [vmem:[%s2284 + $0x44] sm:$0x1]
        %v2541 = vld [vmem:[%s2284 + $0x48] sm:$0xf]
        %v2542 = vld [vmem:[%s2284 + $0x4c] sm:$0xf]
        %v2543 = vld [vmem:[%s2284 + $0x50] sm:$0x1]
        %v2544 = vld [vmem:[%s2284 + $0x54] sm:$0xf]
        %v2545 = vld [vmem:[%s2284 + $0x58] sm:$0xf]
        %v2546 = vld [vmem:[%s2284 + $0x5c] sm:$0x1]
        %v2547 = vld [vmem:[%s2284 + $0x60] sm:$0xf]
        %v2548 = vld [vmem:[%s2284 + $0x64] sm:$0xf]
        %v2549 = vld [vmem:[%s2284 + $0x68] sm:$0x1]
        %v2550 = vld [vmem:[%s2284 + $0x6c] sm:$0xf]
        %v2551 = vld [vmem:[%s2284 + $0x70] sm:$0xf]
        %v2552 = vld [vmem:[%s2284 + $0x74] sm:$0x1]
        %v2554 = vshrl.u32 %v2523, 16
        %v2556 = vrot.slane %v2554, 4
        %v2557 = vshll.u32 %v2523, 16
        %v2559 = vrot.slane %v2557, 5
        %v2560 = vor.u32 %v2556, %v2559
        %v2561 = vrot.slane %v2560, 4
        %v2563 = vshll.u32 %v2524, 16
        %v2565 = vrot.slane %v2563, 5
        %v2566 = vsel %vm345, %v2561, %v2565
        %v2567 = vshrl.u32 %v2524, 16
        %v2569 = vrot.slane %v2567, 4
        %v2570 = vor.u32 %v2569, %v2565
        %v2571 = vrot.slane %v2570, 4
        %v2573 = vshll.u32 %v2525, 16
        %v2575 = vrot.slane %v2573, 5
        %v2576 = vsel %vm345, %v2571, %v2575
        %v2578 = vshrl.u32 %v2526, 16
        %v2580 = vrot.slane %v2578, 4
        %v2581 = vshll.u32 %v2526, 16
        %v2583 = vrot.slane %v2581, 5
        %v2584 = vor.u32 %v2580, %v2583
        %v2585 = vrot.slane %v2584, 4
        %v2587 = vshll.u32 %v2527, 16
        %v2589 = vrot.slane %v2587, 5
        %v2590 = vsel %vm345, %v2585, %v2589
        %v2591 = vshrl.u32 %v2527, 16
        %v2593 = vrot.slane %v2591, 4
        %v2594 = vor.u32 %v2593, %v2589
        %v2595 = vrot.slane %v2594, 4
        %v2597 = vshll.u32 %v2528, 16
        %v2599 = vrot.slane %v2597, 5
        %v2600 = vsel %vm345, %v2595, %v2599
        %v2602 = vshrl.u32 %v2529, 16
        %v2604 = vrot.slane %v2602, 4
        %v2605 = vshll.u32 %v2529, 16
        %v2607 = vrot.slane %v2605, 5
        %v2608 = vor.u32 %v2604, %v2607
        %v2609 = vrot.slane %v2608, 4
        %v2611 = vshll.u32 %v2530, 16
        %v2613 = vrot.slane %v2611, 5
        %v2614 = vsel %vm345, %v2609, %v2613
        %v2615 = vshrl.u32 %v2530, 16
        %v2617 = vrot.slane %v2615, 4
        %v2618 = vor.u32 %v2617, %v2613
        %v2619 = vrot.slane %v2618, 4
        %v2621 = vshll.u32 %v2531, 16
        %v2623 = vrot.slane %v2621, 5
        %v2624 = vsel %vm345, %v2619, %v2623
        %v2626 = vshrl.u32 %v2532, 16
        %v2628 = vrot.slane %v2626, 4
        %v2629 = vshll.u32 %v2532, 16
        %v2631 = vrot.slane %v2629, 5
        %v2632 = vor.u32 %v2628, %v2631
        %v2633 = vrot.slane %v2632, 4
        %v2635 = vshll.u32 %v2533, 16
        %v2637 = vrot.slane %v2635, 5
        %v2638 = vsel %vm345, %v2633, %v2637
        %v2639 = vshrl.u32 %v2533, 16
        %v2641 = vrot.slane %v2639, 4
        %v2642 = vor.u32 %v2641, %v2637
        %v2643 = vrot.slane %v2642, 4
        %v2645 = vshll.u32 %v2534, 16
        %v2647 = vrot.slane %v2645, 5
        %v2648 = vsel %vm345, %v2643, %v2647
        %v2650 = vshrl.u32 %v2535, 16
        %v2652 = vrot.slane %v2650, 4
        %v2653 = vshll.u32 %v2535, 16
        %v2655 = vrot.slane %v2653, 5
        %v2656 = vor.u32 %v2652, %v2655
        %v2657 = vrot.slane %v2656, 4
        %v2659 = vshll.u32 %v2536, 16
        %v2661 = vrot.slane %v2659, 5
        %v2662 = vsel %vm345, %v2657, %v2661
        %v2663 = vshrl.u32 %v2536, 16
        %v2665 = vrot.slane %v2663, 4
        %v2666 = vor.u32 %v2665, %v2661
        %v2667 = vrot.slane %v2666, 4
        %v2669 = vshll.u32 %v2537, 16
        %v2671 = vrot.slane %v2669, 5
        %v2672 = vsel %vm345, %v2667, %v2671
        %v2674 = vshrl.u32 %v2538, 16
        %v2676 = vrot.slane %v2674, 4
        %v2677 = vshll.u32 %v2538, 16
        %v2679 = vrot.slane %v2677, 5
        %v2680 = vor.u32 %v2676, %v2679
        %v2681 = vrot.slane %v2680, 4
        %v2683 = vshll.u32 %v2539, 16
        %v2685 = vrot.slane %v2683, 5
        %v2686 = vsel %vm345, %v2681, %v2685
        %v2687 = vshrl.u32 %v2539, 16
        %v2689 = vrot.slane %v2687, 4
        %v2690 = vor.u32 %v2689, %v2685
        %v2691 = vrot.slane %v2690, 4
        %v2693 = vshll.u32 %v2540, 16
        %v2695 = vrot.slane %v2693, 5
        %v2696 = vsel %vm345, %v2691, %v2695
        %v2698 = vshrl.u32 %v2541, 16
        %v2700 = vrot.slane %v2698, 4
        %v2701 = vshll.u32 %v2541, 16
        %v2703 = vrot.slane %v2701, 5
        %v2704 = vor.u32 %v2700, %v2703
        %v2705 = vrot.slane %v2704, 4
        %v2707 = vshll.u32 %v2542, 16
        %v2709 = vrot.slane %v2707, 5
        %v2710 = vsel %vm345, %v2705, %v2709
        %v2711 = vshrl.u32 %v2542, 16
        %v2713 = vrot.slane %v2711, 4
        %v2714 = vor.u32 %v2713, %v2709
        %v2715 = vrot.slane %v2714, 4
        %v2717 = vshll.u32 %v2543, 16
        %v2719 = vrot.slane %v2717, 5
        %v2720 = vsel %vm345, %v2715, %v2719
        %v2722 = vshrl.u32 %v2544, 16
        %v2724 = vrot.slane %v2722, 4
        %v2725 = vshll.u32 %v2544, 16
        %v2727 = vrot.slane %v2725, 5
        %v2728 = vor.u32 %v2724, %v2727
        %v2729 = vrot.slane %v2728, 4
        %v2731 = vshll.u32 %v2545, 16
        %v2733 = vrot.slane %v2731, 5
        %v2734 = vsel %vm345, %v2729, %v2733
        %v2735 = vshrl.u32 %v2545, 16
        %v2737 = vrot.slane %v2735, 4
        %v2738 = vor.u32 %v2737, %v2733
        %v2739 = vrot.slane %v2738, 4
        %v2741 = vshll.u32 %v2546, 16
        %v2743 = vrot.slane %v2741, 5
        %v2744 = vsel %vm345, %v2739, %v2743
        %v2746 = vshrl.u32 %v2547, 16
        %v2748 = vrot.slane %v2746, 4
        %v2749 = vshll.u32 %v2547, 16
        %v2751 = vrot.slane %v2749, 5
        %v2752 = vor.u32 %v2748, %v2751
        %v2753 = vrot.slane %v2752, 4
        %v2755 = vshll.u32 %v2548, 16
        %v2757 = vrot.slane %v2755, 5
        %v2758 = vsel %vm345, %v2753, %v2757
        %v2759 = vshrl.u32 %v2548, 16
        %v2761 = vrot.slane %v2759, 4
        %v2762 = vor.u32 %v2761, %v2757
        %v2763 = vrot.slane %v2762, 4
        %v2765 = vshll.u32 %v2549, 16
        %v2767 = vrot.slane %v2765, 5
        %v2768 = vsel %vm345, %v2763, %v2767
        %v2770 = vshrl.u32 %v2550, 16
        %v2772 = vrot.slane %v2770, 4
        %v2773 = vshll.u32 %v2550, 16
        %v2775 = vrot.slane %v2773, 5
        %v2776 = vor.u32 %v2772, %v2775
        %v2777 = vrot.slane %v2776, 4
        %v2779 = vshll.u32 %v2551, 16
        %v2781 = vrot.slane %v2779, 5
        %v2782 = vsel %vm345, %v2777, %v2781
        %v2783 = vshrl.u32 %v2551, 16
        %v2785 = vrot.slane %v2783, 4
        %v2786 = vor.u32 %v2785, %v2781
        %v2787 = vrot.slane %v2786, 4
        %v2789 = vshll.u32 %v2552, 16
        %v2791 = vrot.slane %v2789, 5
        %v2792 = vsel %vm345, %v2787, %v2791
        %s2793 = scalar_lea.vmem %s1, 14
        %v2794 = vld [vmem:[%s2793] sm:$0x3]
        %v2795 = vunpack.c.l.b16 %v2566
        %v2796 = vunpack.c.l.b16 %v2576
        %v2797 = vunpack.c.l.b16 %v2590
        %v2798 = vunpack.c.l.b16 %v2600
        %v2799 = vunpack.c.l.b16 %v2614
        %v2800 = vunpack.c.l.b16 %v2624
        %v2801 = vunpack.c.l.b16 %v2638
        %v2802 = vunpack.c.l.b16 %v2648
        %v2803 = vunpack.c.l.b16 %v2662
        %v2804 = vunpack.c.l.b16 %v2672
        %v2805 = vunpack.c.l.b16 %v2686
        %v2806 = vunpack.c.l.b16 %v2696
        %v2807 = vunpack.c.l.b16 %v2710
        %v2808 = vunpack.c.l.b16 %v2720
        %v2809 = vunpack.c.l.b16 %v2734
        %v2810 = vunpack.c.l.b16 %v2744
        %v2811 = vunpack.c.l.b16 %v2758
        %v2812 = vunpack.c.l.b16 %v2768
        %v2813 = vunpack.c.l.b16 %v2782
        %v2814 = vunpack.c.l.b16 %v2792
        %v2815 = vpack.c.b16 %v2796, %v2795
        %v2816 = vpack.c.b16 %v2798, %v2797
        %v2817 = vpack.c.b16 %v2800, %v2799
        %v2818 = vpack.c.b16 %v2802, %v2801
        %v2819 = vpack.c.b16 %v2804, %v2803
        %v2820 = vpack.c.b16 %v2806, %v2805
        %v2821 = vpack.c.b16 %v2808, %v2807
        %v2822 = vpack.c.b16 %v2810, %v2809
        %v2823 = vpack.c.b16 %v2812, %v2811
        %v2824 = vpack.c.b16 %v2814, %v2813
        %v2826 = vsel %vm618, %v2815, 0
        %v2829 = vsel %vm618, %v2816, 0
        %v2832 = vsel %vm618, %v2817, 0
        %v2835 = vsel %vm618, %v2818, 0
        %v2838 = vsel %vm618, %v2819, 0
        %v2841 = vsel %vm618, %v2820, 0
        %v2844 = vsel %vm618, %v2821, 0
        %v2847 = vsel %vm618, %v2822, 0
        %v2850 = vsel %vm618, %v2823, 0
        %v2853 = vsel %vm618, %v2824, 0
        %v2856 = vsel %vm649, %v2794, 0
        %2858 = vmatprep.subr.bf16.mxu0 0
        %2859 = vmatpush1.bf16.msra.mxu0 %v2856
        %2860 = vmatprep.subr.bf16.mxu0 0
        %2861 = vmatpush1.bf16.msra.mxu0 0
        %2862 = vmatprep.subr.bf16.mxu0 0
        %2863 = vmatpush1.bf16.msra.mxu0 0
        %2864 = vmatprep.subr.bf16.mxu0 0
        %2865 = vmatpush1.bf16.msra.mxu0 0
        %2866 = vmatprep.subr.bf16.mxu0 0
        %2867 = vmatpush1.bf16.msra.mxu0 0
        %2868 = vmatprep.subr.bf16.mxu0 0
        %2869 = vmatpush1.bf16.msra.mxu0 0
        %2870 = vmatprep.subr.bf16.mxu0 0
        %2871 = vmatpush1.bf16.msra.mxu0 0
        %2872 = vmatprep.subr.bf16.mxu0 0
        %2873 = vmatpush1.bf16.msra.mxu0 0
        %2874 = vmatprep.subr.bf16.mxu0 0
        %2875 = vmatpush1.bf16.msra.mxu0 0
        %2876 = vmatprep.subr.bf16.mxu0 0
        %2877 = vmatpush1.bf16.msra.mxu0 0
        %2878 = vmatprep.subr.bf16.mxu0 0
        %2879 = vmatpush1.bf16.msra.mxu0 0
        %2880 = vmatprep.subr.bf16.mxu0 0
        %2881 = vmatpush1.bf16.msra.mxu0 0
        %2882 = vmatprep.subr.bf16.mxu0 0
        %2883 = vmatpush1.bf16.msra.mxu0 0
        %2884 = vmatprep.subr.bf16.mxu0 0
        %2885 = vmatpush1.bf16.msra.mxu0 0
        %2886 = vmatprep.subr.bf16.mxu0 0
        %2887 = vmatpush1.bf16.msra.mxu0 0
        %2888 = vmatprep.subr.bf16.mxu0 0
        %2889 = vmatpush1.bf16.msra.mxu0 0
        %2890 = vmatprep.mubr.bf16.mxu0 0
        %2891 = vmatmul.mubr.bf16.gmra.mrb[0].mxu0 %v2826
        %v2892 = vpop.f32.mrb[0].mxu0
        %v2893 = vadd.f32 0.0, %v2892
        %v2894 = vpop.f32.mrb[0].mxu0
        %v2895 = vpop.f32.mrb[0].mxu0
        %v2896 = vadd.f32 0.0, %v2895
        %v2897 = vpop.f32.mrb[0].mxu0
        %2898 = vmatprep.mubr.bf16.mxu0 0
        %2899 = vmatmul.mubr.bf16.gmra.mrb[0].mxu0 %v2829
        %v2900 = vpop.f32.mrb[0].mxu0
        %v2901 = vadd.f32 0.0, %v2900
        %v2902 = vpop.f32.mrb[0].mxu0
        %v2903 = vpop.f32.mrb[0].mxu0
        %v2904 = vadd.f32 0.0, %v2903
        %v2905 = vpop.f32.mrb[0].mxu0
        %2906 = vmatprep.mubr.bf16.mxu0 0
        %2907 = vmatmul.mubr.bf16.gmra.mrb[0].mxu0 %v2832
        %v2908 = vpop.f32.mrb[0].mxu0
        %v2909 = vadd.f32 0.0, %v2908
        %v2910 = vpop.f32.mrb[0].mxu0
        %v2911 = vpop.f32.mrb[0].mxu0
        %v2912 = vadd.f32 0.0, %v2911
        %v2913 = vpop.f32.mrb[0].mxu0
        %2914 = vmatprep.mubr.bf16.mxu0 0
        %2915 = vmatmul.mubr.bf16.gmra.mrb[0].mxu0 %v2835
        %v2916 = vpop.f32.mrb[0].mxu0
        %v2917 = vadd.f32 0.0, %v2916
        %v2918 = vpop.f32.mrb[0].mxu0
        %v2919 = vpop.f32.mrb[0].mxu0
        %v2920 = vadd.f32 0.0, %v2919
        %v2921 = vpop.f32.mrb[0].mxu0
        %2922 = vmatprep.mubr.bf16.mxu0 0
        %2923 = vmatmul.mubr.bf16.gmra.mrb[0].mxu0 %v2838
        %v2924 = vpop.f32.mrb[0].mxu0
        %v2925 = vadd.f32 0.0, %v2924
        %v2926 = vpop.f32.mrb[0].mxu0
        %v2927 = vpop.f32.mrb[0].mxu0
        %v2928 = vadd.f32 0.0, %v2927
        %v2929 = vpop.f32.mrb[0].mxu0
        %2930 = vmatprep.mubr.bf16.mxu0 0
        %2931 = vmatmul.mubr.bf16.gmra.mrb[0].mxu0 %v2841
        %v2932 = vpop.f32.mrb[0].mxu0
        %v2933 = vadd.f32 0.0, %v2932
        %v2934 = vpop.f32.mrb[0].mxu0
        %v2935 = vpop.f32.mrb[0].mxu0
        %v2936 = vadd.f32 0.0, %v2935
        %v2937 = vpop.f32.mrb[0].mxu0
        %2938 = vmatprep.mubr.bf16.mxu0 0
        %2939 = vmatmul.mubr.bf16.gmra.mrb[0].mxu0 %v2844
        %v2940 = vpop.f32.mrb[0].mxu0
        %v2941 = vadd.f32 0.0, %v2940
        %v2942 = vpop.f32.mrb[0].mxu0
        %v2943 = vpop.f32.mrb[0].mxu0
        %v2944 = vadd.f32 0.0, %v2943
        %v2945 = vpop.f32.mrb[0].mxu0
        %2946 = vmatprep.mubr.bf16.mxu0 0
        %2947 = vmatmul.mubr.bf16.gmra.mrb[0].mxu0 %v2847
        %v2948 = vpop.f32.mrb[0].mxu0
        %v2949 = vadd.f32 0.0, %v2948
        %v2950 = vpop.f32.mrb[0].mxu0
        %v2951 = vpop.f32.mrb[0].mxu0
        %v2952 = vadd.f32 0.0, %v2951
        %v2953 = vpop.f32.mrb[0].mxu0
        %2954 = vmatprep.mubr.bf16.mxu0 0
        %2955 = vmatmul.mubr.bf16.gmra.mrb[0].mxu0 %v2850
        %v2956 = vpop.f32.mrb[0].mxu0
        %v2957 = vadd.f32 0.0, %v2956
        %v2958 = vpop.f32.mrb[0].mxu0
        %v2959 = vpop.f32.mrb[0].mxu0
        %v2960 = vadd.f32 0.0, %v2959
        %v2961 = vpop.f32.mrb[0].mxu0
        %2962 = vmatprep.mubr.bf16.mxu0 0
        %2963 = vmatmul.mubr.bf16.gmra.mrb[0].mxu0 %v2853
        %v2964 = vpop.f32.mrb[0].mxu0
        %v2965 = vadd.f32 0.0, %v2964
        %v2966 = vpop.f32.mrb[0].mxu0
        %v2967 = vpop.f32.mrb[0].mxu0
        %v2968 = vadd.f32 0.0, %v2967
        %v2969 = vpop.f32.mrb[0].mxu0
        %2970 = vdwg.mxu0
        %v2971 = vadd.f32 %v2503, %v2893
        %v2972 = vadd.f32 %v2504, %v2896
        %v2973 = vadd.f32 %v2505, %v2901
        %v2974 = vadd.f32 %v2506, %v2904
        %v2975 = vadd.f32 %v2507, %v2909
        %v2976 = vadd.f32 %v2508, %v2912
        %v2977 = vadd.f32 %v2509, %v2917
        %v2978 = vadd.f32 %v2510, %v2920
        %v2979 = vadd.f32 %v2511, %v2925
        %v2980 = vadd.f32 %v2512, %v2928
        %v2981 = vadd.f32 %v2513, %v2933
        %v2982 = vadd.f32 %v2514, %v2936
        %v2983 = vadd.f32 %v2515, %v2941
        %v2984 = vadd.f32 %v2516, %v2944
        %v2985 = vadd.f32 %v2517, %v2949
        %v2986 = vadd.f32 %v2518, %v2952
        %v2987 = vadd.f32 %v2519, %v2957
        %v2988 = vadd.f32 %v2520, %v2960
        %v2989 = vadd.f32 %v2521, %v2965
        %v2990 = vadd.f32 %v2522, %v2968
        %v2991 = vld [vmem:[%s2284] sm:$0xe]
        %v2992 = vld [vmem:[%s2284 + $0xc] sm:$0xe]
        %v2993 = vld [vmem:[%s2284 + $0x18] sm:$0xe]
        %v2994 = vld [vmem:[%s2284 + $0x24] sm:$0xe]
        %v2995 = vld [vmem:[%s2284 + $0x30] sm:$0xe]
        %v2996 = vld [vmem:[%s2284 + $0x3c] sm:$0xe]
        %v2997 = vld [vmem:[%s2284 + $0x48] sm:$0xe]
        %v2998 = vld [vmem:[%s2284 + $0x54] sm:$0xe]
        %v2999 = vld [vmem:[%s2284 + $0x60] sm:$0xe]
        %v3000 = vld [vmem:[%s2284 + $0x6c] sm:$0xe]
        %v3031 = vrot.slane %v2991, 5
        %v3032 = vrot.slane %v3031, 4
        %v3033 = vrot.slane %v2524, 5
        %v3034 = vsel %vm994, %v3032, %v3033
        %v3035 = vrot.slane %v3033, 4
        %v3036 = vrot.slane %v2525, 5
        %v3037 = vsel %vm994, %v3035, %v3036
        %v3038 = vrot.slane %v2992, 5
        %v3039 = vrot.slane %v3038, 4
        %v3040 = vrot.slane %v2527, 5
        %v3041 = vsel %vm994, %v3039, %v3040
        %v3042 = vrot.slane %v3040, 4
        %v3043 = vrot.slane %v2528, 5
        %v3044 = vsel %vm994, %v3042, %v3043
        %v3045 = vrot.slane %v2993, 5
        %v3046 = vrot.slane %v3045, 4
        %v3047 = vrot.slane %v2530, 5
        %v3048 = vsel %vm994, %v3046, %v3047
        %v3049 = vrot.slane %v3047, 4
        %v3050 = vrot.slane %v2531, 5
        %v3051 = vsel %vm994, %v3049, %v3050
        %v3052 = vrot.slane %v2994, 5
        %v3053 = vrot.slane %v3052, 4
        %v3054 = vrot.slane %v2533, 5
        %v3055 = vsel %vm994, %v3053, %v3054
        %v3056 = vrot.slane %v3054, 4
        %v3057 = vrot.slane %v2534, 5
        %v3058 = vsel %vm994, %v3056, %v3057
        %v3059 = vrot.slane %v2995, 5
        %v3060 = vrot.slane %v3059, 4
        %v3061 = vrot.slane %v2536, 5
        %v3062 = vsel %vm994, %v3060, %v3061
        %v3063 = vrot.slane %v3061, 4
        %v3064 = vrot.slane %v2537, 5
        %v3065 = vsel %vm994, %v3063, %v3064
        %v3066 = vrot.slane %v2996, 5
        %v3067 = vrot.slane %v3066, 4
        %v3068 = vrot.slane %v2539, 5
        %v3069 = vsel %vm994, %v3067, %v3068
        %v3070 = vrot.slane %v3068, 4
        %v3071 = vrot.slane %v2540, 5
        %v3072 = vsel %vm994, %v3070, %v3071
        %v3073 = vrot.slane %v2997, 5
        %v3074 = vrot.slane %v3073, 4
        %v3075 = vrot.slane %v2542, 5
        %v3076 = vsel %vm994, %v3074, %v3075
        %v3077 = vrot.slane %v3075, 4
        %v3078 = vrot.slane %v2543, 5
        %v3079 = vsel %vm994, %v3077, %v3078
        %v3080 = vrot.slane %v2998, 5
        %v3081 = vrot.slane %v3080, 4
        %v3082 = vrot.slane %v2545, 5
        %v3083 = vsel %vm994, %v3081, %v3082
        %v3084 = vrot.slane %v3082, 4
        %v3085 = vrot.slane %v2546, 5
        %v3086 = vsel %vm994, %v3084, %v3085
        %v3087 = vrot.slane %v2999, 5
        %v3088 = vrot.slane %v3087, 4
        %v3089 = vrot.slane %v2548, 5
        %v3090 = vsel %vm994, %v3088, %v3089
        %v3091 = vrot.slane %v3089, 4
        %v3092 = vrot.slane %v2549, 5
        %v3093 = vsel %vm994, %v3091, %v3092
        %v3094 = vrot.slane %v3000, 5
        %v3095 = vrot.slane %v3094, 4
        %v3096 = vrot.slane %v2551, 5
        %v3097 = vsel %vm994, %v3095, %v3096
        %v3098 = vrot.slane %v3096, 4
        %v3099 = vrot.slane %v2552, 5
        %v3100 = vsel %vm994, %v3098, %v3099
        %s3101 = scalar_lea.vmem %s1, 16
        %v3102 = vld [vmem:[%s3101] sm:$0x3]
        %v3103 = vunpack.c.l.b16 %v3034
        %v3104 = vunpack.c.l.b16 %v3037
        %v3105 = vunpack.c.l.b16 %v3041
        %v3106 = vunpack.c.l.b16 %v3044
        %v3107 = vunpack.c.l.b16 %v3048
        %v3108 = vunpack.c.l.b16 %v3051
        %v3109 = vunpack.c.l.b16 %v3055
        %v3110 = vunpack.c.l.b16 %v3058
        %v3111 = vunpack.c.l.b16 %v3062
        %v3112 = vunpack.c.l.b16 %v3065
        %v3113 = vunpack.c.l.b16 %v3069
        %v3114 = vunpack.c.l.b16 %v3072
        %v3115 = vunpack.c.l.b16 %v3076
        %v3116 = vunpack.c.l.b16 %v3079
        %v3117 = vunpack.c.l.b16 %v3083
        %v3118 = vunpack.c.l.b16 %v3086
        %v3119 = vunpack.c.l.b16 %v3090
        %v3120 = vunpack.c.l.b16 %v3093
        %v3121 = vunpack.c.l.b16 %v3097
        %v3122 = vunpack.c.l.b16 %v3100
        %v3123 = vpack.c.b16 %v3104, %v3103
        %v3124 = vpack.c.b16 %v3106, %v3105
        %v3125 = vpack.c.b16 %v3108, %v3107
        %v3126 = vpack.c.b16 %v3110, %v3109
        %v3127 = vpack.c.b16 %v3112, %v3111
        %v3128 = vpack.c.b16 %v3114, %v3113
        %v3129 = vpack.c.b16 %v3116, %v3115
        %v3130 = vpack.c.b16 %v3118, %v3117
        %v3131 = vpack.c.b16 %v3120, %v3119
        %v3132 = vpack.c.b16 %v3122, %v3121
        %v3134 = vsel %vm618, %v3123, 0
        %v3137 = vsel %vm618, %v3124, 0
        %v3140 = vsel %vm618, %v3125, 0
        %v3143 = vsel %vm618, %v3126, 0
        %v3146 = vsel %vm618, %v3127, 0
        %v3149 = vsel %vm618, %v3128, 0
        %v3152 = vsel %vm618, %v3129, 0
        %v3155 = vsel %vm618, %v3130, 0
        %v3158 = vsel %vm618, %v3131, 0
        %v3161 = vsel %vm618, %v3132, 0
        %v3164 = vsel %vm649, %v3102, 0
        %3166 = vmatprep.subr.bf16.mxu0 0
        %3167 = vmatpush1.bf16.msra.mxu0 %v3164
        %3168 = vmatprep.subr.bf16.mxu0 0
        %3169 = vmatpush1.bf16.msra.mxu0 0
        %3170 = vmatprep.subr.bf16.mxu0 0
        %3171 = vmatpush1.bf16.msra.mxu0 0
        %3172 = vmatprep.subr.bf16.mxu0 0
        %3173 = vmatpush1.bf16.msra.mxu0 0
        %3174 = vmatprep.subr.bf16.mxu0 0
        %3175 = vmatpush1.bf16.msra.mxu0 0
        %3176 = vmatprep.subr.bf16.mxu0 0
        %3177 = vmatpush1.bf16.msra.mxu0 0
        %3178 = vmatprep.subr.bf16.mxu0 0
        %3179 = vmatpush1.bf16.msra.mxu0 0
        %3180 = vmatprep.subr.bf16.mxu0 0
        %3181 = vmatpush1.bf16.msra.mxu0 0
        %3182 = vmatprep.subr.bf16.mxu0 0
        %3183 = vmatpush1.bf16.msra.mxu0 0
        %3184 = vmatprep.subr.bf16.mxu0 0
        %3185 = vmatpush1.bf16.msra.mxu0 0
        %3186 = vmatprep.subr.bf16.mxu0 0
        %3187 = vmatpush1.bf16.msra.mxu0 0
        %3188 = vmatprep.subr.bf16.mxu0 0
        %3189 = vmatpush1.bf16.msra.mxu0 0
        %3190 = vmatprep.subr.bf16.mxu0 0
        %3191 = vmatpush1.bf16.msra.mxu0 0
        %3192 = vmatprep.subr.bf16.mxu0 0
        %3193 = vmatpush1.bf16.msra.mxu0 0
        %3194 = vmatprep.subr.bf16.mxu0 0
        %3195 = vmatpush1.bf16.msra.mxu0 0
        %3196 = vmatprep.subr.bf16.mxu0 0
        %3197 = vmatpush1.bf16.msra.mxu0 0
        %3198 = vmatprep.mubr.bf16.mxu0 0
        %3199 = vmatmul.mubr.bf16.gmra.mrb[0].mxu0 %v3134
        %v3200 = vpop.f32.mrb[0].mxu0
        %v3201 = vadd.f32 0.0, %v3200
        %v3202 = vpop.f32.mrb[0].mxu0
        %v3203 = vpop.f32.mrb[0].mxu0
        %v3204 = vadd.f32 0.0, %v3203
        %v3205 = vpop.f32.mrb[0].mxu0
        %3206 = vmatprep.mubr.bf16.mxu0 0
        %3207 = vmatmul.mubr.bf16.gmra.mrb[0].mxu0 %v3137
        %v3208 = vpop.f32.mrb[0].mxu0
        %v3209 = vadd.f32 0.0, %v3208
        %v3210 = vpop.f32.mrb[0].mxu0
        %v3211 = vpop.f32.mrb[0].mxu0
        %v3212 = vadd.f32 0.0, %v3211
        %v3213 = vpop.f32.mrb[0].mxu0
        %3214 = vmatprep.mubr.bf16.mxu0 0
        %3215 = vmatmul.mubr.bf16.gmra.mrb[0].mxu0 %v3140
        %v3216 = vpop.f32.mrb[0].mxu0
        %v3217 = vadd.f32 0.0, %v3216
        %v3218 = vpop.f32.mrb[0].mxu0
        %v3219 = vpop.f32.mrb[0].mxu0
        %v3220 = vadd.f32 0.0, %v3219
        %v3221 = vpop.f32.mrb[0].mxu0
        %3222 = vmatprep.mubr.bf16.mxu0 0
        %3223 = vmatmul.mubr.bf16.gmra.mrb[0].mxu0 %v3143
        %v3224 = vpop.f32.mrb[0].mxu0
        %v3225 = vadd.f32 0.0, %v3224
        %v3226 = vpop.f32.mrb[0].mxu0
        %v3227 = vpop.f32.mrb[0].mxu0
        %v3228 = vadd.f32 0.0, %v3227
        %v3229 = vpop.f32.mrb[0].mxu0
        %3230 = vmatprep.mubr.bf16.mxu0 0
        %3231 = vmatmul.mubr.bf16.gmra.mrb[0].mxu0 %v3146
        %v3232 = vpop.f32.mrb[0].mxu0
        %v3233 = vadd.f32 0.0, %v3232
        %v3234 = vpop.f32.mrb[0].mxu0
        %v3235 = vpop.f32.mrb[0].mxu0
        %v3236 = vadd.f32 0.0, %v3235
        %v3237 = vpop.f32.mrb[0].mxu0
        %3238 = vmatprep.mubr.bf16.mxu0 0
        %3239 = vmatmul.mubr.bf16.gmra.mrb[0].mxu0 %v3149
        %v3240 = vpop.f32.mrb[0].mxu0
        %v3241 = vadd.f32 0.0, %v3240
        %v3242 = vpop.f32.mrb[0].mxu0
        %v3243 = vpop.f32.mrb[0].mxu0
        %v3244 = vadd.f32 0.0, %v3243
        %v3245 = vpop.f32.mrb[0].mxu0
        %3246 = vmatprep.mubr.bf16.mxu0 0
        %3247 = vmatmul.mubr.bf16.gmra.mrb[0].mxu0 %v3152
        %v3248 = vpop.f32.mrb[0].mxu0
        %v3249 = vadd.f32 0.0, %v3248
        %v3250 = vpop.f32.mrb[0].mxu0
        %v3251 = vpop.f32.mrb[0].mxu0
        %v3252 = vadd.f32 0.0, %v3251
        %v3253 = vpop.f32.mrb[0].mxu0
        %3254 = vmatprep.mubr.bf16.mxu0 0
        %3255 = vmatmul.mubr.bf16.gmra.mrb[0].mxu0 %v3155
        %v3256 = vpop.f32.mrb[0].mxu0
        %v3257 = vadd.f32 0.0, %v3256
        %v3258 = vpop.f32.mrb[0].mxu0
        %v3259 = vpop.f32.mrb[0].mxu0
        %v3260 = vadd.f32 0.0, %v3259
        %v3261 = vpop.f32.mrb[0].mxu0
        %3262 = vmatprep.mubr.bf16.mxu0 0
        %3263 = vmatmul.mubr.bf16.gmra.mrb[0].mxu0 %v3158
        %v3264 = vpop.f32.mrb[0].mxu0
        %v3265 = vadd.f32 0.0, %v3264
        %v3266 = vpop.f32.mrb[0].mxu0
        %v3267 = vpop.f32.mrb[0].mxu0
        %v3268 = vadd.f32 0.0, %v3267
        %v3269 = vpop.f32.mrb[0].mxu0
        %3270 = vmatprep.mubr.bf16.mxu0 0
        %3271 = vmatmul.mubr.bf16.gmra.mrb[0].mxu0 %v3161
        %v3272 = vpop.f32.mrb[0].mxu0
        %v3273 = vadd.f32 0.0, %v3272
        %v3274 = vpop.f32.mrb[0].mxu0
        %v3275 = vpop.f32.mrb[0].mxu0
        %v3276 = vadd.f32 0.0, %v3275
        %v3277 = vpop.f32.mrb[0].mxu0
        %3278 = vdwg.mxu0
        %v3279 = vadd.f32 %v2971, %v3201
        %v3280 = vadd.f32 %v2972, %v3204
        %v3281 = vadd.f32 %v2973, %v3209
        %v3282 = vadd.f32 %v2974, %v3212
        %v3283 = vadd.f32 %v2975, %v3217
        %v3284 = vadd.f32 %v2976, %v3220
        %v3285 = vadd.f32 %v2977, %v3225
        %v3286 = vadd.f32 %v2978, %v3228
        %v3287 = vadd.f32 %v2979, %v3233
        %v3288 = vadd.f32 %v2980, %v3236
        %v3289 = vadd.f32 %v2981, %v3241
        %v3290 = vadd.f32 %v2982, %v3244
        %v3291 = vadd.f32 %v2983, %v3249
        %v3292 = vadd.f32 %v2984, %v3252
        %v3293 = vadd.f32 %v2985, %v3257
        %v3294 = vadd.f32 %v2986, %v3260
        %v3295 = vadd.f32 %v2987, %v3265
        %v3296 = vadd.f32 %v2988, %v3268
        %v3297 = vadd.f32 %v2989, %v3273
        %v3298 = vadd.f32 %v2990, %v3276
        %v3299 = vld [vmem:[%s2] sm:$0x1]
        %v3301 = vlaneseq
        %v3302 = vshrl.u32 %v3301, 7
        %v3303 = vsub.s32 0, %v3302
        %v3304 = vrot.slane %v3299, %v3303
        %v3306 = vadd.f32 %v3279, %v3304
        %v3307 = vadd.f32 %v3280, %v3304
        %v3308 = vadd.f32 %v3281, %v3304
        %v3309 = vadd.f32 %v3282, %v3304
        %v3310 = vadd.f32 %v3283, %v3304
        %v3311 = vadd.f32 %v3284, %v3304
        %v3312 = vadd.f32 %v3285, %v3304
        %v3313 = vadd.f32 %v3286, %v3304
        %v3314 = vadd.f32 %v3287, %v3304
        %v3315 = vadd.f32 %v3288, %v3304
        %v3316 = vadd.f32 %v3289, %v3304
        %v3317 = vadd.f32 %v3290, %v3304
        %v3318 = vadd.f32 %v3291, %v3304
        %v3319 = vadd.f32 %v3292, %v3304
        %v3320 = vadd.f32 %v3293, %v3304
        %v3321 = vadd.f32 %v3294, %v3304
        %v3322 = vadd.f32 %v3295, %v3304
        %v3323 = vadd.f32 %v3296, %v3304
        %v3324 = vadd.f32 %v3297, %v3304
        %v3325 = vadd.f32 %v3298, %v3304
        %v3326 = vmul.f32 %v3306, 0.01
        %v3327 = vmul.f32 %v3307, 0.01
        %v3328 = vmul.f32 %v3308, 0.01
        %v3329 = vmul.f32 %v3309, 0.01
        %v3330 = vmul.f32 %v3310, 0.01
        %v3331 = vmul.f32 %v3311, 0.01
        %v3332 = vmul.f32 %v3312, 0.01
        %v3333 = vmul.f32 %v3313, 0.01
        %v3334 = vmul.f32 %v3314, 0.01
        %v3335 = vmul.f32 %v3315, 0.01
        %v3336 = vmul.f32 %v3316, 0.01
        %v3337 = vmul.f32 %v3317, 0.01
        %v3338 = vmul.f32 %v3318, 0.01
        %v3339 = vmul.f32 %v3319, 0.01
        %v3340 = vmul.f32 %v3320, 0.01
        %v3341 = vmul.f32 %v3321, 0.01
        %v3342 = vmul.f32 %v3322, 0.01
        %v3343 = vmul.f32 %v3323, 0.01
        %v3344 = vmul.f32 %v3324, 0.01
        %v3345 = vmul.f32 %v3325, 0.01
        %v3346 = vmax.f32 %v3306, %v3326
        %v3347 = vmax.f32 %v3307, %v3327
        %v3348 = vmax.f32 %v3308, %v3328
        %v3349 = vmax.f32 %v3309, %v3329
        %v3350 = vmax.f32 %v3310, %v3330
        %v3351 = vmax.f32 %v3311, %v3331
        %v3352 = vmax.f32 %v3312, %v3332
        %v3353 = vmax.f32 %v3313, %v3333
        %v3354 = vmax.f32 %v3314, %v3334
        %v3355 = vmax.f32 %v3315, %v3335
        %v3356 = vmax.f32 %v3316, %v3336
        %v3357 = vmax.f32 %v3317, %v3337
        %v3358 = vmax.f32 %v3318, %v3338
        %v3359 = vmax.f32 %v3319, %v3339
        %v3360 = vmax.f32 %v3320, %v3340
        %v3361 = vmax.f32 %v3321, %v3341
        %v3362 = vmax.f32 %v3322, %v3342
        %v3363 = vmax.f32 %v3323, %v3343
        %v3364 = vmax.f32 %v3324, %v3344
        %v3365 = vmax.f32 %v3325, %v3345
        %v3366 = vpack.c.bf16 %v3347, %v3346
        %v3367 = vpack.c.bf16 %v3349, %v3348
        %v3368 = vpack.c.bf16 %v3351, %v3350
        %v3369 = vpack.c.bf16 %v3353, %v3352
        %v3370 = vpack.c.bf16 %v3355, %v3354
        %v3371 = vpack.c.bf16 %v3357, %v3356
        %v3372 = vpack.c.bf16 %v3359, %v3358
        %v3373 = vpack.c.bf16 %v3361, %v3360
        %v3374 = vpack.c.bf16 %v3363, %v3362
        %v3375 = vpack.c.bf16 %v3365, %v3364
        %vm3376 = vcmask 1043459
        %vm3377 = vsmask.f32 7950
        %vm3378 = vmand %vm3376, %vm3377
        %v3379 = vld [vmem:[#allocation2] sm:$0x8]
        %v3380 = vsel %vm3378, 0, %v3379
        %3381 = vst [vmem:[#allocation2] sm:$0x8] %v3380
        %v3382 = vld [vmem:[#allocation2 + $0x10] sm:$0x8]
        %v3383 = vsel %vm3378, 0, %v3382
        %3384 = vst [vmem:[#allocation2 + $0x10] sm:$0x8] %v3383
        %v3385 = vld [vmem:[#allocation2 + $0x20] sm:$0x8]
        %v3386 = vsel %vm3378, 0, %v3385
        %3387 = vst [vmem:[#allocation2 + $0x20] sm:$0x8] %v3386
        %v3388 = vld [vmem:[#allocation2 + $0x30] sm:$0x8]
        %v3389 = vsel %vm3378, 0, %v3388
        %3390 = vst [vmem:[#allocation2 + $0x30] sm:$0x8] %v3389
        %v3391 = vld [vmem:[#allocation2 + $0x40] sm:$0x8]
        %v3392 = vsel %vm3378, 0, %v3391
        %3393 = vst [vmem:[#allocation2 + $0x40] sm:$0x8] %v3392
        %v3394 = vld [vmem:[#allocation2 + $0x50] sm:$0x8]
        %v3395 = vsel %vm3378, 0, %v3394
        %3396 = vst [vmem:[#allocation2 + $0x50] sm:$0x8] %v3395
        %v3397 = vld [vmem:[#allocation2 + $0x60] sm:$0x8]
        %v3398 = vsel %vm3378, 0, %v3397
        %3399 = vst [vmem:[#allocation2 + $0x60] sm:$0x8] %v3398
        %v3400 = vld [vmem:[#allocation2 + $0x70] sm:$0x8]
        %v3401 = vsel %vm3378, 0, %v3400
        %3402 = vst [vmem:[#allocation2 + $0x70] sm:$0x8] %v3401
        %v3403 = vld [vmem:[#allocation2 + $0x80] sm:$0x8]
        %v3404 = vsel %vm3378, 0, %v3403
        %3405 = vst [vmem:[#allocation2 + $0x80] sm:$0x8] %v3404
        %v3406 = vld [vmem:[#allocation2 + $0x90] sm:$0x8]
        %v3407 = vsel %vm3378, 0, %v3406
        %3408 = vst [vmem:[#allocation2 + $0x90] sm:$0x8] %v3407
        %vm3409 = vcmask 1044484
        %vm3410 = vsmask.f32 4352
        %vm3411 = vmand %vm3409, %vm3410
        %v3412 = vld [vmem:[#allocation2 + $0x8] sm:$0x10]
        %v3413 = vsel %vm3411, 0, %v3412
        %3414 = vst [vmem:[#allocation2 + $0x8] sm:$0x10] %v3413
        %v3415 = vld [vmem:[#allocation2 + $0x18] sm:$0x10]
        %v3416 = vsel %vm3411, 0, %v3415
        %3417 = vst [vmem:[#allocation2 + $0x18] sm:$0x10] %v3416
        %v3418 = vld [vmem:[#allocation2 + $0x28] sm:$0x10]
        %v3419 = vsel %vm3411, 0, %v3418
        %3420 = vst [vmem:[#allocation2 + $0x28] sm:$0x10] %v3419
        %v3421 = vld [vmem:[#allocation2 + $0x38] sm:$0x10]
        %v3422 = vsel %vm3411, 0, %v3421
        %3423 = vst [vmem:[#allocation2 + $0x38] sm:$0x10] %v3422
        %v3424 = vld [vmem:[#allocation2 + $0x48] sm:$0x10]
        %v3425 = vsel %vm3411, 0, %v3424
        %3426 = vst [vmem:[#allocation2 + $0x48] sm:$0x10] %v3425
        %v3427 = vld [vmem:[#allocation2 + $0x58] sm:$0x10]
        %v3428 = vsel %vm3411, 0, %v3427
        %3429 = vst [vmem:[#allocation2 + $0x58] sm:$0x10] %v3428
        %v3430 = vld [vmem:[#allocation2 + $0x68] sm:$0x10]
        %v3431 = vsel %vm3411, 0, %v3430
        %3432 = vst [vmem:[#allocation2 + $0x68] sm:$0x10] %v3431
        %v3433 = vld [vmem:[#allocation2 + $0x78] sm:$0x10]
        %v3434 = vsel %vm3411, 0, %v3433
        %3435 = vst [vmem:[#allocation2 + $0x78] sm:$0x10] %v3434
        %v3436 = vld [vmem:[#allocation2 + $0x88] sm:$0x10]
        %v3437 = vsel %vm3411, 0, %v3436
        %3438 = vst [vmem:[#allocation2 + $0x88] sm:$0x10] %v3437
        %v3439 = vld [vmem:[#allocation2 + $0x98] sm:$0x10]
        %v3440 = vsel %vm3411, 0, %v3439
        %3441 = vst [vmem:[#allocation2 + $0x98] sm:$0x10] %v3440
        %v3452 = vrot.slane %v3366, 4
        %v3453 = vrot.slane %v3367, 4
        %v3454 = vrot.slane %v3368, 4
        %v3455 = vrot.slane %v3369, 4
        %v3456 = vrot.slane %v3370, 4
        %v3457 = vrot.slane %v3371, 4
        %v3458 = vrot.slane %v3372, 4
        %v3459 = vrot.slane %v3373, 4
        %v3460 = vrot.slane %v3374, 4
        %v3461 = vrot.slane %v3375, 4
        %3472 = vst [vmem:[#allocation2] sm:$0xf0] %v3452
        %3473 = vst [vmem:[#allocation2 + $0x8] sm:$0xf] %v3452
        %3474 = vst [vmem:[#allocation2 + $0x10] sm:$0xf0] %v3453
        %3475 = vst [vmem:[#allocation2 + $0x18] sm:$0xf] %v3453
        %3476 = vst [vmem:[#allocation2 + $0x20] sm:$0xf0] %v3454
        %3477 = vst [vmem:[#allocation2 + $0x28] sm:$0xf] %v3454
        %3478 = vst [vmem:[#allocation2 + $0x30] sm:$0xf0] %v3455
        %3479 = vst [vmem:[#allocation2 + $0x38] sm:$0xf] %v3455
        %3480 = vst [vmem:[#allocation2 + $0x40] sm:$0xf0] %v3456
        %3481 = vst [vmem:[#allocation2 + $0x48] sm:$0xf] %v3456
        %3482 = vst [vmem:[#allocation2 + $0x50] sm:$0xf0] %v3457
        %3483 = vst [vmem:[#allocation2 + $0x58] sm:$0xf] %v3457
        %3484 = vst [vmem:[#allocation2 + $0x60] sm:$0xf0] %v3458
        %3485 = vst [vmem:[#allocation2 + $0x68] sm:$0xf] %v3458
        %3486 = vst [vmem:[#allocation2 + $0x70] sm:$0xf0] %v3459
        %3487 = vst [vmem:[#allocation2 + $0x78] sm:$0xf] %v3459
        %3488 = vst [vmem:[#allocation2 + $0x80] sm:$0xf0] %v3460
        %3489 = vst [vmem:[#allocation2 + $0x88] sm:$0xf] %v3460
        %3490 = vst [vmem:[#allocation2 + $0x90] sm:$0xf0] %v3461
        %3491 = vst [vmem:[#allocation2 + $0x98] sm:$0xf] %v3461
        %p3492 = scmp.eq.s32.totalorder %s27, 0
        // Predicated region
        $region53: #{tpu_custom_call.1} parent=47 // pred_check
          %p3493 = pneg %p3492
        $region54: #{tpu_custom_call.1} parent=47 // pred_check_branch
          %3495 = sbr.rel (%p3493) target = $region56
        $region55: #{tpu_custom_call.1} parent=47 // pred_region
          %3496 = vst [vmem:[#allocation2] sm:$0xff] 0
          %3497 = vst [vmem:[#allocation2 + $0x8] sm:$0xff] 0
        $region56: #{tpu_custom_call.1} parent=47 // pred_fallthru
          _
        %p3498 = scmp.eq.s32.totalorder %s27, 1
        // Predicated region
        $region57: #{tpu_custom_call.1} parent=47 // pred_check
          %p3499 = pneg %p3498
        $region58: #{tpu_custom_call.1} parent=47 // pred_check_branch
          %3501 = sbr.rel (%p3499) target = $region60
        $region59: #{tpu_custom_call.1} parent=47 // pred_region
          %s3502 = scalar_lea.vmem [#allocation2], 144
          %3503 = vst [vmem:[%s3502] sm:$0xff] 0
          %3504 = vst [vmem:[%s3502 + $0x8] sm:$0xff] 0
        $region60: #{tpu_custom_call.1} parent=47 // pred_fallthru
          _
        %v3505 = vld [vmem:[#allocation2] sm:$0xf8]
        %v3506 = vld [vmem:[#allocation2 + $0x8] sm:$0xf]
        %v3507 = vld [vmem:[#allocation2 + $0x10] sm:$0xf8]
        %v3508 = vld [vmem:[#allocation2 + $0x18] sm:$0xf]
        %v3509 = vld [vmem:[#allocation2 + $0x20] sm:$0xf8]
        %v3510 = vld [vmem:[#allocation2 + $0x28] sm:$0xf]
        %v3511 = vld [vmem:[#allocation2 + $0x30] sm:$0xf8]
        %v3512 = vld [vmem:[#allocation2 + $0x38] sm:$0xf]
        %v3513 = vld [vmem:[#allocation2 + $0x40] sm:$0xf8]
        %v3514 = vld [vmem:[#allocation2 + $0x48] sm:$0xf]
        %v3515 = vld [vmem:[#allocation2 + $0x50] sm:$0xf8]
        %v3516 = vld [vmem:[#allocation2 + $0x58] sm:$0xf]
        %v3517 = vld [vmem:[#allocation2 + $0x60] sm:$0xf8]
        %v3518 = vld [vmem:[#allocation2 + $0x68] sm:$0xf]
        %v3519 = vld [vmem:[#allocation2 + $0x70] sm:$0xf8]
        %v3520 = vld [vmem:[#allocation2 + $0x78] sm:$0xf]
        %v3522 = vshrl.u32 %v3505, 16
        %v3524 = vrot.slane %v3522, 3
        %v3525 = vshll.u32 %v3505, 16
        %v3527 = vrot.slane %v3525, 4
        %v3528 = vor.u32 %v3524, %v3527
        %v3530 = vshrl.u32 %v3506, 16
        %v3532 = vrot.slane %v3530, 3
        %v3533 = vshll.u32 %v3506, 16
        %v3535 = vrot.slane %v3533, 4
        %v3536 = vor.u32 %v3532, %v3535
        %v3537 = vsel %vm3410, %v3528, %v3536
        %v3539 = vshrl.u32 %v3507, 16
        %v3541 = vrot.slane %v3539, 3
        %v3542 = vshll.u32 %v3507, 16
        %v3544 = vrot.slane %v3542, 4
        %v3545 = vor.u32 %v3541, %v3544
        %v3547 = vshrl.u32 %v3508, 16
        %v3549 = vrot.slane %v3547, 3
        %v3550 = vshll.u32 %v3508, 16
        %v3552 = vrot.slane %v3550, 4
        %v3553 = vor.u32 %v3549, %v3552
        %v3554 = vsel %vm3410, %v3545, %v3553
        %v3556 = vshrl.u32 %v3509, 16
        %v3558 = vrot.slane %v3556, 3
        %v3559 = vshll.u32 %v3509, 16
        %v3561 = vrot.slane %v3559, 4
        %v3562 = vor.u32 %v3558, %v3561
        %v3564 = vshrl.u32 %v3510, 16
        %v3566 = vrot.slane %v3564, 3
        %v3567 = vshll.u32 %v3510, 16
        %v3569 = vrot.slane %v3567, 4
        %v3570 = vor.u32 %v3566, %v3569
        %v3571 = vsel %vm3410, %v3562, %v3570
        %v3573 = vshrl.u32 %v3511, 16
        %v3575 = vrot.slane %v3573, 3
        %v3576 = vshll.u32 %v3511, 16
        %v3578 = vrot.slane %v3576, 4
        %v3579 = vor.u32 %v3575, %v3578
        %v3581 = vshrl.u32 %v3512, 16
        %v3583 = vrot.slane %v3581, 3
        %v3584 = vshll.u32 %v3512, 16
        %v3586 = vrot.slane %v3584, 4
        %v3587 = vor.u32 %v3583, %v3586
        %v3588 = vsel %vm3410, %v3579, %v3587
        %v3590 = vshrl.u32 %v3513, 16
        %v3592 = vrot.slane %v3590, 3
        %v3593 = vshll.u32 %v3513, 16
        %v3595 = vrot.slane %v3593, 4
        %v3596 = vor.u32 %v3592, %v3595
        %v3598 = vshrl.u32 %v3514, 16
        %v3600 = vrot.slane %v3598, 3
        %v3601 = vshll.u32 %v3514, 16
        %v3603 = vrot.slane %v3601, 4
        %v3604 = vor.u32 %v3600, %v3603
        %v3605 = vsel %vm3410, %v3596, %v3604
        %v3607 = vshrl.u32 %v3515, 16
        %v3609 = vrot.slane %v3607, 3
        %v3610 = vshll.u32 %v3515, 16
        %v3612 = vrot.slane %v3610, 4
        %v3613 = vor.u32 %v3609, %v3612
        %v3615 = vshrl.u32 %v3516, 16
        %v3617 = vrot.slane %v3615, 3
        %v3618 = vshll.u32 %v3516, 16
        %v3620 = vrot.slane %v3618, 4
        %v3621 = vor.u32 %v3617, %v3620
        %v3622 = vsel %vm3410, %v3613, %v3621
        %v3624 = vshrl.u32 %v3517, 16
        %v3626 = vrot.slane %v3624, 3
        %v3627 = vshll.u32 %v3517, 16
        %v3629 = vrot.slane %v3627, 4
        %v3630 = vor.u32 %v3626, %v3629
        %v3632 = vshrl.u32 %v3518, 16
        %v3634 = vrot.slane %v3632, 3
        %v3635 = vshll.u32 %v3518, 16
        %v3637 = vrot.slane %v3635, 4
        %v3638 = vor.u32 %v3634, %v3637
        %v3639 = vsel %vm3410, %v3630, %v3638
        %v3641 = vshrl.u32 %v3519, 16
        %v3643 = vrot.slane %v3641, 3
        %v3644 = vshll.u32 %v3519, 16
        %v3646 = vrot.slane %v3644, 4
        %v3647 = vor.u32 %v3643, %v3646
        %v3649 = vshrl.u32 %v3520, 16
        %v3651 = vrot.slane %v3649, 3
        %v3652 = vshll.u32 %v3520, 16
        %v3654 = vrot.slane %v3652, 4
        %v3655 = vor.u32 %v3651, %v3654
        %v3656 = vsel %vm3410, %v3647, %v3655
        %v3665 = vld [vmem:[#allocation3] sm:$0xf]
        %v3666 = vld [vmem:[#allocation3 + $0x4] sm:$0xf]
        %v3667 = vld [vmem:[#allocation3 + $0x8] sm:$0xf]
        %v3668 = vld [vmem:[#allocation3 + $0xc] sm:$0xf]
        %v3669 = vld [vmem:[#allocation3 + $0x10] sm:$0xf]
        %v3670 = vld [vmem:[#allocation3 + $0x14] sm:$0xf]
        %v3671 = vld [vmem:[#allocation3 + $0x18] sm:$0xf]
        %v3672 = vld [vmem:[#allocation3 + $0x1c] sm:$0xf]
        %v3673 = vld [vmem:[#allocation3 + $0x20] sm:$0xf]
        %v3674 = vld [vmem:[#allocation3 + $0x24] sm:$0xf]
        %v3675 = vld [vmem:[#allocation3 + $0x28] sm:$0xf]
        %v3676 = vld [vmem:[#allocation3 + $0x2c] sm:$0xf]
        %v3677 = vld [vmem:[#allocation3 + $0x30] sm:$0xf]
        %v3678 = vld [vmem:[#allocation3 + $0x34] sm:$0xf]
        %v3679 = vld [vmem:[#allocation3 + $0x38] sm:$0xf]
        %v3680 = vld [vmem:[#allocation3 + $0x3c] sm:$0xf]
        %v3681 = vld [vmem:[#allocation2] sm:$0xf0]
        %v3682 = vld [vmem:[#allocation2 + $0x10] sm:$0xf0]
        %v3683 = vld [vmem:[#allocation2 + $0x20] sm:$0xf0]
        %v3684 = vld [vmem:[#allocation2 + $0x30] sm:$0xf0]
        %v3685 = vld [vmem:[#allocation2 + $0x40] sm:$0xf0]
        %v3686 = vld [vmem:[#allocation2 + $0x50] sm:$0xf0]
        %v3687 = vld [vmem:[#allocation2 + $0x60] sm:$0xf0]
        %v3688 = vld [vmem:[#allocation2 + $0x70] sm:$0xf0]
        %vm3705 = vcmask 1043456
        %v3706 = vrot.slane %v3681, 4
        %v3707 = vrot.slane %v3506, 4
        %v3708 = vsel %vm3705, %v3706, %v3707
        %v3709 = vrot.slane %v3682, 4
        %v3710 = vrot.slane %v3508, 4
        %v3711 = vsel %vm3705, %v3709, %v3710
        %v3712 = vrot.slane %v3683, 4
        %v3713 = vrot.slane %v3510, 4
        %v3714 = vsel %vm3705, %v3712, %v3713
        %v3715 = vrot.slane %v3684, 4
        %v3716 = vrot.slane %v3512, 4
        %v3717 = vsel %vm3705, %v3715, %v3716
        %v3718 = vrot.slane %v3685, 4
        %v3719 = vrot.slane %v3514, 4
        %v3720 = vsel %vm3705, %v3718, %v3719
        %v3721 = vrot.slane %v3686, 4
        %v3722 = vrot.slane %v3516, 4
        %v3723 = vsel %vm3705, %v3721, %v3722
        %v3724 = vrot.slane %v3687, 4
        %v3725 = vrot.slane %v3518, 4
        %v3726 = vsel %vm3705, %v3724, %v3725
        %v3727 = vrot.slane %v3688, 4
        %v3728 = vrot.slane %v3520, 4
        %v3729 = vsel %vm3705, %v3727, %v3728
        %s3738 = scalar_lea.vmem [#allocation3], 64
        %v3739 = vld [vmem:[%s3738] sm:$0xf]
        %v3740 = vld [vmem:[%s3738 + $0x4] sm:$0xf]
        %v3741 = vld [vmem:[%s3738 + $0x8] sm:$0xf]
        %v3742 = vld [vmem:[%s3738 + $0xc] sm:$0xf]
        %v3743 = vld [vmem:[%s3738 + $0x10] sm:$0xf]
        %v3744 = vld [vmem:[%s3738 + $0x14] sm:$0xf]
        %v3745 = vld [vmem:[%s3738 + $0x18] sm:$0xf]
        %v3746 = vld [vmem:[%s3738 + $0x1c] sm:$0xf]
        %v3747 = vld [vmem:[%s3738 + $0x20] sm:$0xf]
        %v3748 = vld [vmem:[%s3738 + $0x24] sm:$0xf]
        %v3749 = vld [vmem:[%s3738 + $0x28] sm:$0xf]
        %v3750 = vld [vmem:[%s3738 + $0x2c] sm:$0xf]
        %v3751 = vld [vmem:[%s3738 + $0x30] sm:$0xf]
        %v3752 = vld [vmem:[%s3738 + $0x34] sm:$0xf]
        %v3753 = vld [vmem:[%s3738 + $0x38] sm:$0xf]
        %v3754 = vld [vmem:[%s3738 + $0x3c] sm:$0xf]
        %v3771 = vunpack.c.l.b16 %v3739
        %v3772 = vunpack.c.l.b16 %v3740
        %v3773 = vunpack.c.l.b16 %v3741
        %v3774 = vunpack.c.l.b16 %v3742
        %v3775 = vunpack.c.l.b16 %v3743
        %v3776 = vunpack.c.l.b16 %v3744
        %v3777 = vunpack.c.l.b16 %v3745
        %v3778 = vunpack.c.l.b16 %v3746
        %v3779 = vunpack.c.l.b16 %v3747
        %v3780 = vunpack.c.l.b16 %v3748
        %v3781 = vunpack.c.l.b16 %v3749
        %v3782 = vunpack.c.l.b16 %v3750
        %v3783 = vunpack.c.l.b16 %v3751
        %v3784 = vunpack.c.l.b16 %v3752
        %v3785 = vunpack.c.l.b16 %v3753
        %v3786 = vunpack.c.l.b16 %v3754
        %v3787 = vpack.c.b16 %v3772, %v3771
        %v3788 = vpack.c.b16 %v3774, %v3773
        %v3789 = vpack.c.b16 %v3776, %v3775
        %v3790 = vpack.c.b16 %v3778, %v3777
        %v3791 = vpack.c.b16 %v3780, %v3779
        %v3792 = vpack.c.b16 %v3782, %v3781
        %v3793 = vpack.c.b16 %v3784, %v3783
        %v3794 = vpack.c.b16 %v3786, %v3785
        %3803 = vmatprep.subr.bf16.mxu0 0
        %3804 = vmatpush1.bf16.msra.mxu0 %v3787
        %3805 = vmatprep.subr.bf16.mxu0 0
        %3806 = vmatpush1.bf16.msra.mxu0 %v3788
        %3807 = vmatprep.subr.bf16.mxu0 0
        %3808 = vmatpush1.bf16.msra.mxu0 %v3789
        %3809 = vmatprep.subr.bf16.mxu0 0
        %3810 = vmatpush1.bf16.msra.mxu0 %v3790
        %3811 = vmatprep.subr.bf16.mxu0 0
        %3812 = vmatpush1.bf16.msra.mxu0 %v3791
        %3813 = vmatprep.subr.bf16.mxu0 0
        %3814 = vmatpush1.bf16.msra.mxu0 %v3792
        %3815 = vmatprep.subr.bf16.mxu0 0
        %3816 = vmatpush1.bf16.msra.mxu0 %v3793
        %3817 = vmatprep.subr.bf16.mxu0 0
        %3818 = vmatpush1.bf16.msra.mxu0 %v3794
        %3819 = vmatprep.subr.bf16.mxu0 0
        %3820 = vmatpush1.bf16.msra.mxu0 0
        %3821 = vmatprep.subr.bf16.mxu0 0
        %3822 = vmatpush1.bf16.msra.mxu0 0
        %3823 = vmatprep.subr.bf16.mxu0 0
        %3824 = vmatpush1.bf16.msra.mxu0 0
        %3825 = vmatprep.subr.bf16.mxu0 0
        %3826 = vmatpush1.bf16.msra.mxu0 0
        %3827 = vmatprep.subr.bf16.mxu0 0
        %3828 = vmatpush1.bf16.msra.mxu0 0
        %3829 = vmatprep.subr.bf16.mxu0 0
        %3830 = vmatpush1.bf16.msra.mxu0 0
        %3831 = vmatprep.subr.bf16.mxu0 0
        %3832 = vmatpush1.bf16.msra.mxu0 0
        %3833 = vmatprep.subr.bf16.mxu0 0
        %3834 = vmatpush1.bf16.msra.mxu0 0
        %3835 = vmatprep.mubr.bf16.mxu0 0
        %3836 = vmatmul.mubr.bf16.gmra.mrb[0].mxu0 %v3708
        %v3837 = vpop.f32.mrb[0].mxu0
        %v3838 = vadd.f32 0.0, %v3837
        %v3839 = vpop.f32.mrb[0].mxu0
        %v3840 = vpop.f32.mrb[0].mxu0
        %v3841 = vadd.f32 0.0, %v3840
        %v3842 = vpop.f32.mrb[0].mxu0
        %3843 = vmatprep.mubr.bf16.mxu0 0
        %3844 = vmatmul.mubr.bf16.gmra.mrb[0].mxu0 %v3711
        %v3845 = vpop.f32.mrb[0].mxu0
        %v3846 = vadd.f32 0.0, %v3845
        %v3847 = vpop.f32.mrb[0].mxu0
        %v3848 = vpop.f32.mrb[0].mxu0
        %v3849 = vadd.f32 0.0, %v3848
        %v3850 = vpop.f32.mrb[0].mxu0
        %3851 = vmatprep.mubr.bf16.mxu0 0
        %3852 = vmatmul.mubr.bf16.gmra.mrb[0].mxu0 %v3714
        %v3853 = vpop.f32.mrb[0].mxu0
        %v3854 = vadd.f32 0.0, %v3853
        %v3855 = vpop.f32.mrb[0].mxu0
        %v3856 = vpop.f32.mrb[0].mxu0
        %v3857 = vadd.f32 0.0, %v3856
        %v3858 = vpop.f32.mrb[0].mxu0
        %3859 = vmatprep.mubr.bf16.mxu0 0
        %3860 = vmatmul.mubr.bf16.gmra.mrb[0].mxu0 %v3717
        %v3861 = vpop.f32.mrb[0].mxu0
        %v3862 = vadd.f32 0.0, %v3861
        %v3863 = vpop.f32.mrb[0].mxu0
        %v3864 = vpop.f32.mrb[0].mxu0
        %v3865 = vadd.f32 0.0, %v3864
        %v3866 = vpop.f32.mrb[0].mxu0
        %3867 = vmatprep.mubr.bf16.mxu0 0
        %3868 = vmatmul.mubr.bf16.gmra.mrb[0].mxu0 %v3720
        %v3869 = vpop.f32.mrb[0].mxu0
        %v3870 = vadd.f32 0.0, %v3869
        %v3871 = vpop.f32.mrb[0].mxu0
        %v3872 = vpop.f32.mrb[0].mxu0
        %v3873 = vadd.f32 0.0, %v3872
        %v3874 = vpop.f32.mrb[0].mxu0
        %3875 = vmatprep.mubr.bf16.mxu0 0
        %3876 = vmatmul.mubr.bf16.gmra.mrb[0].mxu0 %v3723
        %v3877 = vpop.f32.mrb[0].mxu0
        %v3878 = vadd.f32 0.0, %v3877
        %v3879 = vpop.f32.mrb[0].mxu0
        %v3880 = vpop.f32.mrb[0].mxu0
        %v3881 = vadd.f32 0.0, %v3880
        %v3882 = vpop.f32.mrb[0].mxu0
        %3883 = vmatprep.mubr.bf16.mxu0 0
        %3884 = vmatmul.mubr.bf16.gmra.mrb[0].mxu0 %v3726
        %v3885 = vpop.f32.mrb[0].mxu0
        %v3886 = vadd.f32 0.0, %v3885
        %v3887 = vpop.f32.mrb[0].mxu0
        %v3888 = vpop.f32.mrb[0].mxu0
        %v3889 = vadd.f32 0.0, %v3888
        %v3890 = vpop.f32.mrb[0].mxu0
        %3891 = vmatprep.mubr.bf16.mxu0 0
        %3892 = vmatmul.mubr.bf16.gmra.mrb[0].mxu0 %v3729
        %v3893 = vpop.f32.mrb[0].mxu0
        %v3894 = vadd.f32 0.0, %v3893
        %v3895 = vpop.f32.mrb[0].mxu0
        %v3896 = vpop.f32.mrb[0].mxu0
        %v3897 = vadd.f32 0.0, %v3896
        %v3898 = vpop.f32.mrb[0].mxu0
        %3899 = vdwg.mxu0
        %v3916 = vunpack.c.l.b16 %v3665
        %v3917 = vunpack.c.l.b16 %v3666
        %v3918 = vunpack.c.l.b16 %v3667
        %v3919 = vunpack.c.l.b16 %v3668
        %v3920 = vunpack.c.l.b16 %v3669
        %v3921 = vunpack.c.l.b16 %v3670
        %v3922 = vunpack.c.l.b16 %v3671
        %v3923 = vunpack.c.l.b16 %v3672
        %v3924 = vunpack.c.l.b16 %v3673
        %v3925 = vunpack.c.l.b16 %v3674
        %v3926 = vunpack.c.l.b16 %v3675
        %v3927 = vunpack.c.l.b16 %v3676
        %v3928 = vunpack.c.l.b16 %v3677
        %v3929 = vunpack.c.l.b16 %v3678
        %v3930 = vunpack.c.l.b16 %v3679
        %v3931 = vunpack.c.l.b16 %v3680
        %v3932 = vpack.c.b16 %v3917, %v3916
        %v3933 = vpack.c.b16 %v3919, %v3918
        %v3934 = vpack.c.b16 %v3921, %v3920
        %v3935 = vpack.c.b16 %v3923, %v3922
        %v3936 = vpack.c.b16 %v3925, %v3924
        %v3937 = vpack.c.b16 %v3927, %v3926
        %v3938 = vpack.c.b16 %v3929, %v3928
        %v3939 = vpack.c.b16 %v3931, %v3930
        %3948 = vmatprep.subr.bf16.mxu0 0
        %3949 = vmatpush1.bf16.msra.mxu0 %v3932
        %3950 = vmatprep.subr.bf16.mxu0 0
        %3951 = vmatpush1.bf16.msra.mxu0 %v3933
        %3952 = vmatprep.subr.bf16.mxu0 0
        %3953 = vmatpush1.bf16.msra.mxu0 %v3934
        %3954 = vmatprep.subr.bf16.mxu0 0
        %3955 = vmatpush1.bf16.msra.mxu0 %v3935
        %3956 = vmatprep.subr.bf16.mxu0 0
        %3957 = vmatpush1.bf16.msra.mxu0 %v3936
        %3958 = vmatprep.subr.bf16.mxu0 0
        %3959 = vmatpush1.bf16.msra.mxu0 %v3937
        %3960 = vmatprep.subr.bf16.mxu0 0
        %3961 = vmatpush1.bf16.msra.mxu0 %v3938
        %3962 = vmatprep.subr.bf16.mxu0 0
        %3963 = vmatpush1.bf16.msra.mxu0 %v3939
        %3964 = vmatprep.subr.bf16.mxu0 0
        %3965 = vmatpush1.bf16.msra.mxu0 0
        %3966 = vmatprep.subr.bf16.mxu0 0
        %3967 = vmatpush1.bf16.msra.mxu0 0
        %3968 = vmatprep.subr.bf16.mxu0 0
        %3969 = vmatpush1.bf16.msra.mxu0 0
        %3970 = vmatprep.subr.bf16.mxu0 0
        %3971 = vmatpush1.bf16.msra.mxu0 0
        %3972 = vmatprep.subr.bf16.mxu0 0
        %3973 = vmatpush1.bf16.msra.mxu0 0
        %3974 = vmatprep.subr.bf16.mxu0 0
        %3975 = vmatpush1.bf16.msra.mxu0 0
        %3976 = vmatprep.subr.bf16.mxu0 0
        %3977 = vmatpush1.bf16.msra.mxu0 0
        %3978 = vmatprep.subr.bf16.mxu0 0
        %3979 = vmatpush1.bf16.msra.mxu0 0
        %3980 = vmatprep.mubr.bf16.mxu0 0
        %3981 = vmatmul.mubr.bf16.gmra.mrb[0].mxu0 %v3537
        %v3982 = vpop.f32.mrb[0].mxu0
        %v3983 = vadd.f32 %v3838, %v3982
        %v3984 = vpop.f32.mrb[0].mxu0
        %v3985 = vpop.f32.mrb[0].mxu0
        %v3986 = vadd.f32 %v3841, %v3985
        %v3987 = vpop.f32.mrb[0].mxu0
        %3988 = vmatprep.mubr.bf16.mxu0 0
        %3989 = vmatmul.mubr.bf16.gmra.mrb[0].mxu0 %v3554
        %v3990 = vpop.f32.mrb[0].mxu0
        %v3991 = vadd.f32 %v3846, %v3990
        %v3992 = vpop.f32.mrb[0].mxu0
        %v3993 = vpop.f32.mrb[0].mxu0
        %v3994 = vadd.f32 %v3849, %v3993
        %v3995 = vpop.f32.mrb[0].mxu0
        %3996 = vmatprep.mubr.bf16.mxu0 0
        %3997 = vmatmul.mubr.bf16.gmra.mrb[0].mxu0 %v3571
        %v3998 = vpop.f32.mrb[0].mxu0
        %v3999 = vadd.f32 %v3854, %v3998
        %v4000 = vpop.f32.mrb[0].mxu0
        %v4001 = vpop.f32.mrb[0].mxu0
        %v4002 = vadd.f32 %v3857, %v4001
        %v4003 = vpop.f32.mrb[0].mxu0
        %4004 = vmatprep.mubr.bf16.mxu0 0
        %4005 = vmatmul.mubr.bf16.gmra.mrb[0].mxu0 %v3588
        %v4006 = vpop.f32.mrb[0].mxu0
        %v4007 = vadd.f32 %v3862, %v4006
        %v4008 = vpop.f32.mrb[0].mxu0
        %v4009 = vpop.f32.mrb[0].mxu0
        %v4010 = vadd.f32 %v3865, %v4009
        %v4011 = vpop.f32.mrb[0].mxu0
        %4012 = vmatprep.mubr.bf16.mxu0 0
        %4013 = vmatmul.mubr.bf16.gmra.mrb[0].mxu0 %v3605
        %v4014 = vpop.f32.mrb[0].mxu0
        %v4015 = vadd.f32 %v3870, %v4014
        %v4016 = vpop.f32.mrb[0].mxu0
        %v4017 = vpop.f32.mrb[0].mxu0
        %v4018 = vadd.f32 %v3873, %v4017
        %v4019 = vpop.f32.mrb[0].mxu0
        %4020 = vmatprep.mubr.bf16.mxu0 0
        %4021 = vmatmul.mubr.bf16.gmra.mrb[0].mxu0 %v3622
        %v4022 = vpop.f32.mrb[0].mxu0
        %v4023 = vadd.f32 %v3878, %v4022
        %v4024 = vpop.f32.mrb[0].mxu0
        %v4025 = vpop.f32.mrb[0].mxu0
        %v4026 = vadd.f32 %v3881, %v4025
        %v4027 = vpop.f32.mrb[0].mxu0
        %4028 = vmatprep.mubr.bf16.mxu0 0
        %4029 = vmatmul.mubr.bf16.gmra.mrb[0].mxu0 %v3639
        %v4030 = vpop.f32.mrb[0].mxu0
        %v4031 = vadd.f32 %v3886, %v4030
        %v4032 = vpop.f32.mrb[0].mxu0
        %v4033 = vpop.f32.mrb[0].mxu0
        %v4034 = vadd.f32 %v3889, %v4033
        %v4035 = vpop.f32.mrb[0].mxu0
        %4036 = vmatprep.mubr.bf16.mxu0 0
        %4037 = vmatmul.mubr.bf16.gmra.mrb[0].mxu0 %v3656
        %v4038 = vpop.f32.mrb[0].mxu0
        %v4039 = vadd.f32 %v3894, %v4038
        %v4040 = vpop.f32.mrb[0].mxu0
        %v4041 = vpop.f32.mrb[0].mxu0
        %v4042 = vadd.f32 %v3897, %v4041
        %v4043 = vpop.f32.mrb[0].mxu0
        %4044 = vdwg.mxu0
        %v4045 = vld [vmem:[#allocation2 + $0x8] sm:$0x1f]
        %v4046 = vld [vmem:[#allocation2 + $0x18] sm:$0x1f]
        %v4047 = vld [vmem:[#allocation2 + $0x28] sm:$0x1f]
        %v4048 = vld [vmem:[#allocation2 + $0x38] sm:$0x1f]
        %v4049 = vld [vmem:[#allocation2 + $0x48] sm:$0x1f]
        %v4050 = vld [vmem:[#allocation2 + $0x58] sm:$0x1f]
        %v4051 = vld [vmem:[#allocation2 + $0x68] sm:$0x1f]
        %v4052 = vld [vmem:[#allocation2 + $0x78] sm:$0x1f]
        %v4054 = vshrl.u32 %v3681, 16
        %v4056 = vrot.slane %v4054, 4
        %v4057 = vshll.u32 %v3681, 16
        %v4059 = vrot.slane %v4057, 5
        %v4060 = vor.u32 %v4056, %v4059
        %v4062 = vshrl.u32 %v4045, 16
        %v4064 = vrot.slane %v4062, 4
        %v4065 = vshll.u32 %v4045, 16
        %v4067 = vrot.slane %v4065, 5
        %v4068 = vor.u32 %v4064, %v4067
        %v4069 = vsel %vm343, %v4060, %v4068
        %v4071 = vshrl.u32 %v3682, 16
        %v4073 = vrot.slane %v4071, 4
        %v4074 = vshll.u32 %v3682, 16
        %v4076 = vrot.slane %v4074, 5
        %v4077 = vor.u32 %v4073, %v4076
        %v4079 = vshrl.u32 %v4046, 16
        %v4081 = vrot.slane %v4079, 4
        %v4082 = vshll.u32 %v4046, 16
        %v4084 = vrot.slane %v4082, 5
        %v4085 = vor.u32 %v4081, %v4084
        %v4086 = vsel %vm343, %v4077, %v4085
        %v4088 = vshrl.u32 %v3683, 16
        %v4090 = vrot.slane %v4088, 4
        %v4091 = vshll.u32 %v3683, 16
        %v4093 = vrot.slane %v4091, 5
        %v4094 = vor.u32 %v4090, %v4093
        %v4096 = vshrl.u32 %v4047, 16
        %v4098 = vrot.slane %v4096, 4
        %v4099 = vshll.u32 %v4047, 16
        %v4101 = vrot.slane %v4099, 5
        %v4102 = vor.u32 %v4098, %v4101
        %v4103 = vsel %vm343, %v4094, %v4102
        %v4105 = vshrl.u32 %v3684, 16
        %v4107 = vrot.slane %v4105, 4
        %v4108 = vshll.u32 %v3684, 16
        %v4110 = vrot.slane %v4108, 5
        %v4111 = vor.u32 %v4107, %v4110
        %v4113 = vshrl.u32 %v4048, 16
        %v4115 = vrot.slane %v4113, 4
        %v4116 = vshll.u32 %v4048, 16
        %v4118 = vrot.slane %v4116, 5
        %v4119 = vor.u32 %v4115, %v4118
        %v4120 = vsel %vm343, %v4111, %v4119
        %v4122 = vshrl.u32 %v3685, 16
        %v4124 = vrot.slane %v4122, 4
        %v4125 = vshll.u32 %v3685, 16
        %v4127 = vrot.slane %v4125, 5
        %v4128 = vor.u32 %v4124, %v4127
        %v4130 = vshrl.u32 %v4049, 16
        %v4132 = vrot.slane %v4130, 4
        %v4133 = vshll.u32 %v4049, 16
        %v4135 = vrot.slane %v4133, 5
        %v4136 = vor.u32 %v4132, %v4135
        %v4137 = vsel %vm343, %v4128, %v4136
        %v4139 = vshrl.u32 %v3686, 16
        %v4141 = vrot.slane %v4139, 4
        %v4142 = vshll.u32 %v3686, 16
        %v4144 = vrot.slane %v4142, 5
        %v4145 = vor.u32 %v4141, %v4144
        %v4147 = vshrl.u32 %v4050, 16
        %v4149 = vrot.slane %v4147, 4
        %v4150 = vshll.u32 %v4050, 16
        %v4152 = vrot.slane %v4150, 5
        %v4153 = vor.u32 %v4149, %v4152
        %v4154 = vsel %vm343, %v4145, %v4153
        %v4156 = vshrl.u32 %v3687, 16
        %v4158 = vrot.slane %v4156, 4
        %v4159 = vshll.u32 %v3687, 16
        %v4161 = vrot.slane %v4159, 5
        %v4162 = vor.u32 %v4158, %v4161
        %v4164 = vshrl.u32 %v4051, 16
        %v4166 = vrot.slane %v4164, 4
        %v4167 = vshll.u32 %v4051, 16
        %v4169 = vrot.slane %v4167, 5
        %v4170 = vor.u32 %v4166, %v4169
        %v4171 = vsel %vm343, %v4162, %v4170
        %v4173 = vshrl.u32 %v3688, 16
        %v4175 = vrot.slane %v4173, 4
        %v4176 = vshll.u32 %v3688, 16
        %v4178 = vrot.slane %v4176, 5
        %v4179 = vor.u32 %v4175, %v4178
        %v4181 = vshrl.u32 %v4052, 16
        %v4183 = vrot.slane %v4181, 4
        %v4184 = vshll.u32 %v4052, 16
        %v4186 = vrot.slane %v4184, 5
        %v4187 = vor.u32 %v4183, %v4186
        %v4188 = vsel %vm343, %v4179, %v4187
        %s4197 = scalar_lea.vmem [#allocation3], 128
        %v4198 = vld [vmem:[%s4197] sm:$0xf]
        %v4199 = vld [vmem:[%s4197 + $0x4] sm:$0xf]
        %v4200 = vld [vmem:[%s4197 + $0x8] sm:$0xf]
        %v4201 = vld [vmem:[%s4197 + $0xc] sm:$0xf]
        %v4202 = vld [vmem:[%s4197 + $0x10] sm:$0xf]
        %v4203 = vld [vmem:[%s4197 + $0x14] sm:$0xf]
        %v4204 = vld [vmem:[%s4197 + $0x18] sm:$0xf]
        %v4205 = vld [vmem:[%s4197 + $0x1c] sm:$0xf]
        %v4206 = vld [vmem:[%s4197 + $0x20] sm:$0xf]
        %v4207 = vld [vmem:[%s4197 + $0x24] sm:$0xf]
        %v4208 = vld [vmem:[%s4197 + $0x28] sm:$0xf]
        %v4209 = vld [vmem:[%s4197 + $0x2c] sm:$0xf]
        %v4210 = vld [vmem:[%s4197 + $0x30] sm:$0xf]
        %v4211 = vld [vmem:[%s4197 + $0x34] sm:$0xf]
        %v4212 = vld [vmem:[%s4197 + $0x38] sm:$0xf]
        %v4213 = vld [vmem:[%s4197 + $0x3c] sm:$0xf]
        %v4230 = vunpack.c.l.b16 %v4198
        %v4231 = vunpack.c.l.b16 %v4199
        %v4232 = vunpack.c.l.b16 %v4200
        %v4233 = vunpack.c.l.b16 %v4201
        %v4234 = vunpack.c.l.b16 %v4202
        %v4235 = vunpack.c.l.b16 %v4203
        %v4236 = vunpack.c.l.b16 %v4204
        %v4237 = vunpack.c.l.b16 %v4205
        %v4238 = vunpack.c.l.b16 %v4206
        %v4239 = vunpack.c.l.b16 %v4207
        %v4240 = vunpack.c.l.b16 %v4208
        %v4241 = vunpack.c.l.b16 %v4209
        %v4242 = vunpack.c.l.b16 %v4210
        %v4243 = vunpack.c.l.b16 %v4211
        %v4244 = vunpack.c.l.b16 %v4212
        %v4245 = vunpack.c.l.b16 %v4213
        %v4246 = vpack.c.b16 %v4231, %v4230
        %v4247 = vpack.c.b16 %v4233, %v4232
        %v4248 = vpack.c.b16 %v4235, %v4234
        %v4249 = vpack.c.b16 %v4237, %v4236
        %v4250 = vpack.c.b16 %v4239, %v4238
        %v4251 = vpack.c.b16 %v4241, %v4240
        %v4252 = vpack.c.b16 %v4243, %v4242
        %v4253 = vpack.c.b16 %v4245, %v4244
        %4262 = vmatprep.subr.bf16.mxu0 0
        %4263 = vmatpush1.bf16.msra.mxu0 %v4246
        %4264 = vmatprep.subr.bf16.mxu0 0
        %4265 = vmatpush1.bf16.msra.mxu0 %v4247
        %4266 = vmatprep.subr.bf16.mxu0 0
        %4267 = vmatpush1.bf16.msra.mxu0 %v4248
        %4268 = vmatprep.subr.bf16.mxu0 0
        %4269 = vmatpush1.bf16.msra.mxu0 %v4249
        %4270 = vmatprep.subr.bf16.mxu0 0
        %4271 = vmatpush1.bf16.msra.mxu0 %v4250
        %4272 = vmatprep.subr.bf16.mxu0 0
        %4273 = vmatpush1.bf16.msra.mxu0 %v4251
        %4274 = vmatprep.subr.bf16.mxu0 0
        %4275 = vmatpush1.bf16.msra.mxu0 %v4252
        %4276 = vmatprep.subr.bf16.mxu0 0
        %4277 = vmatpush1.bf16.msra.mxu0 %v4253
        %4278 = vmatprep.subr.bf16.mxu0 0
        %4279 = vmatpush1.bf16.msra.mxu0 0
        %4280 = vmatprep.subr.bf16.mxu0 0
        %4281 = vmatpush1.bf16.msra.mxu0 0
        %4282 = vmatprep.subr.bf16.mxu0 0
        %4283 = vmatpush1.bf16.msra.mxu0 0
        %4284 = vmatprep.subr.bf16.mxu0 0
        %4285 = vmatpush1.bf16.msra.mxu0 0
        %4286 = vmatprep.subr.bf16.mxu0 0
        %4287 = vmatpush1.bf16.msra.mxu0 0
        %4288 = vmatprep.subr.bf16.mxu0 0
        %4289 = vmatpush1.bf16.msra.mxu0 0
        %4290 = vmatprep.subr.bf16.mxu0 0
        %4291 = vmatpush1.bf16.msra.mxu0 0
        %4292 = vmatprep.subr.bf16.mxu0 0
        %4293 = vmatpush1.bf16.msra.mxu0 0
        %4294 = vmatprep.mubr.bf16.mxu0 0
        %4295 = vmatmul.mubr.bf16.gmra.mrb[0].mxu0 %v4069
        %v4296 = vpop.f32.mrb[0].mxu0
        %v4297 = vadd.f32 0.0, %v4296
        %v4298 = vpop.f32.mrb[0].mxu0
        %v4299 = vpop.f32.mrb[0].mxu0
        %v4300 = vadd.f32 0.0, %v4299
        %v4301 = vpop.f32.mrb[0].mxu0
        %4302 = vmatprep.mubr.bf16.mxu0 0
        %4303 = vmatmul.mubr.bf16.gmra.mrb[0].mxu0 %v4086
        %v4304 = vpop.f32.mrb[0].mxu0
        %v4305 = vadd.f32 0.0, %v4304
        %v4306 = vpop.f32.mrb[0].mxu0
        %v4307 = vpop.f32.mrb[0].mxu0
        %v4308 = vadd.f32 0.0, %v4307
        %v4309 = vpop.f32.mrb[0].mxu0
        %4310 = vmatprep.mubr.bf16.mxu0 0
        %4311 = vmatmul.mubr.bf16.gmra.mrb[0].mxu0 %v4103
        %v4312 = vpop.f32.mrb[0].mxu0
        %v4313 = vadd.f32 0.0, %v4312
        %v4314 = vpop.f32.mrb[0].mxu0
        %v4315 = vpop.f32.mrb[0].mxu0
        %v4316 = vadd.f32 0.0, %v4315
        %v4317 = vpop.f32.mrb[0].mxu0
        %4318 = vmatprep.mubr.bf16.mxu0 0
        %4319 = vmatmul.mubr.bf16.gmra.mrb[0].mxu0 %v4120
        %v4320 = vpop.f32.mrb[0].mxu0
        %v4321 = vadd.f32 0.0, %v4320
        %v4322 = vpop.f32.mrb[0].mxu0
        %v4323 = vpop.f32.mrb[0].mxu0
        %v4324 = vadd.f32 0.0, %v4323
        %v4325 = vpop.f32.mrb[0].mxu0
        %4326 = vmatprep.mubr.bf16.mxu0 0
        %4327 = vmatmul.mubr.bf16.gmra.mrb[0].mxu0 %v4137
        %v4328 = vpop.f32.mrb[0].mxu0
        %v4329 = vadd.f32 0.0, %v4328
        %v4330 = vpop.f32.mrb[0].mxu0
        %v4331 = vpop.f32.mrb[0].mxu0
        %v4332 = vadd.f32 0.0, %v4331
        %v4333 = vpop.f32.mrb[0].mxu0
        %4334 = vmatprep.mubr.bf16.mxu0 0
        %4335 = vmatmul.mubr.bf16.gmra.mrb[0].mxu0 %v4154
        %v4336 = vpop.f32.mrb[0].mxu0
        %v4337 = vadd.f32 0.0, %v4336
        %v4338 = vpop.f32.mrb[0].mxu0
        %v4339 = vpop.f32.mrb[0].mxu0
        %v4340 = vadd.f32 0.0, %v4339
        %v4341 = vpop.f32.mrb[0].mxu0
        %4342 = vmatprep.mubr.bf16.mxu0 0
        %4343 = vmatmul.mubr.bf16.gmra.mrb[0].mxu0 %v4171
        %v4344 = vpop.f32.mrb[0].mxu0
        %v4345 = vadd.f32 0.0, %v4344
        %v4346 = vpop.f32.mrb[0].mxu0
        %v4347 = vpop.f32.mrb[0].mxu0
        %v4348 = vadd.f32 0.0, %v4347
        %v4349 = vpop.f32.mrb[0].mxu0
        %4350 = vmatprep.mubr.bf16.mxu0 0
        %4351 = vmatmul.mubr.bf16.gmra.mrb[0].mxu0 %v4188
        %v4352 = vpop.f32.mrb[0].mxu0
        %v4353 = vadd.f32 0.0, %v4352
        %v4354 = vpop.f32.mrb[0].mxu0
        %v4355 = vpop.f32.mrb[0].mxu0
        %v4356 = vadd.f32 0.0, %v4355
        %v4357 = vpop.f32.mrb[0].mxu0
        %4358 = vdwg.mxu0
        %v4359 = vadd.f32 %v3983, %v4297
        %v4360 = vadd.f32 %v3986, %v4300
        %v4361 = vadd.f32 %v3991, %v4305
        %v4362 = vadd.f32 %v3994, %v4308
        %v4363 = vadd.f32 %v3999, %v4313
        %v4364 = vadd.f32 %v4002, %v4316
        %v4365 = vadd.f32 %v4007, %v4321
        %v4366 = vadd.f32 %v4010, %v4324
        %v4367 = vadd.f32 %v4015, %v4329
        %v4368 = vadd.f32 %v4018, %v4332
        %v4369 = vadd.f32 %v4023, %v4337
        %v4370 = vadd.f32 %v4026, %v4340
        %v4371 = vadd.f32 %v4031, %v4345
        %v4372 = vadd.f32 %v4034, %v4348
        %v4373 = vadd.f32 %v4039, %v4353
        %v4374 = vadd.f32 %v4042, %v4356
        %s4375 = scalar_lea.vmem [#allocation2], 16
        %v4376 = vld [vmem:[%s4375] sm:$0xf8]
        %v4377 = vld [vmem:[%s4375 + $0x8] sm:$0xf]
        %v4378 = vld [vmem:[%s4375 + $0x10] sm:$0xf8]
        %v4379 = vld [vmem:[%s4375 + $0x18] sm:$0xf]
        %v4380 = vld [vmem:[%s4375 + $0x20] sm:$0xf8]
        %v4381 = vld [vmem:[%s4375 + $0x28] sm:$0xf]
        %v4382 = vld [vmem:[%s4375 + $0x30] sm:$0xf8]
        %v4383 = vld [vmem:[%s4375 + $0x38] sm:$0xf]
        %v4384 = vld [vmem:[%s4375 + $0x40] sm:$0xf8]
        %v4385 = vld [vmem:[%s4375 + $0x48] sm:$0xf]
        %v4386 = vld [vmem:[%s4375 + $0x50] sm:$0xf8]
        %v4387 = vld [vmem:[%s4375 + $0x58] sm:$0xf]
        %v4388 = vld [vmem:[%s4375 + $0x60] sm:$0xf8]
        %v4389 = vld [vmem:[%s4375 + $0x68] sm:$0xf]
        %v4390 = vld [vmem:[%s4375 + $0x70] sm:$0xf8]
        %v4391 = vld [vmem:[%s4375 + $0x78] sm:$0xf]
        %v4393 = vshrl.u32 %v4376, 16
        %v4395 = vrot.slane %v4393, 3
        %v4396 = vshll.u32 %v4376, 16
        %v4398 = vrot.slane %v4396, 4
        %v4399 = vor.u32 %v4395, %v4398
        %v4401 = vshrl.u32 %v4377, 16
        %v4403 = vrot.slane %v4401, 3
        %v4404 = vshll.u32 %v4377, 16
        %v4406 = vrot.slane %v4404, 4
        %v4407 = vor.u32 %v4403, %v4406
        %v4408 = vsel %vm3410, %v4399, %v4407
        %v4410 = vshrl.u32 %v4378, 16
        %v4412 = vrot.slane %v4410, 3
        %v4413 = vshll.u32 %v4378, 16
        %v4415 = vrot.slane %v4413, 4
        %v4416 = vor.u32 %v4412, %v4415
        %v4418 = vshrl.u32 %v4379, 16
        %v4420 = vrot.slane %v4418, 3
        %v4421 = vshll.u32 %v4379, 16
        %v4423 = vrot.slane %v4421, 4
        %v4424 = vor.u32 %v4420, %v4423
        %v4425 = vsel %vm3410, %v4416, %v4424
        %v4427 = vshrl.u32 %v4380, 16
        %v4429 = vrot.slane %v4427, 3
        %v4430 = vshll.u32 %v4380, 16
        %v4432 = vrot.slane %v4430, 4
        %v4433 = vor.u32 %v4429, %v4432
        %v4435 = vshrl.u32 %v4381, 16
        %v4437 = vrot.slane %v4435, 3
        %v4438 = vshll.u32 %v4381, 16
        %v4440 = vrot.slane %v4438, 4
        %v4441 = vor.u32 %v4437, %v4440
        %v4442 = vsel %vm3410, %v4433, %v4441
        %v4444 = vshrl.u32 %v4382, 16
        %v4446 = vrot.slane %v4444, 3
        %v4447 = vshll.u32 %v4382, 16
        %v4449 = vrot.slane %v4447, 4
        %v4450 = vor.u32 %v4446, %v4449
        %v4452 = vshrl.u32 %v4383, 16
        %v4454 = vrot.slane %v4452, 3
        %v4455 = vshll.u32 %v4383, 16
        %v4457 = vrot.slane %v4455, 4
        %v4458 = vor.u32 %v4454, %v4457
        %v4459 = vsel %vm3410, %v4450, %v4458
        %v4461 = vshrl.u32 %v4384, 16
        %v4463 = vrot.slane %v4461, 3
        %v4464 = vshll.u32 %v4384, 16
        %v4466 = vrot.slane %v4464, 4
        %v4467 = vor.u32 %v4463, %v4466
        %v4469 = vshrl.u32 %v4385, 16
        %v4471 = vrot.slane %v4469, 3
        %v4472 = vshll.u32 %v4385, 16
        %v4474 = vrot.slane %v4472, 4
        %v4475 = vor.u32 %v4471, %v4474
        %v4476 = vsel %vm3410, %v4467, %v4475
        %v4478 = vshrl.u32 %v4386, 16
        %v4480 = vrot.slane %v4478, 3
        %v4481 = vshll.u32 %v4386, 16
        %v4483 = vrot.slane %v4481, 4
        %v4484 = vor.u32 %v4480, %v4483
        %v4486 = vshrl.u32 %v4387, 16
        %v4488 = vrot.slane %v4486, 3
        %v4489 = vshll.u32 %v4387, 16
        %v4491 = vrot.slane %v4489, 4
        %v4492 = vor.u32 %v4488, %v4491
        %v4493 = vsel %vm3410, %v4484, %v4492
        %v4495 = vshrl.u32 %v4388, 16
        %v4497 = vrot.slane %v4495, 3
        %v4498 = vshll.u32 %v4388, 16
        %v4500 = vrot.slane %v4498, 4
        %v4501 = vor.u32 %v4497, %v4500
        %v4503 = vshrl.u32 %v4389, 16
        %v4505 = vrot.slane %v4503, 3
        %v4506 = vshll.u32 %v4389, 16
        %v4508 = vrot.slane %v4506, 4
        %v4509 = vor.u32 %v4505, %v4508
        %v4510 = vsel %vm3410, %v4501, %v4509
        %v4512 = vshrl.u32 %v4390, 16
        %v4514 = vrot.slane %v4512, 3
        %v4515 = vshll.u32 %v4390, 16
        %v4517 = vrot.slane %v4515, 4
        %v4518 = vor.u32 %v4514, %v4517
        %v4520 = vshrl.u32 %v4391, 16
        %v4522 = vrot.slane %v4520, 3
        %v4523 = vshll.u32 %v4391, 16
        %v4525 = vrot.slane %v4523, 4
        %v4526 = vor.u32 %v4522, %v4525
        %v4527 = vsel %vm3410, %v4518, %v4526
        %s4536 = scalar_lea.vmem [#allocation3], 192
        %v4537 = vld [vmem:[%s4536] sm:$0xf]
        %v4538 = vld [vmem:[%s4536 + $0x4] sm:$0xf]
        %v4539 = vld [vmem:[%s4536 + $0x8] sm:$0xf]
        %v4540 = vld [vmem:[%s4536 + $0xc] sm:$0xf]
        %v4541 = vld [vmem:[%s4536 + $0x10] sm:$0xf]
        %v4542 = vld [vmem:[%s4536 + $0x14] sm:$0xf]
        %v4543 = vld [vmem:[%s4536 + $0x18] sm:$0xf]
        %v4544 = vld [vmem:[%s4536 + $0x1c] sm:$0xf]
        %v4545 = vld [vmem:[%s4536 + $0x20] sm:$0xf]
        %v4546 = vld [vmem:[%s4536 + $0x24] sm:$0xf]
        %v4547 = vld [vmem:[%s4536 + $0x28] sm:$0xf]
        %v4548 = vld [vmem:[%s4536 + $0x2c] sm:$0xf]
        %v4549 = vld [vmem:[%s4536 + $0x30] sm:$0xf]
        %v4550 = vld [vmem:[%s4536 + $0x34] sm:$0xf]
        %v4551 = vld [vmem:[%s4536 + $0x38] sm:$0xf]
        %v4552 = vld [vmem:[%s4536 + $0x3c] sm:$0xf]
        %v4569 = vunpack.c.l.b16 %v4537
        %v4570 = vunpack.c.l.b16 %v4538
        %v4571 = vunpack.c.l.b16 %v4539
        %v4572 = vunpack.c.l.b16 %v4540
        %v4573 = vunpack.c.l.b16 %v4541
        %v4574 = vunpack.c.l.b16 %v4542
        %v4575 = vunpack.c.l.b16 %v4543
        %v4576 = vunpack.c.l.b16 %v4544
        %v4577 = vunpack.c.l.b16 %v4545
        %v4578 = vunpack.c.l.b16 %v4546
        %v4579 = vunpack.c.l.b16 %v4547
        %v4580 = vunpack.c.l.b16 %v4548
        %v4581 = vunpack.c.l.b16 %v4549
        %v4582 = vunpack.c.l.b16 %v4550
        %v4583 = vunpack.c.l.b16 %v4551
        %v4584 = vunpack.c.l.b16 %v4552
        %v4585 = vpack.c.b16 %v4570, %v4569
        %v4586 = vpack.c.b16 %v4572, %v4571
        %v4587 = vpack.c.b16 %v4574, %v4573
        %v4588 = vpack.c.b16 %v4576, %v4575
        %v4589 = vpack.c.b16 %v4578, %v4577
        %v4590 = vpack.c.b16 %v4580, %v4579
        %v4591 = vpack.c.b16 %v4582, %v4581
        %v4592 = vpack.c.b16 %v4584, %v4583
        %4601 = vmatprep.subr.bf16.mxu0 0
        %4602 = vmatpush1.bf16.msra.mxu0 %v4585
        %4603 = vmatprep.subr.bf16.mxu0 0
        %4604 = vmatpush1.bf16.msra.mxu0 %v4586
        %4605 = vmatprep.subr.bf16.mxu0 0
        %4606 = vmatpush1.bf16.msra.mxu0 %v4587
        %4607 = vmatprep.subr.bf16.mxu0 0
        %4608 = vmatpush1.bf16.msra.mxu0 %v4588
        %4609 = vmatprep.subr.bf16.mxu0 0
        %4610 = vmatpush1.bf16.msra.mxu0 %v4589
        %4611 = vmatprep.subr.bf16.mxu0 0
        %4612 = vmatpush1.bf16.msra.mxu0 %v4590
        %4613 = vmatprep.subr.bf16.mxu0 0
        %4614 = vmatpush1.bf16.msra.mxu0 %v4591
        %4615 = vmatprep.subr.bf16.mxu0 0
        %4616 = vmatpush1.bf16.msra.mxu0 %v4592
        %4617 = vmatprep.subr.bf16.mxu0 0
        %4618 = vmatpush1.bf16.msra.mxu0 0
        %4619 = vmatprep.subr.bf16.mxu0 0
        %4620 = vmatpush1.bf16.msra.mxu0 0
        %4621 = vmatprep.subr.bf16.mxu0 0
        %4622 = vmatpush1.bf16.msra.mxu0 0
        %4623 = vmatprep.subr.bf16.mxu0 0
        %4624 = vmatpush1.bf16.msra.mxu0 0
        %4625 = vmatprep.subr.bf16.mxu0 0
        %4626 = vmatpush1.bf16.msra.mxu0 0
        %4627 = vmatprep.subr.bf16.mxu0 0
        %4628 = vmatpush1.bf16.msra.mxu0 0
        %4629 = vmatprep.subr.bf16.mxu0 0
        %4630 = vmatpush1.bf16.msra.mxu0 0
        %4631 = vmatprep.subr.bf16.mxu0 0
        %4632 = vmatpush1.bf16.msra.mxu0 0
        %4633 = vmatprep.mubr.bf16.mxu0 0
        %4634 = vmatmul.mubr.bf16.gmra.mrb[0].mxu0 %v4408
        %v4635 = vpop.f32.mrb[0].mxu0
        %v4636 = vadd.f32 0.0, %v4635
        %v4637 = vpop.f32.mrb[0].mxu0
        %v4638 = vpop.f32.mrb[0].mxu0
        %v4639 = vadd.f32 0.0, %v4638
        %v4640 = vpop.f32.mrb[0].mxu0
        %4641 = vmatprep.mubr.bf16.mxu0 0
        %4642 = vmatmul.mubr.bf16.gmra.mrb[0].mxu0 %v4425
        %v4643 = vpop.f32.mrb[0].mxu0
        %v4644 = vadd.f32 0.0, %v4643
        %v4645 = vpop.f32.mrb[0].mxu0
        %v4646 = vpop.f32.mrb[0].mxu0
        %v4647 = vadd.f32 0.0, %v4646
        %v4648 = vpop.f32.mrb[0].mxu0
        %4649 = vmatprep.mubr.bf16.mxu0 0
        %4650 = vmatmul.mubr.bf16.gmra.mrb[0].mxu0 %v4442
        %v4651 = vpop.f32.mrb[0].mxu0
        %v4652 = vadd.f32 0.0, %v4651
        %v4653 = vpop.f32.mrb[0].mxu0
        %v4654 = vpop.f32.mrb[0].mxu0
        %v4655 = vadd.f32 0.0, %v4654
        %v4656 = vpop.f32.mrb[0].mxu0
        %4657 = vmatprep.mubr.bf16.mxu0 0
        %4658 = vmatmul.mubr.bf16.gmra.mrb[0].mxu0 %v4459
        %v4659 = vpop.f32.mrb[0].mxu0
        %v4660 = vadd.f32 0.0, %v4659
        %v4661 = vpop.f32.mrb[0].mxu0
        %v4662 = vpop.f32.mrb[0].mxu0
        %v4663 = vadd.f32 0.0, %v4662
        %v4664 = vpop.f32.mrb[0].mxu0
        %4665 = vmatprep.mubr.bf16.mxu0 0
        %4666 = vmatmul.mubr.bf16.gmra.mrb[0].mxu0 %v4476
        %v4667 = vpop.f32.mrb[0].mxu0
        %v4668 = vadd.f32 0.0, %v4667
        %v4669 = vpop.f32.mrb[0].mxu0
        %v4670 = vpop.f32.mrb[0].mxu0
        %v4671 = vadd.f32 0.0, %v4670
        %v4672 = vpop.f32.mrb[0].mxu0
        %4673 = vmatprep.mubr.bf16.mxu0 0
        %4674 = vmatmul.mubr.bf16.gmra.mrb[0].mxu0 %v4493
        %v4675 = vpop.f32.mrb[0].mxu0
        %v4676 = vadd.f32 0.0, %v4675
        %v4677 = vpop.f32.mrb[0].mxu0
        %v4678 = vpop.f32.mrb[0].mxu0
        %v4679 = vadd.f32 0.0, %v4678
        %v4680 = vpop.f32.mrb[0].mxu0
        %4681 = vmatprep.mubr.bf16.mxu0 0
        %4682 = vmatmul.mubr.bf16.gmra.mrb[0].mxu0 %v4510
        %v4683 = vpop.f32.mrb[0].mxu0
        %v4684 = vadd.f32 0.0, %v4683
        %v4685 = vpop.f32.mrb[0].mxu0
        %v4686 = vpop.f32.mrb[0].mxu0
        %v4687 = vadd.f32 0.0, %v4686
        %v4688 = vpop.f32.mrb[0].mxu0
        %4689 = vmatprep.mubr.bf16.mxu0 0
        %4690 = vmatmul.mubr.bf16.gmra.mrb[0].mxu0 %v4527
        %v4691 = vpop.f32.mrb[0].mxu0
        %v4692 = vadd.f32 0.0, %v4691
        %v4693 = vpop.f32.mrb[0].mxu0
        %v4694 = vpop.f32.mrb[0].mxu0
        %v4695 = vadd.f32 0.0, %v4694
        %v4696 = vpop.f32.mrb[0].mxu0
        %4697 = vdwg.mxu0
        %v4698 = vadd.f32 %v4359, %v4636
        %v4699 = vadd.f32 %v4360, %v4639
        %v4700 = vadd.f32 %v4361, %v4644
        %v4701 = vadd.f32 %v4362, %v4647
        %v4702 = vadd.f32 %v4363, %v4652
        %v4703 = vadd.f32 %v4364, %v4655
        %v4704 = vadd.f32 %v4365, %v4660
        %v4705 = vadd.f32 %v4366, %v4663
        %v4706 = vadd.f32 %v4367, %v4668
        %v4707 = vadd.f32 %v4368, %v4671
        %v4708 = vadd.f32 %v4369, %v4676
        %v4709 = vadd.f32 %v4370, %v4679
        %v4710 = vadd.f32 %v4371, %v4684
        %v4711 = vadd.f32 %v4372, %v4687
        %v4712 = vadd.f32 %v4373, %v4692
        %v4713 = vadd.f32 %v4374, %v4695
        %v4714 = vld [vmem:[%s4375] sm:$0xf0]
        %v4715 = vld [vmem:[%s4375 + $0x10] sm:$0xf0]
        %v4716 = vld [vmem:[%s4375 + $0x20] sm:$0xf0]
        %v4717 = vld [vmem:[%s4375 + $0x30] sm:$0xf0]
        %v4718 = vld [vmem:[%s4375 + $0x40] sm:$0xf0]
        %v4719 = vld [vmem:[%s4375 + $0x50] sm:$0xf0]
        %v4720 = vld [vmem:[%s4375 + $0x60] sm:$0xf0]
        %v4721 = vld [vmem:[%s4375 + $0x70] sm:$0xf0]
        %v4738 = vrot.slane %v4714, 4
        %v4739 = vrot.slane %v4377, 4
        %v4740 = vsel %vm3705, %v4738, %v4739
        %v4741 = vrot.slane %v4715, 4
        %v4742 = vrot.slane %v4379, 4
        %v4743 = vsel %vm3705, %v4741, %v4742
        %v4744 = vrot.slane %v4716, 4
        %v4745 = vrot.slane %v4381, 4
        %v4746 = vsel %vm3705, %v4744, %v4745
        %v4747 = vrot.slane %v4717, 4
        %v4748 = vrot.slane %v4383, 4
        %v4749 = vsel %vm3705, %v4747, %v4748
        %v4750 = vrot.slane %v4718, 4
        %v4751 = vrot.slane %v4385, 4
        %v4752 = vsel %vm3705, %v4750, %v4751
        %v4753 = vrot.slane %v4719, 4
        %v4754 = vrot.slane %v4387, 4
        %v4755 = vsel %vm3705, %v4753, %v4754
        %v4756 = vrot.slane %v4720, 4
        %v4757 = vrot.slane %v4389, 4
        %v4758 = vsel %vm3705, %v4756, %v4757
        %v4759 = vrot.slane %v4721, 4
        %v4760 = vrot.slane %v4391, 4
        %v4761 = vsel %vm3705, %v4759, %v4760
        %s4770 = scalar_lea.vmem [#allocation3], 256
        %v4771 = vld [vmem:[%s4770] sm:$0xf]
        %v4772 = vld [vmem:[%s4770 + $0x4] sm:$0xf]
        %v4773 = vld [vmem:[%s4770 + $0x8] sm:$0xf]
        %v4774 = vld [vmem:[%s4770 + $0xc] sm:$0xf]
        %v4775 = vld [vmem:[%s4770 + $0x10] sm:$0xf]
        %v4776 = vld [vmem:[%s4770 + $0x14] sm:$0xf]
        %v4777 = vld [vmem:[%s4770 + $0x18] sm:$0xf]
        %v4778 = vld [vmem:[%s4770 + $0x1c] sm:$0xf]
        %v4779 = vld [vmem:[%s4770 + $0x20] sm:$0xf]
        %v4780 = vld [vmem:[%s4770 + $0x24] sm:$0xf]
        %v4781 = vld [vmem:[%s4770 + $0x28] sm:$0xf]
        %v4782 = vld [vmem:[%s4770 + $0x2c] sm:$0xf]
        %v4783 = vld [vmem:[%s4770 + $0x30] sm:$0xf]
        %v4784 = vld [vmem:[%s4770 + $0x34] sm:$0xf]
        %v4785 = vld [vmem:[%s4770 + $0x38] sm:$0xf]
        %v4786 = vld [vmem:[%s4770 + $0x3c] sm:$0xf]
        %v4803 = vunpack.c.l.b16 %v4771
        %v4804 = vunpack.c.l.b16 %v4772
        %v4805 = vunpack.c.l.b16 %v4773
        %v4806 = vunpack.c.l.b16 %v4774
        %v4807 = vunpack.c.l.b16 %v4775
        %v4808 = vunpack.c.l.b16 %v4776
        %v4809 = vunpack.c.l.b16 %v4777
        %v4810 = vunpack.c.l.b16 %v4778
        %v4811 = vunpack.c.l.b16 %v4779
        %v4812 = vunpack.c.l.b16 %v4780
        %v4813 = vunpack.c.l.b16 %v4781
        %v4814 = vunpack.c.l.b16 %v4782
        %v4815 = vunpack.c.l.b16 %v4783
        %v4816 = vunpack.c.l.b16 %v4784
        %v4817 = vunpack.c.l.b16 %v4785
        %v4818 = vunpack.c.l.b16 %v4786
        %v4819 = vpack.c.b16 %v4804, %v4803
        %v4820 = vpack.c.b16 %v4806, %v4805
        %v4821 = vpack.c.b16 %v4808, %v4807
        %v4822 = vpack.c.b16 %v4810, %v4809
        %v4823 = vpack.c.b16 %v4812, %v4811
        %v4824 = vpack.c.b16 %v4814, %v4813
        %v4825 = vpack.c.b16 %v4816, %v4815
        %v4826 = vpack.c.b16 %v4818, %v4817
        %4835 = vmatprep.subr.bf16.mxu0 0
        %4836 = vmatpush1.bf16.msra.mxu0 %v4819
        %4837 = vmatprep.subr.bf16.mxu0 0
        %4838 = vmatpush1.bf16.msra.mxu0 %v4820
        %4839 = vmatprep.subr.bf16.mxu0 0
        %4840 = vmatpush1.bf16.msra.mxu0 %v4821
        %4841 = vmatprep.subr.bf16.mxu0 0
        %4842 = vmatpush1.bf16.msra.mxu0 %v4822
        %4843 = vmatprep.subr.bf16.mxu0 0
        %4844 = vmatpush1.bf16.msra.mxu0 %v4823
        %4845 = vmatprep.subr.bf16.mxu0 0
        %4846 = vmatpush1.bf16.msra.mxu0 %v4824
        %4847 = vmatprep.subr.bf16.mxu0 0
        %4848 = vmatpush1.bf16.msra.mxu0 %v4825
        %4849 = vmatprep.subr.bf16.mxu0 0
        %4850 = vmatpush1.bf16.msra.mxu0 %v4826
        %4851 = vmatprep.subr.bf16.mxu0 0
        %4852 = vmatpush1.bf16.msra.mxu0 0
        %4853 = vmatprep.subr.bf16.mxu0 0
        %4854 = vmatpush1.bf16.msra.mxu0 0
        %4855 = vmatprep.subr.bf16.mxu0 0
        %4856 = vmatpush1.bf16.msra.mxu0 0
        %4857 = vmatprep.subr.bf16.mxu0 0
        %4858 = vmatpush1.bf16.msra.mxu0 0
        %4859 = vmatprep.subr.bf16.mxu0 0
        %4860 = vmatpush1.bf16.msra.mxu0 0
        %4861 = vmatprep.subr.bf16.mxu0 0
        %4862 = vmatpush1.bf16.msra.mxu0 0
        %4863 = vmatprep.subr.bf16.mxu0 0
        %4864 = vmatpush1.bf16.msra.mxu0 0
        %4865 = vmatprep.subr.bf16.mxu0 0
        %4866 = vmatpush1.bf16.msra.mxu0 0
        %4867 = vmatprep.mubr.bf16.mxu0 0
        %4868 = vmatmul.mubr.bf16.gmra.mrb[0].mxu0 %v4740
        %v4869 = vpop.f32.mrb[0].mxu0
        %v4870 = vadd.f32 0.0, %v4869
        %v4871 = vpop.f32.mrb[0].mxu0
        %v4872 = vpop.f32.mrb[0].mxu0
        %v4873 = vadd.f32 0.0, %v4872
        %v4874 = vpop.f32.mrb[0].mxu0
        %4875 = vmatprep.mubr.bf16.mxu0 0
        %4876 = vmatmul.mubr.bf16.gmra.mrb[0].mxu0 %v4743
        %v4877 = vpop.f32.mrb[0].mxu0
        %v4878 = vadd.f32 0.0, %v4877
        %v4879 = vpop.f32.mrb[0].mxu0
        %v4880 = vpop.f32.mrb[0].mxu0
        %v4881 = vadd.f32 0.0, %v4880
        %v4882 = vpop.f32.mrb[0].mxu0
        %4883 = vmatprep.mubr.bf16.mxu0 0
        %4884 = vmatmul.mubr.bf16.gmra.mrb[0].mxu0 %v4746
        %v4885 = vpop.f32.mrb[0].mxu0
        %v4886 = vadd.f32 0.0, %v4885
        %v4887 = vpop.f32.mrb[0].mxu0
        %v4888 = vpop.f32.mrb[0].mxu0
        %v4889 = vadd.f32 0.0, %v4888
        %v4890 = vpop.f32.mrb[0].mxu0
        %4891 = vmatprep.mubr.bf16.mxu0 0
        %4892 = vmatmul.mubr.bf16.gmra.mrb[0].mxu0 %v4749
        %v4893 = vpop.f32.mrb[0].mxu0
        %v4894 = vadd.f32 0.0, %v4893
        %v4895 = vpop.f32.mrb[0].mxu0
        %v4896 = vpop.f32.mrb[0].mxu0
        %v4897 = vadd.f32 0.0, %v4896
        %v4898 = vpop.f32.mrb[0].mxu0
        %4899 = vmatprep.mubr.bf16.mxu0 0
        %4900 = vmatmul.mubr.bf16.gmra.mrb[0].mxu0 %v4752
        %v4901 = vpop.f32.mrb[0].mxu0
        %v4902 = vadd.f32 0.0, %v4901
        %v4903 = vpop.f32.mrb[0].mxu0
        %v4904 = vpop.f32.mrb[0].mxu0
        %v4905 = vadd.f32 0.0, %v4904
        %v4906 = vpop.f32.mrb[0].mxu0
        %4907 = vmatprep.mubr.bf16.mxu0 0
        %4908 = vmatmul.mubr.bf16.gmra.mrb[0].mxu0 %v4755
        %v4909 = vpop.f32.mrb[0].mxu0
        %v4910 = vadd.f32 0.0, %v4909
        %v4911 = vpop.f32.mrb[0].mxu0
        %v4912 = vpop.f32.mrb[0].mxu0
        %v4913 = vadd.f32 0.0, %v4912
        %v4914 = vpop.f32.mrb[0].mxu0
        %4915 = vmatprep.mubr.bf16.mxu0 0
        %4916 = vmatmul.mubr.bf16.gmra.mrb[0].mxu0 %v4758
        %v4917 = vpop.f32.mrb[0].mxu0
        %v4918 = vadd.f32 0.0, %v4917
        %v4919 = vpop.f32.mrb[0].mxu0
        %v4920 = vpop.f32.mrb[0].mxu0
        %v4921 = vadd.f32 0.0, %v4920
        %v4922 = vpop.f32.mrb[0].mxu0
        %4923 = vmatprep.mubr.bf16.mxu0 0
        %4924 = vmatmul.mubr.bf16.gmra.mrb[0].mxu0 %v4761
        %v4925 = vpop.f32.mrb[0].mxu0
        %v4926 = vadd.f32 0.0, %v4925
        %v4927 = vpop.f32.mrb[0].mxu0
        %v4928 = vpop.f32.mrb[0].mxu0
        %v4929 = vadd.f32 0.0, %v4928
        %v4930 = vpop.f32.mrb[0].mxu0
        %4931 = vdwg.mxu0
        %v4932 = vadd.f32 %v4698, %v4870
        %v4933 = vadd.f32 %v4699, %v4873
        %v4934 = vadd.f32 %v4700, %v4878
        %v4935 = vadd.f32 %v4701, %v4881
        %v4936 = vadd.f32 %v4702, %v4886
        %v4937 = vadd.f32 %v4703, %v4889
        %v4938 = vadd.f32 %v4704, %v4894
        %v4939 = vadd.f32 %v4705, %v4897
        %v4940 = vadd.f32 %v4706, %v4902
        %v4941 = vadd.f32 %v4707, %v4905
        %v4942 = vadd.f32 %v4708, %v4910
        %v4943 = vadd.f32 %v4709, %v4913
        %v4944 = vadd.f32 %v4710, %v4918
        %v4945 = vadd.f32 %v4711, %v4921
        %v4946 = vadd.f32 %v4712, %v4926
        %v4947 = vadd.f32 %v4713, %v4929
        %v4948 = vld [vmem:[%s4375 + $0x8] sm:$0x1f]
        %v4949 = vld [vmem:[%s4375 + $0x18] sm:$0x1f]
        %v4950 = vld [vmem:[%s4375 + $0x28] sm:$0x1f]
        %v4951 = vld [vmem:[%s4375 + $0x38] sm:$0x1f]
        %v4952 = vld [vmem:[%s4375 + $0x48] sm:$0x1f]
        %v4953 = vld [vmem:[%s4375 + $0x58] sm:$0x1f]
        %v4954 = vld [vmem:[%s4375 + $0x68] sm:$0x1f]
        %v4955 = vld [vmem:[%s4375 + $0x78] sm:$0x1f]
        %v4957 = vshrl.u32 %v4714, 16
        %v4959 = vrot.slane %v4957, 4
        %v4960 = vshll.u32 %v4714, 16
        %v4962 = vrot.slane %v4960, 5
        %v4963 = vor.u32 %v4959, %v4962
        %v4965 = vshrl.u32 %v4948, 16
        %v4967 = vrot.slane %v4965, 4
        %v4968 = vshll.u32 %v4948, 16
        %v4970 = vrot.slane %v4968, 5
        %v4971 = vor.u32 %v4967, %v4970
        %v4972 = vsel %vm343, %v4963, %v4971
        %v4974 = vshrl.u32 %v4715, 16
        %v4976 = vrot.slane %v4974, 4
        %v4977 = vshll.u32 %v4715, 16
        %v4979 = vrot.slane %v4977, 5
        %v4980 = vor.u32 %v4976, %v4979
        %v4982 = vshrl.u32 %v4949, 16
        %v4984 = vrot.slane %v4982, 4
        %v4985 = vshll.u32 %v4949, 16
        %v4987 = vrot.slane %v4985, 5
        %v4988 = vor.u32 %v4984, %v4987
        %v4989 = vsel %vm343, %v4980, %v4988
        %v4991 = vshrl.u32 %v4716, 16
        %v4993 = vrot.slane %v4991, 4
        %v4994 = vshll.u32 %v4716, 16
        %v4996 = vrot.slane %v4994, 5
        %v4997 = vor.u32 %v4993, %v4996
        %v4999 = vshrl.u32 %v4950, 16
        %v5001 = vrot.slane %v4999, 4
        %v5002 = vshll.u32 %v4950, 16
        %v5004 = vrot.slane %v5002, 5
        %v5005 = vor.u32 %v5001, %v5004
        %v5006 = vsel %vm343, %v4997, %v5005
        %v5008 = vshrl.u32 %v4717, 16
        %v5010 = vrot.slane %v5008, 4
        %v5011 = vshll.u32 %v4717, 16
        %v5013 = vrot.slane %v5011, 5
        %v5014 = vor.u32 %v5010, %v5013
        %v5016 = vshrl.u32 %v4951, 16
        %v5018 = vrot.slane %v5016, 4
        %v5019 = vshll.u32 %v4951, 16
        %v5021 = vrot.slane %v5019, 5
        %v5022 = vor.u32 %v5018, %v5021
        %v5023 = vsel %vm343, %v5014, %v5022
        %v5025 = vshrl.u32 %v4718, 16
        %v5027 = vrot.slane %v5025, 4
        %v5028 = vshll.u32 %v4718, 16
        %v5030 = vrot.slane %v5028, 5
        %v5031 = vor.u32 %v5027, %v5030
        %v5033 = vshrl.u32 %v4952, 16
        %v5035 = vrot.slane %v5033, 4
        %v5036 = vshll.u32 %v4952, 16
        %v5038 = vrot.slane %v5036, 5
        %v5039 = vor.u32 %v5035, %v5038
        %v5040 = vsel %vm343, %v5031, %v5039
        %v5042 = vshrl.u32 %v4719, 16
        %v5044 = vrot.slane %v5042, 4
        %v5045 = vshll.u32 %v4719, 16
        %v5047 = vrot.slane %v5045, 5
        %v5048 = vor.u32 %v5044, %v5047
        %v5050 = vshrl.u32 %v4953, 16
        %v5052 = vrot.slane %v5050, 4
        %v5053 = vshll.u32 %v4953, 16
        %v5055 = vrot.slane %v5053, 5
        %v5056 = vor.u32 %v5052, %v5055
        %v5057 = vsel %vm343, %v5048, %v5056
        %v5059 = vshrl.u32 %v4720, 16
        %v5061 = vrot.slane %v5059, 4
        %v5062 = vshll.u32 %v4720, 16
        %v5064 = vrot.slane %v5062, 5
        %v5065 = vor.u32 %v5061, %v5064
        %v5067 = vshrl.u32 %v4954, 16
        %v5069 = vrot.slane %v5067, 4
        %v5070 = vshll.u32 %v4954, 16
        %v5072 = vrot.slane %v5070, 5
        %v5073 = vor.u32 %v5069, %v5072
        %v5074 = vsel %vm343, %v5065, %v5073
        %v5076 = vshrl.u32 %v4721, 16
        %v5078 = vrot.slane %v5076, 4
        %v5079 = vshll.u32 %v4721, 16
        %v5081 = vrot.slane %v5079, 5
        %v5082 = vor.u32 %v5078, %v5081
        %v5084 = vshrl.u32 %v4955, 16
        %v5086 = vrot.slane %v5084, 4
        %v5087 = vshll.u32 %v4955, 16
        %v5089 = vrot.slane %v5087, 5
        %v5090 = vor.u32 %v5086, %v5089
        %v5091 = vsel %vm343, %v5082, %v5090
        %s5100 = scalar_lea.vmem [#allocation3], 320
        %v5101 = vld [vmem:[%s5100] sm:$0xf]
        %v5102 = vld [vmem:[%s5100 + $0x4] sm:$0xf]
        %v5103 = vld [vmem:[%s5100 + $0x8] sm:$0xf]
        %v5104 = vld [vmem:[%s5100 + $0xc] sm:$0xf]
        %v5105 = vld [vmem:[%s5100 + $0x10] sm:$0xf]
        %v5106 = vld [vmem:[%s5100 + $0x14] sm:$0xf]
        %v5107 = vld [vmem:[%s5100 + $0x18] sm:$0xf]
        %v5108 = vld [vmem:[%s5100 + $0x1c] sm:$0xf]
        %v5109 = vld [vmem:[%s5100 + $0x20] sm:$0xf]
        %v5110 = vld [vmem:[%s5100 + $0x24] sm:$0xf]
        %v5111 = vld [vmem:[%s5100 + $0x28] sm:$0xf]
        %v5112 = vld [vmem:[%s5100 + $0x2c] sm:$0xf]
        %v5113 = vld [vmem:[%s5100 + $0x30] sm:$0xf]
        %v5114 = vld [vmem:[%s5100 + $0x34] sm:$0xf]
        %v5115 = vld [vmem:[%s5100 + $0x38] sm:$0xf]
        %v5116 = vld [vmem:[%s5100 + $0x3c] sm:$0xf]
        %v5133 = vunpack.c.l.b16 %v5101
        %v5134 = vunpack.c.l.b16 %v5102
        %v5135 = vunpack.c.l.b16 %v5103
        %v5136 = vunpack.c.l.b16 %v5104
        %v5137 = vunpack.c.l.b16 %v5105
        %v5138 = vunpack.c.l.b16 %v5106
        %v5139 = vunpack.c.l.b16 %v5107
        %v5140 = vunpack.c.l.b16 %v5108
        %v5141 = vunpack.c.l.b16 %v5109
        %v5142 = vunpack.c.l.b16 %v5110
        %v5143 = vunpack.c.l.b16 %v5111
        %v5144 = vunpack.c.l.b16 %v5112
        %v5145 = vunpack.c.l.b16 %v5113
        %v5146 = vunpack.c.l.b16 %v5114
        %v5147 = vunpack.c.l.b16 %v5115
        %v5148 = vunpack.c.l.b16 %v5116
        %v5149 = vpack.c.b16 %v5134, %v5133
        %v5150 = vpack.c.b16 %v5136, %v5135
        %v5151 = vpack.c.b16 %v5138, %v5137
        %v5152 = vpack.c.b16 %v5140, %v5139
        %v5153 = vpack.c.b16 %v5142, %v5141
        %v5154 = vpack.c.b16 %v5144, %v5143
        %v5155 = vpack.c.b16 %v5146, %v5145
        %v5156 = vpack.c.b16 %v5148, %v5147
        %5165 = vmatprep.subr.bf16.mxu0 0
        %5166 = vmatpush1.bf16.msra.mxu0 %v5149
        %5167 = vmatprep.subr.bf16.mxu0 0
        %5168 = vmatpush1.bf16.msra.mxu0 %v5150
        %5169 = vmatprep.subr.bf16.mxu0 0
        %5170 = vmatpush1.bf16.msra.mxu0 %v5151
        %5171 = vmatprep.subr.bf16.mxu0 0
        %5172 = vmatpush1.bf16.msra.mxu0 %v5152
        %5173 = vmatprep.subr.bf16.mxu0 0
        %5174 = vmatpush1.bf16.msra.mxu0 %v5153
        %5175 = vmatprep.subr.bf16.mxu0 0
        %5176 = vmatpush1.bf16.msra.mxu0 %v5154
        %5177 = vmatprep.subr.bf16.mxu0 0
        %5178 = vmatpush1.bf16.msra.mxu0 %v5155
        %5179 = vmatprep.subr.bf16.mxu0 0
        %5180 = vmatpush1.bf16.msra.mxu0 %v5156
        %5181 = vmatprep.subr.bf16.mxu0 0
        %5182 = vmatpush1.bf16.msra.mxu0 0
        %5183 = vmatprep.subr.bf16.mxu0 0
        %5184 = vmatpush1.bf16.msra.mxu0 0
        %5185 = vmatprep.subr.bf16.mxu0 0
        %5186 = vmatpush1.bf16.msra.mxu0 0
        %5187 = vmatprep.subr.bf16.mxu0 0
        %5188 = vmatpush1.bf16.msra.mxu0 0
        %5189 = vmatprep.subr.bf16.mxu0 0
        %5190 = vmatpush1.bf16.msra.mxu0 0
        %5191 = vmatprep.subr.bf16.mxu0 0
        %5192 = vmatpush1.bf16.msra.mxu0 0
        %5193 = vmatprep.subr.bf16.mxu0 0
        %5194 = vmatpush1.bf16.msra.mxu0 0
        %5195 = vmatprep.subr.bf16.mxu0 0
        %5196 = vmatpush1.bf16.msra.mxu0 0
        %5197 = vmatprep.mubr.bf16.mxu0 0
        %5198 = vmatmul.mubr.bf16.gmra.mrb[0].mxu0 %v4972
        %v5199 = vpop.f32.mrb[0].mxu0
        %v5200 = vadd.f32 0.0, %v5199
        %v5201 = vpop.f32.mrb[0].mxu0
        %v5202 = vpop.f32.mrb[0].mxu0
        %v5203 = vadd.f32 0.0, %v5202
        %v5204 = vpop.f32.mrb[0].mxu0
        %5205 = vmatprep.mubr.bf16.mxu0 0
        %5206 = vmatmul.mubr.bf16.gmra.mrb[0].mxu0 %v4989
        %v5207 = vpop.f32.mrb[0].mxu0
        %v5208 = vadd.f32 0.0, %v5207
        %v5209 = vpop.f32.mrb[0].mxu0
        %v5210 = vpop.f32.mrb[0].mxu0
        %v5211 = vadd.f32 0.0, %v5210
        %v5212 = vpop.f32.mrb[0].mxu0
        %5213 = vmatprep.mubr.bf16.mxu0 0
        %5214 = vmatmul.mubr.bf16.gmra.mrb[0].mxu0 %v5006
        %v5215 = vpop.f32.mrb[0].mxu0
        %v5216 = vadd.f32 0.0, %v5215
        %v5217 = vpop.f32.mrb[0].mxu0
        %v5218 = vpop.f32.mrb[0].mxu0
        %v5219 = vadd.f32 0.0, %v5218
        %v5220 = vpop.f32.mrb[0].mxu0
        %5221 = vmatprep.mubr.bf16.mxu0 0
        %5222 = vmatmul.mubr.bf16.gmra.mrb[0].mxu0 %v5023
        %v5223 = vpop.f32.mrb[0].mxu0
        %v5224 = vadd.f32 0.0, %v5223
        %v5225 = vpop.f32.mrb[0].mxu0
        %v5226 = vpop.f32.mrb[0].mxu0
        %v5227 = vadd.f32 0.0, %v5226
        %v5228 = vpop.f32.mrb[0].mxu0
        %5229 = vmatprep.mubr.bf16.mxu0 0
        %5230 = vmatmul.mubr.bf16.gmra.mrb[0].mxu0 %v5040
        %v5231 = vpop.f32.mrb[0].mxu0
        %v5232 = vadd.f32 0.0, %v5231
        %v5233 = vpop.f32.mrb[0].mxu0
        %v5234 = vpop.f32.mrb[0].mxu0
        %v5235 = vadd.f32 0.0, %v5234
        %v5236 = vpop.f32.mrb[0].mxu0
        %5237 = vmatprep.mubr.bf16.mxu0 0
        %5238 = vmatmul.mubr.bf16.gmra.mrb[0].mxu0 %v5057
        %v5239 = vpop.f32.mrb[0].mxu0
        %v5240 = vadd.f32 0.0, %v5239
        %v5241 = vpop.f32.mrb[0].mxu0
        %v5242 = vpop.f32.mrb[0].mxu0
        %v5243 = vadd.f32 0.0, %v5242
        %v5244 = vpop.f32.mrb[0].mxu0
        %5245 = vmatprep.mubr.bf16.mxu0 0
        %5246 = vmatmul.mubr.bf16.gmra.mrb[0].mxu0 %v5074
        %v5247 = vpop.f32.mrb[0].mxu0
        %v5248 = vadd.f32 0.0, %v5247
        %v5249 = vpop.f32.mrb[0].mxu0
        %v5250 = vpop.f32.mrb[0].mxu0
        %v5251 = vadd.f32 0.0, %v5250
        %v5252 = vpop.f32.mrb[0].mxu0
        %5253 = vmatprep.mubr.bf16.mxu0 0
        %5254 = vmatmul.mubr.bf16.gmra.mrb[0].mxu0 %v5091
        %v5255 = vpop.f32.mrb[0].mxu0
        %v5256 = vadd.f32 0.0, %v5255
        %v5257 = vpop.f32.mrb[0].mxu0
        %v5258 = vpop.f32.mrb[0].mxu0
        %v5259 = vadd.f32 0.0, %v5258
        %v5260 = vpop.f32.mrb[0].mxu0
        %5261 = vdwg.mxu0
        %v5262 = vadd.f32 %v4932, %v5200
        %v5263 = vadd.f32 %v4933, %v5203
        %v5264 = vadd.f32 %v4934, %v5208
        %v5265 = vadd.f32 %v4935, %v5211
        %v5266 = vadd.f32 %v4936, %v5216
        %v5267 = vadd.f32 %v4937, %v5219
        %v5268 = vadd.f32 %v4938, %v5224
        %v5269 = vadd.f32 %v4939, %v5227
        %v5270 = vadd.f32 %v4940, %v5232
        %v5271 = vadd.f32 %v4941, %v5235
        %v5272 = vadd.f32 %v4942, %v5240
        %v5273 = vadd.f32 %v4943, %v5243
        %v5274 = vadd.f32 %v4944, %v5248
        %v5275 = vadd.f32 %v4945, %v5251
        %v5276 = vadd.f32 %v4946, %v5256
        %v5277 = vadd.f32 %v4947, %v5259
        %s5278 = scalar_lea.vmem [#allocation2], 32
        %v5279 = vld [vmem:[%s5278] sm:$0xf8]
        %v5280 = vld [vmem:[%s5278 + $0x8] sm:$0xf]
        %v5281 = vld [vmem:[%s5278 + $0x10] sm:$0xf8]
        %v5282 = vld [vmem:[%s5278 + $0x18] sm:$0xf]
        %v5283 = vld [vmem:[%s5278 + $0x20] sm:$0xf8]
        %v5284 = vld [vmem:[%s5278 + $0x28] sm:$0xf]
        %v5285 = vld [vmem:[%s5278 + $0x30] sm:$0xf8]
        %v5286 = vld [vmem:[%s5278 + $0x38] sm:$0xf]
        %v5287 = vld [vmem:[%s5278 + $0x40] sm:$0xf8]
        %v5288 = vld [vmem:[%s5278 + $0x48] sm:$0xf]
        %v5289 = vld [vmem:[%s5278 + $0x50] sm:$0xf8]
        %v5290 = vld [vmem:[%s5278 + $0x58] sm:$0xf]
        %v5291 = vld [vmem:[%s5278 + $0x60] sm:$0xf8]
        %v5292 = vld [vmem:[%s5278 + $0x68] sm:$0xf]
        %v5293 = vld [vmem:[%s5278 + $0x70] sm:$0xf8]
        %v5294 = vld [vmem:[%s5278 + $0x78] sm:$0xf]
        %v5296 = vshrl.u32 %v5279, 16
        %v5298 = vrot.slane %v5296, 3
        %v5299 = vshll.u32 %v5279, 16
        %v5301 = vrot.slane %v5299, 4
        %v5302 = vor.u32 %v5298, %v5301
        %v5304 = vshrl.u32 %v5280, 16
        %v5306 = vrot.slane %v5304, 3
        %v5307 = vshll.u32 %v5280, 16
        %v5309 = vrot.slane %v5307, 4
        %v5310 = vor.u32 %v5306, %v5309
        %v5311 = vsel %vm3410, %v5302, %v5310
        %v5313 = vshrl.u32 %v5281, 16
        %v5315 = vrot.slane %v5313, 3
        %v5316 = vshll.u32 %v5281, 16
        %v5318 = vrot.slane %v5316, 4
        %v5319 = vor.u32 %v5315, %v5318
        %v5321 = vshrl.u32 %v5282, 16
        %v5323 = vrot.slane %v5321, 3
        %v5324 = vshll.u32 %v5282, 16
        %v5326 = vrot.slane %v5324, 4
        %v5327 = vor.u32 %v5323, %v5326
        %v5328 = vsel %vm3410, %v5319, %v5327
        %v5330 = vshrl.u32 %v5283, 16
        %v5332 = vrot.slane %v5330, 3
        %v5333 = vshll.u32 %v5283, 16
        %v5335 = vrot.slane %v5333, 4
        %v5336 = vor.u32 %v5332, %v5335
        %v5338 = vshrl.u32 %v5284, 16
        %v5340 = vrot.slane %v5338, 3
        %v5341 = vshll.u32 %v5284, 16
        %v5343 = vrot.slane %v5341, 4
        %v5344 = vor.u32 %v5340, %v5343
        %v5345 = vsel %vm3410, %v5336, %v5344
        %v5347 = vshrl.u32 %v5285, 16
        %v5349 = vrot.slane %v5347, 3
        %v5350 = vshll.u32 %v5285, 16
        %v5352 = vrot.slane %v5350, 4
        %v5353 = vor.u32 %v5349, %v5352
        %v5355 = vshrl.u32 %v5286, 16
        %v5357 = vrot.slane %v5355, 3
        %v5358 = vshll.u32 %v5286, 16
        %v5360 = vrot.slane %v5358, 4
        %v5361 = vor.u32 %v5357, %v5360
        %v5362 = vsel %vm3410, %v5353, %v5361
        %v5364 = vshrl.u32 %v5287, 16
        %v5366 = vrot.slane %v5364, 3
        %v5367 = vshll.u32 %v5287, 16
        %v5369 = vrot.slane %v5367, 4
        %v5370 = vor.u32 %v5366, %v5369
        %v5372 = vshrl.u32 %v5288, 16
        %v5374 = vrot.slane %v5372, 3
        %v5375 = vshll.u32 %v5288, 16
        %v5377 = vrot.slane %v5375, 4
        %v5378 = vor.u32 %v5374, %v5377
        %v5379 = vsel %vm3410, %v5370, %v5378
        %v5381 = vshrl.u32 %v5289, 16
        %v5383 = vrot.slane %v5381, 3
        %v5384 = vshll.u32 %v5289, 16
        %v5386 = vrot.slane %v5384, 4
        %v5387 = vor.u32 %v5383, %v5386
        %v5389 = vshrl.u32 %v5290, 16
        %v5391 = vrot.slane %v5389, 3
        %v5392 = vshll.u32 %v5290, 16
        %v5394 = vrot.slane %v5392, 4
        %v5395 = vor.u32 %v5391, %v5394
        %v5396 = vsel %vm3410, %v5387, %v5395
        %v5398 = vshrl.u32 %v5291, 16
        %v5400 = vrot.slane %v5398, 3
        %v5401 = vshll.u32 %v5291, 16
        %v5403 = vrot.slane %v5401, 4
        %v5404 = vor.u32 %v5400, %v5403
        %v5406 = vshrl.u32 %v5292, 16
        %v5408 = vrot.slane %v5406, 3
        %v5409 = vshll.u32 %v5292, 16
        %v5411 = vrot.slane %v5409, 4
        %v5412 = vor.u32 %v5408, %v5411
        %v5413 = vsel %vm3410, %v5404, %v5412
        %v5415 = vshrl.u32 %v5293, 16
        %v5417 = vrot.slane %v5415, 3
        %v5418 = vshll.u32 %v5293, 16
        %v5420 = vrot.slane %v5418, 4
        %v5421 = vor.u32 %v5417, %v5420
        %v5423 = vshrl.u32 %v5294, 16
        %v5425 = vrot.slane %v5423, 3
        %v5426 = vshll.u32 %v5294, 16
        %v5428 = vrot.slane %v5426, 4
        %v5429 = vor.u32 %v5425, %v5428
        %v5430 = vsel %vm3410, %v5421, %v5429
        %s5439 = scalar_lea.vmem [#allocation3], 384
        %v5440 = vld [vmem:[%s5439] sm:$0xf]
        %v5441 = vld [vmem:[%s5439 + $0x4] sm:$0xf]
        %v5442 = vld [vmem:[%s5439 + $0x8] sm:$0xf]
        %v5443 = vld [vmem:[%s5439 + $0xc] sm:$0xf]
        %v5444 = vld [vmem:[%s5439 + $0x10] sm:$0xf]
        %v5445 = vld [vmem:[%s5439 + $0x14] sm:$0xf]
        %v5446 = vld [vmem:[%s5439 + $0x18] sm:$0xf]
        %v5447 = vld [vmem:[%s5439 + $0x1c] sm:$0xf]
        %v5448 = vld [vmem:[%s5439 + $0x20] sm:$0xf]
        %v5449 = vld [vmem:[%s5439 + $0x24] sm:$0xf]
        %v5450 = vld [vmem:[%s5439 + $0x28] sm:$0xf]
        %v5451 = vld [vmem:[%s5439 + $0x2c] sm:$0xf]
        %v5452 = vld [vmem:[%s5439 + $0x30] sm:$0xf]
        %v5453 = vld [vmem:[%s5439 + $0x34] sm:$0xf]
        %v5454 = vld [vmem:[%s5439 + $0x38] sm:$0xf]
        %v5455 = vld [vmem:[%s5439 + $0x3c] sm:$0xf]
        %v5472 = vunpack.c.l.b16 %v5440
        %v5473 = vunpack.c.l.b16 %v5441
        %v5474 = vunpack.c.l.b16 %v5442
        %v5475 = vunpack.c.l.b16 %v5443
        %v5476 = vunpack.c.l.b16 %v5444
        %v5477 = vunpack.c.l.b16 %v5445
        %v5478 = vunpack.c.l.b16 %v5446
        %v5479 = vunpack.c.l.b16 %v5447
        %v5480 = vunpack.c.l.b16 %v5448
        %v5481 = vunpack.c.l.b16 %v5449
        %v5482 = vunpack.c.l.b16 %v5450
        %v5483 = vunpack.c.l.b16 %v5451
        %v5484 = vunpack.c.l.b16 %v5452
        %v5485 = vunpack.c.l.b16 %v5453
        %v5486 = vunpack.c.l.b16 %v5454
        %v5487 = vunpack.c.l.b16 %v5455
        %v5488 = vpack.c.b16 %v5473, %v5472
        %v5489 = vpack.c.b16 %v5475, %v5474
        %v5490 = vpack.c.b16 %v5477, %v5476
        %v5491 = vpack.c.b16 %v5479, %v5478
        %v5492 = vpack.c.b16 %v5481, %v5480
        %v5493 = vpack.c.b16 %v5483, %v5482
        %v5494 = vpack.c.b16 %v5485, %v5484
        %v5495 = vpack.c.b16 %v5487, %v5486
        %5504 = vmatprep.subr.bf16.mxu0 0
        %5505 = vmatpush1.bf16.msra.mxu0 %v5488
        %5506 = vmatprep.subr.bf16.mxu0 0
        %5507 = vmatpush1.bf16.msra.mxu0 %v5489
        %5508 = vmatprep.subr.bf16.mxu0 0
        %5509 = vmatpush1.bf16.msra.mxu0 %v5490
        %5510 = vmatprep.subr.bf16.mxu0 0
        %5511 = vmatpush1.bf16.msra.mxu0 %v5491
        %5512 = vmatprep.subr.bf16.mxu0 0
        %5513 = vmatpush1.bf16.msra.mxu0 %v5492
        %5514 = vmatprep.subr.bf16.mxu0 0
        %5515 = vmatpush1.bf16.msra.mxu0 %v5493
        %5516 = vmatprep.subr.bf16.mxu0 0
        %5517 = vmatpush1.bf16.msra.mxu0 %v5494
        %5518 = vmatprep.subr.bf16.mxu0 0
        %5519 = vmatpush1.bf16.msra.mxu0 %v5495
        %5520 = vmatprep.subr.bf16.mxu0 0
        %5521 = vmatpush1.bf16.msra.mxu0 0
        %5522 = vmatprep.subr.bf16.mxu0 0
        %5523 = vmatpush1.bf16.msra.mxu0 0
        %5524 = vmatprep.subr.bf16.mxu0 0
        %5525 = vmatpush1.bf16.msra.mxu0 0
        %5526 = vmatprep.subr.bf16.mxu0 0
        %5527 = vmatpush1.bf16.msra.mxu0 0
        %5528 = vmatprep.subr.bf16.mxu0 0
        %5529 = vmatpush1.bf16.msra.mxu0 0
        %5530 = vmatprep.subr.bf16.mxu0 0
        %5531 = vmatpush1.bf16.msra.mxu0 0
        %5532 = vmatprep.subr.bf16.mxu0 0
        %5533 = vmatpush1.bf16.msra.mxu0 0
        %5534 = vmatprep.subr.bf16.mxu0 0
        %5535 = vmatpush1.bf16.msra.mxu0 0
        %5536 = vmatprep.mubr.bf16.mxu0 0
        %5537 = vmatmul.mubr.bf16.gmra.mrb[0].mxu0 %v5311
        %v5538 = vpop.f32.mrb[0].mxu0
        %v5539 = vadd.f32 0.0, %v5538
        %v5540 = vpop.f32.mrb[0].mxu0
        %v5541 = vpop.f32.mrb[0].mxu0
        %v5542 = vadd.f32 0.0, %v5541
        %v5543 = vpop.f32.mrb[0].mxu0
        %5544 = vmatprep.mubr.bf16.mxu0 0
        %5545 = vmatmul.mubr.bf16.gmra.mrb[0].mxu0 %v5328
        %v5546 = vpop.f32.mrb[0].mxu0
        %v5547 = vadd.f32 0.0, %v5546
        %v5548 = vpop.f32.mrb[0].mxu0
        %v5549 = vpop.f32.mrb[0].mxu0
        %v5550 = vadd.f32 0.0, %v5549
        %v5551 = vpop.f32.mrb[0].mxu0
        %5552 = vmatprep.mubr.bf16.mxu0 0
        %5553 = vmatmul.mubr.bf16.gmra.mrb[0].mxu0 %v5345
        %v5554 = vpop.f32.mrb[0].mxu0
        %v5555 = vadd.f32 0.0, %v5554
        %v5556 = vpop.f32.mrb[0].mxu0
        %v5557 = vpop.f32.mrb[0].mxu0
        %v5558 = vadd.f32 0.0, %v5557
        %v5559 = vpop.f32.mrb[0].mxu0
        %5560 = vmatprep.mubr.bf16.mxu0 0
        %5561 = vmatmul.mubr.bf16.gmra.mrb[0].mxu0 %v5362
        %v5562 = vpop.f32.mrb[0].mxu0
        %v5563 = vadd.f32 0.0, %v5562
        %v5564 = vpop.f32.mrb[0].mxu0
        %v5565 = vpop.f32.mrb[0].mxu0
        %v5566 = vadd.f32 0.0, %v5565
        %v5567 = vpop.f32.mrb[0].mxu0
        %5568 = vmatprep.mubr.bf16.mxu0 0
        %5569 = vmatmul.mubr.bf16.gmra.mrb[0].mxu0 %v5379
        %v5570 = vpop.f32.mrb[0].mxu0
        %v5571 = vadd.f32 0.0, %v5570
        %v5572 = vpop.f32.mrb[0].mxu0
        %v5573 = vpop.f32.mrb[0].mxu0
        %v5574 = vadd.f32 0.0, %v5573
        %v5575 = vpop.f32.mrb[0].mxu0
        %5576 = vmatprep.mubr.bf16.mxu0 0
        %5577 = vmatmul.mubr.bf16.gmra.mrb[0].mxu0 %v5396
        %v5578 = vpop.f32.mrb[0].mxu0
        %v5579 = vadd.f32 0.0, %v5578
        %v5580 = vpop.f32.mrb[0].mxu0
        %v5581 = vpop.f32.mrb[0].mxu0
        %v5582 = vadd.f32 0.0, %v5581
        %v5583 = vpop.f32.mrb[0].mxu0
        %5584 = vmatprep.mubr.bf16.mxu0 0
        %5585 = vmatmul.mubr.bf16.gmra.mrb[0].mxu0 %v5413
        %v5586 = vpop.f32.mrb[0].mxu0
        %v5587 = vadd.f32 0.0, %v5586
        %v5588 = vpop.f32.mrb[0].mxu0
        %v5589 = vpop.f32.mrb[0].mxu0
        %v5590 = vadd.f32 0.0, %v5589
        %v5591 = vpop.f32.mrb[0].mxu0
        %5592 = vmatprep.mubr.bf16.mxu0 0
        %5593 = vmatmul.mubr.bf16.gmra.mrb[0].mxu0 %v5430
        %v5594 = vpop.f32.mrb[0].mxu0
        %v5595 = vadd.f32 0.0, %v5594
        %v5596 = vpop.f32.mrb[0].mxu0
        %v5597 = vpop.f32.mrb[0].mxu0
        %v5598 = vadd.f32 0.0, %v5597
        %v5599 = vpop.f32.mrb[0].mxu0
        %5600 = vdwg.mxu0
        %v5601 = vadd.f32 %v5262, %v5539
        %v5602 = vadd.f32 %v5263, %v5542
        %v5603 = vadd.f32 %v5264, %v5547
        %v5604 = vadd.f32 %v5265, %v5550
        %v5605 = vadd.f32 %v5266, %v5555
        %v5606 = vadd.f32 %v5267, %v5558
        %v5607 = vadd.f32 %v5268, %v5563
        %v5608 = vadd.f32 %v5269, %v5566
        %v5609 = vadd.f32 %v5270, %v5571
        %v5610 = vadd.f32 %v5271, %v5574
        %v5611 = vadd.f32 %v5272, %v5579
        %v5612 = vadd.f32 %v5273, %v5582
        %v5613 = vadd.f32 %v5274, %v5587
        %v5614 = vadd.f32 %v5275, %v5590
        %v5615 = vadd.f32 %v5276, %v5595
        %v5616 = vadd.f32 %v5277, %v5598
        %v5617 = vld [vmem:[%s5278] sm:$0xf0]
        %v5618 = vld [vmem:[%s5278 + $0x10] sm:$0xf0]
        %v5619 = vld [vmem:[%s5278 + $0x20] sm:$0xf0]
        %v5620 = vld [vmem:[%s5278 + $0x30] sm:$0xf0]
        %v5621 = vld [vmem:[%s5278 + $0x40] sm:$0xf0]
        %v5622 = vld [vmem:[%s5278 + $0x50] sm:$0xf0]
        %v5623 = vld [vmem:[%s5278 + $0x60] sm:$0xf0]
        %v5624 = vld [vmem:[%s5278 + $0x70] sm:$0xf0]
        %v5641 = vrot.slane %v5617, 4
        %v5642 = vrot.slane %v5280, 4
        %v5643 = vsel %vm3705, %v5641, %v5642
        %v5644 = vrot.slane %v5618, 4
        %v5645 = vrot.slane %v5282, 4
        %v5646 = vsel %vm3705, %v5644, %v5645
        %v5647 = vrot.slane %v5619, 4
        %v5648 = vrot.slane %v5284, 4
        %v5649 = vsel %vm3705, %v5647, %v5648
        %v5650 = vrot.slane %v5620, 4
        %v5651 = vrot.slane %v5286, 4
        %v5652 = vsel %vm3705, %v5650, %v5651
        %v5653 = vrot.slane %v5621, 4
        %v5654 = vrot.slane %v5288, 4
        %v5655 = vsel %vm3705, %v5653, %v5654
        %v5656 = vrot.slane %v5622, 4
        %v5657 = vrot.slane %v5290, 4
        %v5658 = vsel %vm3705, %v5656, %v5657
        %v5659 = vrot.slane %v5623, 4
        %v5660 = vrot.slane %v5292, 4
        %v5661 = vsel %vm3705, %v5659, %v5660
        %v5662 = vrot.slane %v5624, 4
        %v5663 = vrot.slane %v5294, 4
        %v5664 = vsel %vm3705, %v5662, %v5663
        %s5673 = scalar_lea.vmem [#allocation3], 448
        %v5674 = vld [vmem:[%s5673] sm:$0xf]
        %v5675 = vld [vmem:[%s5673 + $0x4] sm:$0xf]
        %v5676 = vld [vmem:[%s5673 + $0x8] sm:$0xf]
        %v5677 = vld [vmem:[%s5673 + $0xc] sm:$0xf]
        %v5678 = vld [vmem:[%s5673 + $0x10] sm:$0xf]
        %v5679 = vld [vmem:[%s5673 + $0x14] sm:$0xf]
        %v5680 = vld [vmem:[%s5673 + $0x18] sm:$0xf]
        %v5681 = vld [vmem:[%s5673 + $0x1c] sm:$0xf]
        %v5682 = vld [vmem:[%s5673 + $0x20] sm:$0xf]
        %v5683 = vld [vmem:[%s5673 + $0x24] sm:$0xf]
        %v5684 = vld [vmem:[%s5673 + $0x28] sm:$0xf]
        %v5685 = vld [vmem:[%s5673 + $0x2c] sm:$0xf]
        %v5686 = vld [vmem:[%s5673 + $0x30] sm:$0xf]
        %v5687 = vld [vmem:[%s5673 + $0x34] sm:$0xf]
        %v5688 = vld [vmem:[%s5673 + $0x38] sm:$0xf]
        %v5689 = vld [vmem:[%s5673 + $0x3c] sm:$0xf]
        %v5706 = vunpack.c.l.b16 %v5674
        %v5707 = vunpack.c.l.b16 %v5675
        %v5708 = vunpack.c.l.b16 %v5676
        %v5709 = vunpack.c.l.b16 %v5677
        %v5710 = vunpack.c.l.b16 %v5678
        %v5711 = vunpack.c.l.b16 %v5679
        %v5712 = vunpack.c.l.b16 %v5680
        %v5713 = vunpack.c.l.b16 %v5681
        %v5714 = vunpack.c.l.b16 %v5682
        %v5715 = vunpack.c.l.b16 %v5683
        %v5716 = vunpack.c.l.b16 %v5684
        %v5717 = vunpack.c.l.b16 %v5685
        %v5718 = vunpack.c.l.b16 %v5686
        %v5719 = vunpack.c.l.b16 %v5687
        %v5720 = vunpack.c.l.b16 %v5688
        %v5721 = vunpack.c.l.b16 %v5689
        %v5722 = vpack.c.b16 %v5707, %v5706
        %v5723 = vpack.c.b16 %v5709, %v5708
        %v5724 = vpack.c.b16 %v5711, %v5710
        %v5725 = vpack.c.b16 %v5713, %v5712
        %v5726 = vpack.c.b16 %v5715, %v5714
        %v5727 = vpack.c.b16 %v5717, %v5716
        %v5728 = vpack.c.b16 %v5719, %v5718
        %v5729 = vpack.c.b16 %v5721, %v5720
        %5738 = vmatprep.subr.bf16.mxu0 0
        %5739 = vmatpush1.bf16.msra.mxu0 %v5722
        %5740 = vmatprep.subr.bf16.mxu0 0
        %5741 = vmatpush1.bf16.msra.mxu0 %v5723
        %5742 = vmatprep.subr.bf16.mxu0 0
        %5743 = vmatpush1.bf16.msra.mxu0 %v5724
        %5744 = vmatprep.subr.bf16.mxu0 0
        %5745 = vmatpush1.bf16.msra.mxu0 %v5725
        %5746 = vmatprep.subr.bf16.mxu0 0
        %5747 = vmatpush1.bf16.msra.mxu0 %v5726
        %5748 = vmatprep.subr.bf16.mxu0 0
        %5749 = vmatpush1.bf16.msra.mxu0 %v5727
        %5750 = vmatprep.subr.bf16.mxu0 0
        %5751 = vmatpush1.bf16.msra.mxu0 %v5728
        %5752 = vmatprep.subr.bf16.mxu0 0
        %5753 = vmatpush1.bf16.msra.mxu0 %v5729
        %5754 = vmatprep.subr.bf16.mxu0 0
        %5755 = vmatpush1.bf16.msra.mxu0 0
        %5756 = vmatprep.subr.bf16.mxu0 0
        %5757 = vmatpush1.bf16.msra.mxu0 0
        %5758 = vmatprep.subr.bf16.mxu0 0
        %5759 = vmatpush1.bf16.msra.mxu0 0
        %5760 = vmatprep.subr.bf16.mxu0 0
        %5761 = vmatpush1.bf16.msra.mxu0 0
        %5762 = vmatprep.subr.bf16.mxu0 0
        %5763 = vmatpush1.bf16.msra.mxu0 0
        %5764 = vmatprep.subr.bf16.mxu0 0
        %5765 = vmatpush1.bf16.msra.mxu0 0
        %5766 = vmatprep.subr.bf16.mxu0 0
        %5767 = vmatpush1.bf16.msra.mxu0 0
        %5768 = vmatprep.subr.bf16.mxu0 0
        %5769 = vmatpush1.bf16.msra.mxu0 0
        %5770 = vmatprep.mubr.bf16.mxu0 0
        %5771 = vmatmul.mubr.bf16.gmra.mrb[0].mxu0 %v5643
        %v5772 = vpop.f32.mrb[0].mxu0
        %v5773 = vadd.f32 0.0, %v5772
        %v5774 = vpop.f32.mrb[0].mxu0
        %v5775 = vpop.f32.mrb[0].mxu0
        %v5776 = vadd.f32 0.0, %v5775
        %v5777 = vpop.f32.mrb[0].mxu0
        %5778 = vmatprep.mubr.bf16.mxu0 0
        %5779 = vmatmul.mubr.bf16.gmra.mrb[0].mxu0 %v5646
        %v5780 = vpop.f32.mrb[0].mxu0
        %v5781 = vadd.f32 0.0, %v5780
        %v5782 = vpop.f32.mrb[0].mxu0
        %v5783 = vpop.f32.mrb[0].mxu0
        %v5784 = vadd.f32 0.0, %v5783
        %v5785 = vpop.f32.mrb[0].mxu0
        %5786 = vmatprep.mubr.bf16.mxu0 0
        %5787 = vmatmul.mubr.bf16.gmra.mrb[0].mxu0 %v5649
        %v5788 = vpop.f32.mrb[0].mxu0
        %v5789 = vadd.f32 0.0, %v5788
        %v5790 = vpop.f32.mrb[0].mxu0
        %v5791 = vpop.f32.mrb[0].mxu0
        %v5792 = vadd.f32 0.0, %v5791
        %v5793 = vpop.f32.mrb[0].mxu0
        %5794 = vmatprep.mubr.bf16.mxu0 0
        %5795 = vmatmul.mubr.bf16.gmra.mrb[0].mxu0 %v5652
        %v5796 = vpop.f32.mrb[0].mxu0
        %v5797 = vadd.f32 0.0, %v5796
        %v5798 = vpop.f32.mrb[0].mxu0
        %v5799 = vpop.f32.mrb[0].mxu0
        %v5800 = vadd.f32 0.0, %v5799
        %v5801 = vpop.f32.mrb[0].mxu0
        %5802 = vmatprep.mubr.bf16.mxu0 0
        %5803 = vmatmul.mubr.bf16.gmra.mrb[0].mxu0 %v5655
        %v5804 = vpop.f32.mrb[0].mxu0
        %v5805 = vadd.f32 0.0, %v5804
        %v5806 = vpop.f32.mrb[0].mxu0
        %v5807 = vpop.f32.mrb[0].mxu0
        %v5808 = vadd.f32 0.0, %v5807
        %v5809 = vpop.f32.mrb[0].mxu0
        %5810 = vmatprep.mubr.bf16.mxu0 0
        %5811 = vmatmul.mubr.bf16.gmra.mrb[0].mxu0 %v5658
        %v5812 = vpop.f32.mrb[0].mxu0
        %v5813 = vadd.f32 0.0, %v5812
        %v5814 = vpop.f32.mrb[0].mxu0
        %v5815 = vpop.f32.mrb[0].mxu0
        %v5816 = vadd.f32 0.0, %v5815
        %v5817 = vpop.f32.mrb[0].mxu0
        %5818 = vmatprep.mubr.bf16.mxu0 0
        %5819 = vmatmul.mubr.bf16.gmra.mrb[0].mxu0 %v5661
        %v5820 = vpop.f32.mrb[0].mxu0
        %v5821 = vadd.f32 0.0, %v5820
        %v5822 = vpop.f32.mrb[0].mxu0
        %v5823 = vpop.f32.mrb[0].mxu0
        %v5824 = vadd.f32 0.0, %v5823
        %v5825 = vpop.f32.mrb[0].mxu0
        %5826 = vmatprep.mubr.bf16.mxu0 0
        %5827 = vmatmul.mubr.bf16.gmra.mrb[0].mxu0 %v5664
        %v5828 = vpop.f32.mrb[0].mxu0
        %v5829 = vadd.f32 0.0, %v5828
        %v5830 = vpop.f32.mrb[0].mxu0
        %v5831 = vpop.f32.mrb[0].mxu0
        %v5832 = vadd.f32 0.0, %v5831
        %v5833 = vpop.f32.mrb[0].mxu0
        %5834 = vdwg.mxu0
        %v5835 = vadd.f32 %v5601, %v5773
        %v5836 = vadd.f32 %v5602, %v5776
        %v5837 = vadd.f32 %v5603, %v5781
        %v5838 = vadd.f32 %v5604, %v5784
        %v5839 = vadd.f32 %v5605, %v5789
        %v5840 = vadd.f32 %v5606, %v5792
        %v5841 = vadd.f32 %v5607, %v5797
        %v5842 = vadd.f32 %v5608, %v5800
        %v5843 = vadd.f32 %v5609, %v5805
        %v5844 = vadd.f32 %v5610, %v5808
        %v5845 = vadd.f32 %v5611, %v5813
        %v5846 = vadd.f32 %v5612, %v5816
        %v5847 = vadd.f32 %v5613, %v5821
        %v5848 = vadd.f32 %v5614, %v5824
        %v5849 = vadd.f32 %v5615, %v5829
        %v5850 = vadd.f32 %v5616, %v5832
        %v5851 = vld [vmem:[%s5278 + $0x8] sm:$0x1f]
        %v5852 = vld [vmem:[%s5278 + $0x18] sm:$0x1f]
        %v5853 = vld [vmem:[%s5278 + $0x28] sm:$0x1f]
        %v5854 = vld [vmem:[%s5278 + $0x38] sm:$0x1f]
        %v5855 = vld [vmem:[%s5278 + $0x48] sm:$0x1f]
        %v5856 = vld [vmem:[%s5278 + $0x58] sm:$0x1f]
        %v5857 = vld [vmem:[%s5278 + $0x68] sm:$0x1f]
        %v5858 = vld [vmem:[%s5278 + $0x78] sm:$0x1f]
        %v5860 = vshrl.u32 %v5617, 16
        %v5862 = vrot.slane %v5860, 4
        %v5863 = vshll.u32 %v5617, 16
        %v5865 = vrot.slane %v5863, 5
        %v5866 = vor.u32 %v5862, %v5865
        %v5868 = vshrl.u32 %v5851, 16
        %v5870 = vrot.slane %v5868, 4
        %v5871 = vshll.u32 %v5851, 16
        %v5873 = vrot.slane %v5871, 5
        %v5874 = vor.u32 %v5870, %v5873
        %v5875 = vsel %vm343, %v5866, %v5874
        %v5877 = vshrl.u32 %v5618, 16
        %v5879 = vrot.slane %v5877, 4
        %v5880 = vshll.u32 %v5618, 16
        %v5882 = vrot.slane %v5880, 5
        %v5883 = vor.u32 %v5879, %v5882
        %v5885 = vshrl.u32 %v5852, 16
        %v5887 = vrot.slane %v5885, 4
        %v5888 = vshll.u32 %v5852, 16
        %v5890 = vrot.slane %v5888, 5
        %v5891 = vor.u32 %v5887, %v5890
        %v5892 = vsel %vm343, %v5883, %v5891
        %v5894 = vshrl.u32 %v5619, 16
        %v5896 = vrot.slane %v5894, 4
        %v5897 = vshll.u32 %v5619, 16
        %v5899 = vrot.slane %v5897, 5
        %v5900 = vor.u32 %v5896, %v5899
        %v5902 = vshrl.u32 %v5853, 16
        %v5904 = vrot.slane %v5902, 4
        %v5905 = vshll.u32 %v5853, 16
        %v5907 = vrot.slane %v5905, 5
        %v5908 = vor.u32 %v5904, %v5907
        %v5909 = vsel %vm343, %v5900, %v5908
        %v5911 = vshrl.u32 %v5620, 16
        %v5913 = vrot.slane %v5911, 4
        %v5914 = vshll.u32 %v5620, 16
        %v5916 = vrot.slane %v5914, 5
        %v5917 = vor.u32 %v5913, %v5916
        %v5919 = vshrl.u32 %v5854, 16
        %v5921 = vrot.slane %v5919, 4
        %v5922 = vshll.u32 %v5854, 16
        %v5924 = vrot.slane %v5922, 5
        %v5925 = vor.u32 %v5921, %v5924
        %v5926 = vsel %vm343, %v5917, %v5925
        %v5928 = vshrl.u32 %v5621, 16
        %v5930 = vrot.slane %v5928, 4
        %v5931 = vshll.u32 %v5621, 16
        %v5933 = vrot.slane %v5931, 5
        %v5934 = vor.u32 %v5930, %v5933
        %v5936 = vshrl.u32 %v5855, 16
        %v5938 = vrot.slane %v5936, 4
        %v5939 = vshll.u32 %v5855, 16
        %v5941 = vrot.slane %v5939, 5
        %v5942 = vor.u32 %v5938, %v5941
        %v5943 = vsel %vm343, %v5934, %v5942
        %v5945 = vshrl.u32 %v5622, 16
        %v5947 = vrot.slane %v5945, 4
        %v5948 = vshll.u32 %v5622, 16
        %v5950 = vrot.slane %v5948, 5
        %v5951 = vor.u32 %v5947, %v5950
        %v5953 = vshrl.u32 %v5856, 16
        %v5955 = vrot.slane %v5953, 4
        %v5956 = vshll.u32 %v5856, 16
        %v5958 = vrot.slane %v5956, 5
        %v5959 = vor.u32 %v5955, %v5958
        %v5960 = vsel %vm343, %v5951, %v5959
        %v5962 = vshrl.u32 %v5623, 16
        %v5964 = vrot.slane %v5962, 4
        %v5965 = vshll.u32 %v5623, 16
        %v5967 = vrot.slane %v5965, 5
        %v5968 = vor.u32 %v5964, %v5967
        %v5970 = vshrl.u32 %v5857, 16
        %v5972 = vrot.slane %v5970, 4
        %v5973 = vshll.u32 %v5857, 16
        %v5975 = vrot.slane %v5973, 5
        %v5976 = vor.u32 %v5972, %v5975
        %v5977 = vsel %vm343, %v5968, %v5976
        %v5979 = vshrl.u32 %v5624, 16
        %v5981 = vrot.slane %v5979, 4
        %v5982 = vshll.u32 %v5624, 16
        %v5984 = vrot.slane %v5982, 5
        %v5985 = vor.u32 %v5981, %v5984
        %v5987 = vshrl.u32 %v5858, 16
        %v5989 = vrot.slane %v5987, 4
        %v5990 = vshll.u32 %v5858, 16
        %v5992 = vrot.slane %v5990, 5
        %v5993 = vor.u32 %v5989, %v5992
        %v5994 = vsel %vm343, %v5985, %v5993
        %s6003 = scalar_lea.vmem [#allocation3], 512
        %v6004 = vld [vmem:[%s6003] sm:$0xf]
        %v6005 = vld [vmem:[%s6003 + $0x4] sm:$0xf]
        %v6006 = vld [vmem:[%s6003 + $0x8] sm:$0xf]
        %v6007 = vld [vmem:[%s6003 + $0xc] sm:$0xf]
        %v6008 = vld [vmem:[%s6003 + $0x10] sm:$0xf]
        %v6009 = vld [vmem:[%s6003 + $0x14] sm:$0xf]
        %v6010 = vld [vmem:[%s6003 + $0x18] sm:$0xf]
        %v6011 = vld [vmem:[%s6003 + $0x1c] sm:$0xf]
        %v6012 = vld [vmem:[%s6003 + $0x20] sm:$0xf]
        %v6013 = vld [vmem:[%s6003 + $0x24] sm:$0xf]
        %v6014 = vld [vmem:[%s6003 + $0x28] sm:$0xf]
        %v6015 = vld [vmem:[%s6003 + $0x2c] sm:$0xf]
        %v6016 = vld [vmem:[%s6003 + $0x30] sm:$0xf]
        %v6017 = vld [vmem:[%s6003 + $0x34] sm:$0xf]
        %v6018 = vld [vmem:[%s6003 + $0x38] sm:$0xf]
        %v6019 = vld [vmem:[%s6003 + $0x3c] sm:$0xf]
        %v6036 = vunpack.c.l.b16 %v6004
        %v6037 = vunpack.c.l.b16 %v6005
        %v6038 = vunpack.c.l.b16 %v6006
        %v6039 = vunpack.c.l.b16 %v6007
        %v6040 = vunpack.c.l.b16 %v6008
        %v6041 = vunpack.c.l.b16 %v6009
        %v6042 = vunpack.c.l.b16 %v6010
        %v6043 = vunpack.c.l.b16 %v6011
        %v6044 = vunpack.c.l.b16 %v6012
        %v6045 = vunpack.c.l.b16 %v6013
        %v6046 = vunpack.c.l.b16 %v6014
        %v6047 = vunpack.c.l.b16 %v6015
        %v6048 = vunpack.c.l.b16 %v6016
        %v6049 = vunpack.c.l.b16 %v6017
        %v6050 = vunpack.c.l.b16 %v6018
        %v6051 = vunpack.c.l.b16 %v6019
        %v6052 = vpack.c.b16 %v6037, %v6036
        %v6053 = vpack.c.b16 %v6039, %v6038
        %v6054 = vpack.c.b16 %v6041, %v6040
        %v6055 = vpack.c.b16 %v6043, %v6042
        %v6056 = vpack.c.b16 %v6045, %v6044
        %v6057 = vpack.c.b16 %v6047, %v6046
        %v6058 = vpack.c.b16 %v6049, %v6048
        %v6059 = vpack.c.b16 %v6051, %v6050
        %6068 = vmatprep.subr.bf16.mxu0 0
        %6069 = vmatpush1.bf16.msra.mxu0 %v6052
        %6070 = vmatprep.subr.bf16.mxu0 0
        %6071 = vmatpush1.bf16.msra.mxu0 %v6053
        %6072 = vmatprep.subr.bf16.mxu0 0
        %6073 = vmatpush1.bf16.msra.mxu0 %v6054
        %6074 = vmatprep.subr.bf16.mxu0 0
        %6075 = vmatpush1.bf16.msra.mxu0 %v6055
        %6076 = vmatprep.subr.bf16.mxu0 0
        %6077 = vmatpush1.bf16.msra.mxu0 %v6056
        %6078 = vmatprep.subr.bf16.mxu0 0
        %6079 = vmatpush1.bf16.msra.mxu0 %v6057
        %6080 = vmatprep.subr.bf16.mxu0 0
        %6081 = vmatpush1.bf16.msra.mxu0 %v6058
        %6082 = vmatprep.subr.bf16.mxu0 0
        %6083 = vmatpush1.bf16.msra.mxu0 %v6059
        %6084 = vmatprep.subr.bf16.mxu0 0
        %6085 = vmatpush1.bf16.msra.mxu0 0
        %6086 = vmatprep.subr.bf16.mxu0 0
        %6087 = vmatpush1.bf16.msra.mxu0 0
        %6088 = vmatprep.subr.bf16.mxu0 0
        %6089 = vmatpush1.bf16.msra.mxu0 0
        %6090 = vmatprep.subr.bf16.mxu0 0
        %6091 = vmatpush1.bf16.msra.mxu0 0
        %6092 = vmatprep.subr.bf16.mxu0 0
        %6093 = vmatpush1.bf16.msra.mxu0 0
        %6094 = vmatprep.subr.bf16.mxu0 0
        %6095 = vmatpush1.bf16.msra.mxu0 0
        %6096 = vmatprep.subr.bf16.mxu0 0
        %6097 = vmatpush1.bf16.msra.mxu0 0
        %6098 = vmatprep.subr.bf16.mxu0 0
        %6099 = vmatpush1.bf16.msra.mxu0 0
        %6100 = vmatprep.mubr.bf16.mxu0 0
        %6101 = vmatmul.mubr.bf16.gmra.mrb[0].mxu0 %v5875
        %v6102 = vpop.f32.mrb[0].mxu0
        %v6103 = vadd.f32 0.0, %v6102
        %v6104 = vpop.f32.mrb[0].mxu0
        %v6105 = vpop.f32.mrb[0].mxu0
        %v6106 = vadd.f32 0.0, %v6105
        %v6107 = vpop.f32.mrb[0].mxu0
        %6108 = vmatprep.mubr.bf16.mxu0 0
        %6109 = vmatmul.mubr.bf16.gmra.mrb[0].mxu0 %v5892
        %v6110 = vpop.f32.mrb[0].mxu0
        %v6111 = vadd.f32 0.0, %v6110
        %v6112 = vpop.f32.mrb[0].mxu0
        %v6113 = vpop.f32.mrb[0].mxu0
        %v6114 = vadd.f32 0.0, %v6113
        %v6115 = vpop.f32.mrb[0].mxu0
        %6116 = vmatprep.mubr.bf16.mxu0 0
        %6117 = vmatmul.mubr.bf16.gmra.mrb[0].mxu0 %v5909
        %v6118 = vpop.f32.mrb[0].mxu0
        %v6119 = vadd.f32 0.0, %v6118
        %v6120 = vpop.f32.mrb[0].mxu0
        %v6121 = vpop.f32.mrb[0].mxu0
        %v6122 = vadd.f32 0.0, %v6121
        %v6123 = vpop.f32.mrb[0].mxu0
        %6124 = vmatprep.mubr.bf16.mxu0 0
        %6125 = vmatmul.mubr.bf16.gmra.mrb[0].mxu0 %v5926
        %v6126 = vpop.f32.mrb[0].mxu0
        %v6127 = vadd.f32 0.0, %v6126
        %v6128 = vpop.f32.mrb[0].mxu0
        %v6129 = vpop.f32.mrb[0].mxu0
        %v6130 = vadd.f32 0.0, %v6129
        %v6131 = vpop.f32.mrb[0].mxu0
        %6132 = vmatprep.mubr.bf16.mxu0 0
        %6133 = vmatmul.mubr.bf16.gmra.mrb[0].mxu0 %v5943
        %v6134 = vpop.f32.mrb[0].mxu0
        %v6135 = vadd.f32 0.0, %v6134
        %v6136 = vpop.f32.mrb[0].mxu0
        %v6137 = vpop.f32.mrb[0].mxu0
        %v6138 = vadd.f32 0.0, %v6137
        %v6139 = vpop.f32.mrb[0].mxu0
        %6140 = vmatprep.mubr.bf16.mxu0 0
        %6141 = vmatmul.mubr.bf16.gmra.mrb[0].mxu0 %v5960
        %v6142 = vpop.f32.mrb[0].mxu0
        %v6143 = vadd.f32 0.0, %v6142
        %v6144 = vpop.f32.mrb[0].mxu0
        %v6145 = vpop.f32.mrb[0].mxu0
        %v6146 = vadd.f32 0.0, %v6145
        %v6147 = vpop.f32.mrb[0].mxu0
        %6148 = vmatprep.mubr.bf16.mxu0 0
        %6149 = vmatmul.mubr.bf16.gmra.mrb[0].mxu0 %v5977
        %v6150 = vpop.f32.mrb[0].mxu0
        %v6151 = vadd.f32 0.0, %v6150
        %v6152 = vpop.f32.mrb[0].mxu0
        %v6153 = vpop.f32.mrb[0].mxu0
        %v6154 = vadd.f32 0.0, %v6153
        %v6155 = vpop.f32.mrb[0].mxu0
        %6156 = vmatprep.mubr.bf16.mxu0 0
        %6157 = vmatmul.mubr.bf16.gmra.mrb[0].mxu0 %v5994
        %v6158 = vpop.f32.mrb[0].mxu0
        %v6159 = vadd.f32 0.0, %v6158
        %v6160 = vpop.f32.mrb[0].mxu0
        %v6161 = vpop.f32.mrb[0].mxu0
        %v6162 = vadd.f32 0.0, %v6161
        %v6163 = vpop.f32.mrb[0].mxu0
        %6164 = vdwg.mxu0
        %v6165 = vadd.f32 %v5835, %v6103
        %v6166 = vadd.f32 %v5836, %v6106
        %v6167 = vadd.f32 %v5837, %v6111
        %v6168 = vadd.f32 %v5838, %v6114
        %v6169 = vadd.f32 %v5839, %v6119
        %v6170 = vadd.f32 %v5840, %v6122
        %v6171 = vadd.f32 %v5841, %v6127
        %v6172 = vadd.f32 %v5842, %v6130
        %v6173 = vadd.f32 %v5843, %v6135
        %v6174 = vadd.f32 %v5844, %v6138
        %v6175 = vadd.f32 %v5845, %v6143
        %v6176 = vadd.f32 %v5846, %v6146
        %v6177 = vadd.f32 %v5847, %v6151
        %v6178 = vadd.f32 %v5848, %v6154
        %v6179 = vadd.f32 %v5849, %v6159
        %v6180 = vadd.f32 %v5850, %v6162
        %v6181 = vld [vmem:[%s4] sm:$0x1]
        %v6183 = vlaneseq
        %v6184 = vshrl.u32 %v6183, 7
        %v6185 = vsub.s32 0, %v6184
        %v6186 = vrot.slane %v6181, %v6185
        %v6188 = vadd.f32 %v6165, %v6186
        %v6189 = vadd.f32 %v6166, %v6186
        %v6190 = vadd.f32 %v6167, %v6186
        %v6191 = vadd.f32 %v6168, %v6186
        %v6192 = vadd.f32 %v6169, %v6186
        %v6193 = vadd.f32 %v6170, %v6186
        %v6194 = vadd.f32 %v6171, %v6186
        %v6195 = vadd.f32 %v6172, %v6186
        %v6196 = vadd.f32 %v6173, %v6186
        %v6197 = vadd.f32 %v6174, %v6186
        %v6198 = vadd.f32 %v6175, %v6186
        %v6199 = vadd.f32 %v6176, %v6186
        %v6200 = vadd.f32 %v6177, %v6186
        %v6201 = vadd.f32 %v6178, %v6186
        %v6202 = vadd.f32 %v6179, %v6186
        %v6203 = vadd.f32 %v6180, %v6186
        %v6204 = vld [vmem:[%s2284] sm:$0xf]
        %v6205 = vld [vmem:[%s2284 + $0x4] sm:$0xf]
        %v6206 = vld [vmem:[%s2284 + $0x8] sm:$0x1]
        %v6207 = vld [vmem:[%s2284 + $0xc] sm:$0xf]
        %v6208 = vld [vmem:[%s2284 + $0x10] sm:$0xf]
        %v6209 = vld [vmem:[%s2284 + $0x14] sm:$0x1]
        %v6210 = vld [vmem:[%s2284 + $0x18] sm:$0xf]
        %v6211 = vld [vmem:[%s2284 + $0x1c] sm:$0xf]
        %v6212 = vld [vmem:[%s2284 + $0x20] sm:$0x1]
        %v6213 = vld [vmem:[%s2284 + $0x24] sm:$0xf]
        %v6214 = vld [vmem:[%s2284 + $0x28] sm:$0xf]
        %v6215 = vld [vmem:[%s2284 + $0x2c] sm:$0x1]
        %v6216 = vld [vmem:[%s2284 + $0x30] sm:$0xf]
        %v6217 = vld [vmem:[%s2284 + $0x34] sm:$0xf]
        %v6218 = vld [vmem:[%s2284 + $0x38] sm:$0x1]
        %v6219 = vld [vmem:[%s2284 + $0x3c] sm:$0xf]
        %v6220 = vld [vmem:[%s2284 + $0x40] sm:$0xf]
        %v6221 = vld [vmem:[%s2284 + $0x44] sm:$0x1]
        %v6222 = vld [vmem:[%s2284 + $0x48] sm:$0xf]
        %v6223 = vld [vmem:[%s2284 + $0x4c] sm:$0xf]
        %v6224 = vld [vmem:[%s2284 + $0x50] sm:$0x1]
        %v6225 = vld [vmem:[%s2284 + $0x54] sm:$0xf]
        %v6226 = vld [vmem:[%s2284 + $0x58] sm:$0xf]
        %v6227 = vld [vmem:[%s2284 + $0x5c] sm:$0x1]
        %v6229 = vshrl.u32 %v6204, 16
        %v6231 = vrot.slane %v6229, 4
        %v6232 = vshll.u32 %v6204, 16
        %v6234 = vrot.slane %v6232, 5
        %v6235 = vor.u32 %v6231, %v6234
        %v6236 = vrot.slane %v6235, 4
        %v6238 = vshll.u32 %v6205, 16
        %v6240 = vrot.slane %v6238, 5
        %v6241 = vsel %vm345, %v6236, %v6240
        %v6242 = vshrl.u32 %v6205, 16
        %v6244 = vrot.slane %v6242, 4
        %v6245 = vor.u32 %v6244, %v6240
        %v6246 = vrot.slane %v6245, 4
        %v6248 = vshll.u32 %v6206, 16
        %v6250 = vrot.slane %v6248, 5
        %v6251 = vsel %vm345, %v6246, %v6250
        %v6253 = vshrl.u32 %v6207, 16
        %v6255 = vrot.slane %v6253, 4
        %v6256 = vshll.u32 %v6207, 16
        %v6258 = vrot.slane %v6256, 5
        %v6259 = vor.u32 %v6255, %v6258
        %v6260 = vrot.slane %v6259, 4
        %v6262 = vshll.u32 %v6208, 16
        %v6264 = vrot.slane %v6262, 5
        %v6265 = vsel %vm345, %v6260, %v6264
        %v6266 = vshrl.u32 %v6208, 16
        %v6268 = vrot.slane %v6266, 4
        %v6269 = vor.u32 %v6268, %v6264
        %v6270 = vrot.slane %v6269, 4
        %v6272 = vshll.u32 %v6209, 16
        %v6274 = vrot.slane %v6272, 5
        %v6275 = vsel %vm345, %v6270, %v6274
        %v6277 = vshrl.u32 %v6210, 16
        %v6279 = vrot.slane %v6277, 4
        %v6280 = vshll.u32 %v6210, 16
        %v6282 = vrot.slane %v6280, 5
        %v6283 = vor.u32 %v6279, %v6282
        %v6284 = vrot.slane %v6283, 4
        %v6286 = vshll.u32 %v6211, 16
        %v6288 = vrot.slane %v6286, 5
        %v6289 = vsel %vm345, %v6284, %v6288
        %v6290 = vshrl.u32 %v6211, 16
        %v6292 = vrot.slane %v6290, 4
        %v6293 = vor.u32 %v6292, %v6288
        %v6294 = vrot.slane %v6293, 4
        %v6296 = vshll.u32 %v6212, 16
        %v6298 = vrot.slane %v6296, 5
        %v6299 = vsel %vm345, %v6294, %v6298
        %v6301 = vshrl.u32 %v6213, 16
        %v6303 = vrot.slane %v6301, 4
        %v6304 = vshll.u32 %v6213, 16
        %v6306 = vrot.slane %v6304, 5
        %v6307 = vor.u32 %v6303, %v6306
        %v6308 = vrot.slane %v6307, 4
        %v6310 = vshll.u32 %v6214, 16
        %v6312 = vrot.slane %v6310, 5
        %v6313 = vsel %vm345, %v6308, %v6312
        %v6314 = vshrl.u32 %v6214, 16
        %v6316 = vrot.slane %v6314, 4
        %v6317 = vor.u32 %v6316, %v6312
        %v6318 = vrot.slane %v6317, 4
        %v6320 = vshll.u32 %v6215, 16
        %v6322 = vrot.slane %v6320, 5
        %v6323 = vsel %vm345, %v6318, %v6322
        %v6325 = vshrl.u32 %v6216, 16
        %v6327 = vrot.slane %v6325, 4
        %v6328 = vshll.u32 %v6216, 16
        %v6330 = vrot.slane %v6328, 5
        %v6331 = vor.u32 %v6327, %v6330
        %v6332 = vrot.slane %v6331, 4
        %v6334 = vshll.u32 %v6217, 16
        %v6336 = vrot.slane %v6334, 5
        %v6337 = vsel %vm345, %v6332, %v6336
        %v6338 = vshrl.u32 %v6217, 16
        %v6340 = vrot.slane %v6338, 4
        %v6341 = vor.u32 %v6340, %v6336
        %v6342 = vrot.slane %v6341, 4
        %v6344 = vshll.u32 %v6218, 16
        %v6346 = vrot.slane %v6344, 5
        %v6347 = vsel %vm345, %v6342, %v6346
        %v6349 = vshrl.u32 %v6219, 16
        %v6351 = vrot.slane %v6349, 4
        %v6352 = vshll.u32 %v6219, 16
        %v6354 = vrot.slane %v6352, 5
        %v6355 = vor.u32 %v6351, %v6354
        %v6356 = vrot.slane %v6355, 4
        %v6358 = vshll.u32 %v6220, 16
        %v6360 = vrot.slane %v6358, 5
        %v6361 = vsel %vm345, %v6356, %v6360
        %v6362 = vshrl.u32 %v6220, 16
        %v6364 = vrot.slane %v6362, 4
        %v6365 = vor.u32 %v6364, %v6360
        %v6366 = vrot.slane %v6365, 4
        %v6368 = vshll.u32 %v6221, 16
        %v6370 = vrot.slane %v6368, 5
        %v6371 = vsel %vm345, %v6366, %v6370
        %v6373 = vshrl.u32 %v6222, 16
        %v6375 = vrot.slane %v6373, 4
        %v6376 = vshll.u32 %v6222, 16
        %v6378 = vrot.slane %v6376, 5
        %v6379 = vor.u32 %v6375, %v6378
        %v6380 = vrot.slane %v6379, 4
        %v6382 = vshll.u32 %v6223, 16
        %v6384 = vrot.slane %v6382, 5
        %v6385 = vsel %vm345, %v6380, %v6384
        %v6386 = vshrl.u32 %v6223, 16
        %v6388 = vrot.slane %v6386, 4
        %v6389 = vor.u32 %v6388, %v6384
        %v6390 = vrot.slane %v6389, 4
        %v6392 = vshll.u32 %v6224, 16
        %v6394 = vrot.slane %v6392, 5
        %v6395 = vsel %vm345, %v6390, %v6394
        %v6397 = vshrl.u32 %v6225, 16
        %v6399 = vrot.slane %v6397, 4
        %v6400 = vshll.u32 %v6225, 16
        %v6402 = vrot.slane %v6400, 5
        %v6403 = vor.u32 %v6399, %v6402
        %v6404 = vrot.slane %v6403, 4
        %v6406 = vshll.u32 %v6226, 16
        %v6408 = vrot.slane %v6406, 5
        %v6409 = vsel %vm345, %v6404, %v6408
        %v6410 = vshrl.u32 %v6226, 16
        %v6412 = vrot.slane %v6410, 4
        %v6413 = vor.u32 %v6412, %v6408
        %v6414 = vrot.slane %v6413, 4
        %v6416 = vshll.u32 %v6227, 16
        %v6418 = vrot.slane %v6416, 5
        %v6419 = vsel %vm345, %v6414, %v6418
        %v6420 = vld [vmem:[%s5] sm:$0x3]
        %v6421 = vld [vmem:[%s6] sm:$0x1]
        %v6423 = vlaneseq
        %v6424 = vshrl.u32 %v6423, 7
        %v6425 = vsub.s32 0, %v6424
        %v6426 = vrot.slane %v6421, %v6425
        %v6428 = vunpack.c.l.b16 %v6241
        %v6429 = vunpack.c.l.b16 %v6251
        %v6430 = vunpack.c.l.b16 %v6265
        %v6431 = vunpack.c.l.b16 %v6275
        %v6432 = vunpack.c.l.b16 %v6289
        %v6433 = vunpack.c.l.b16 %v6299
        %v6434 = vunpack.c.l.b16 %v6313
        %v6435 = vunpack.c.l.b16 %v6323
        %v6436 = vunpack.c.l.b16 %v6337
        %v6437 = vunpack.c.l.b16 %v6347
        %v6438 = vunpack.c.l.b16 %v6361
        %v6439 = vunpack.c.l.b16 %v6371
        %v6440 = vunpack.c.l.b16 %v6385
        %v6441 = vunpack.c.l.b16 %v6395
        %v6442 = vunpack.c.l.b16 %v6409
        %v6443 = vunpack.c.l.b16 %v6419
        %v6444 = vpack.c.b16 %v6429, %v6428
        %v6445 = vpack.c.b16 %v6431, %v6430
        %v6446 = vpack.c.b16 %v6433, %v6432
        %v6447 = vpack.c.b16 %v6435, %v6434
        %v6448 = vpack.c.b16 %v6437, %v6436
        %v6449 = vpack.c.b16 %v6439, %v6438
        %v6450 = vpack.c.b16 %v6441, %v6440
        %v6451 = vpack.c.b16 %v6443, %v6442
        %v6453 = vsel %vm618, %v6444, 0
        %v6456 = vsel %vm618, %v6445, 0
        %v6459 = vsel %vm618, %v6446, 0
        %v6462 = vsel %vm618, %v6447, 0
        %v6465 = vsel %vm618, %v6448, 0
        %v6468 = vsel %vm618, %v6449, 0
        %v6471 = vsel %vm618, %v6450, 0
        %v6474 = vsel %vm618, %v6451, 0
        %v6477 = vsel %vm649, %v6420, 0
        %6479 = vmatprep.subr.bf16.mxu0 0
        %6480 = vmatpush1.bf16.msra.mxu0 %v6477
        %6481 = vmatprep.subr.bf16.mxu0 0
        %6482 = vmatpush1.bf16.msra.mxu0 0
        %6483 = vmatprep.subr.bf16.mxu0 0
        %6484 = vmatpush1.bf16.msra.mxu0 0
        %6485 = vmatprep.subr.bf16.mxu0 0
        %6486 = vmatpush1.bf16.msra.mxu0 0
        %6487 = vmatprep.subr.bf16.mxu0 0
        %6488 = vmatpush1.bf16.msra.mxu0 0
        %6489 = vmatprep.subr.bf16.mxu0 0
        %6490 = vmatpush1.bf16.msra.mxu0 0
        %6491 = vmatprep.subr.bf16.mxu0 0
        %6492 = vmatpush1.bf16.msra.mxu0 0
        %6493 = vmatprep.subr.bf16.mxu0 0
        %6494 = vmatpush1.bf16.msra.mxu0 0
        %6495 = vmatprep.subr.bf16.mxu0 0
        %6496 = vmatpush1.bf16.msra.mxu0 0
        %6497 = vmatprep.subr.bf16.mxu0 0
        %6498 = vmatpush1.bf16.msra.mxu0 0
        %6499 = vmatprep.subr.bf16.mxu0 0
        %6500 = vmatpush1.bf16.msra.mxu0 0
        %6501 = vmatprep.subr.bf16.mxu0 0
        %6502 = vmatpush1.bf16.msra.mxu0 0
        %6503 = vmatprep.subr.bf16.mxu0 0
        %6504 = vmatpush1.bf16.msra.mxu0 0
        %6505 = vmatprep.subr.bf16.mxu0 0
        %6506 = vmatpush1.bf16.msra.mxu0 0
        %6507 = vmatprep.subr.bf16.mxu0 0
        %6508 = vmatpush1.bf16.msra.mxu0 0
        %6509 = vmatprep.subr.bf16.mxu0 0
        %6510 = vmatpush1.bf16.msra.mxu0 0
        %6511 = vmatprep.mubr.bf16.mxu0 0
        %6512 = vmatmul.mubr.bf16.gmra.mrb[0].mxu0 %v6453
        %v6513 = vpop.f32.mrb[0].mxu0
        %v6514 = vadd.f32 %v6426, %v6513
        %v6515 = vpop.f32.mrb[0].mxu0
        %v6516 = vpop.f32.mrb[0].mxu0
        %v6517 = vadd.f32 %v6426, %v6516
        %v6518 = vpop.f32.mrb[0].mxu0
        %6519 = vmatprep.mubr.bf16.mxu0 0
        %6520 = vmatmul.mubr.bf16.gmra.mrb[0].mxu0 %v6456
        %v6521 = vpop.f32.mrb[0].mxu0
        %v6522 = vadd.f32 %v6426, %v6521
        %v6523 = vpop.f32.mrb[0].mxu0
        %v6524 = vpop.f32.mrb[0].mxu0
        %v6525 = vadd.f32 %v6426, %v6524
        %v6526 = vpop.f32.mrb[0].mxu0
        %6527 = vmatprep.mubr.bf16.mxu0 0
        %6528 = vmatmul.mubr.bf16.gmra.mrb[0].mxu0 %v6459
        %v6529 = vpop.f32.mrb[0].mxu0
        %v6530 = vadd.f32 %v6426, %v6529
        %v6531 = vpop.f32.mrb[0].mxu0
        %v6532 = vpop.f32.mrb[0].mxu0
        %v6533 = vadd.f32 %v6426, %v6532
        %v6534 = vpop.f32.mrb[0].mxu0
        %6535 = vmatprep.mubr.bf16.mxu0 0
        %6536 = vmatmul.mubr.bf16.gmra.mrb[0].mxu0 %v6462
        %v6537 = vpop.f32.mrb[0].mxu0
        %v6538 = vadd.f32 %v6426, %v6537
        %v6539 = vpop.f32.mrb[0].mxu0
        %v6540 = vpop.f32.mrb[0].mxu0
        %v6541 = vadd.f32 %v6426, %v6540
        %v6542 = vpop.f32.mrb[0].mxu0
        %6543 = vmatprep.mubr.bf16.mxu0 0
        %6544 = vmatmul.mubr.bf16.gmra.mrb[0].mxu0 %v6465
        %v6545 = vpop.f32.mrb[0].mxu0
        %v6546 = vadd.f32 %v6426, %v6545
        %v6547 = vpop.f32.mrb[0].mxu0
        %v6548 = vpop.f32.mrb[0].mxu0
        %v6549 = vadd.f32 %v6426, %v6548
        %v6550 = vpop.f32.mrb[0].mxu0
        %6551 = vmatprep.mubr.bf16.mxu0 0
        %6552 = vmatmul.mubr.bf16.gmra.mrb[0].mxu0 %v6468
        %v6553 = vpop.f32.mrb[0].mxu0
        %v6554 = vadd.f32 %v6426, %v6553
        %v6555 = vpop.f32.mrb[0].mxu0
        %v6556 = vpop.f32.mrb[0].mxu0
        %v6557 = vadd.f32 %v6426, %v6556
        %v6558 = vpop.f32.mrb[0].mxu0
        %6559 = vmatprep.mubr.bf16.mxu0 0
        %6560 = vmatmul.mubr.bf16.gmra.mrb[0].mxu0 %v6471
        %v6561 = vpop.f32.mrb[0].mxu0
        %v6562 = vadd.f32 %v6426, %v6561
        %v6563 = vpop.f32.mrb[0].mxu0
        %v6564 = vpop.f32.mrb[0].mxu0
        %v6565 = vadd.f32 %v6426, %v6564
        %v6566 = vpop.f32.mrb[0].mxu0
        %6567 = vmatprep.mubr.bf16.mxu0 0
        %6568 = vmatmul.mubr.bf16.gmra.mrb[0].mxu0 %v6474
        %v6569 = vpop.f32.mrb[0].mxu0
        %v6570 = vadd.f32 %v6426, %v6569
        %v6571 = vpop.f32.mrb[0].mxu0
        %v6572 = vpop.f32.mrb[0].mxu0
        %v6573 = vadd.f32 %v6426, %v6572
        %v6574 = vpop.f32.mrb[0].mxu0
        %6575 = vdwg.mxu0
        %v6576 = vadd.f32 %v6188, %v6514
        %v6577 = vadd.f32 %v6189, %v6517
        %v6578 = vadd.f32 %v6190, %v6522
        %v6579 = vadd.f32 %v6191, %v6525
        %v6580 = vadd.f32 %v6192, %v6530
        %v6581 = vadd.f32 %v6193, %v6533
        %v6582 = vadd.f32 %v6194, %v6538
        %v6583 = vadd.f32 %v6195, %v6541
        %v6584 = vadd.f32 %v6196, %v6546
        %v6585 = vadd.f32 %v6197, %v6549
        %v6586 = vadd.f32 %v6198, %v6554
        %v6587 = vadd.f32 %v6199, %v6557
        %v6588 = vadd.f32 %v6200, %v6562
        %v6589 = vadd.f32 %v6201, %v6565
        %v6590 = vadd.f32 %v6202, %v6570
        %v6591 = vadd.f32 %v6203, %v6573
        %v6592 = vmul.f32 %v6576, 0.01
        %v6593 = vmul.f32 %v6577, 0.01
        %v6594 = vmul.f32 %v6578, 0.01
        %v6595 = vmul.f32 %v6579, 0.01
        %v6596 = vmul.f32 %v6580, 0.01
        %v6597 = vmul.f32 %v6581, 0.01
        %v6598 = vmul.f32 %v6582, 0.01
        %v6599 = vmul.f32 %v6583, 0.01
        %v6600 = vmul.f32 %v6584, 0.01
        %v6601 = vmul.f32 %v6585, 0.01
        %v6602 = vmul.f32 %v6586, 0.01
        %v6603 = vmul.f32 %v6587, 0.01
        %v6604 = vmul.f32 %v6588, 0.01
        %v6605 = vmul.f32 %v6589, 0.01
        %v6606 = vmul.f32 %v6590, 0.01
        %v6607 = vmul.f32 %v6591, 0.01
        %v6608 = vmax.f32 %v6576, %v6592
        %v6609 = vmax.f32 %v6577, %v6593
        %v6610 = vmax.f32 %v6578, %v6594
        %v6611 = vmax.f32 %v6579, %v6595
        %v6612 = vmax.f32 %v6580, %v6596
        %v6613 = vmax.f32 %v6581, %v6597
        %v6614 = vmax.f32 %v6582, %v6598
        %v6615 = vmax.f32 %v6583, %v6599
        %v6616 = vmax.f32 %v6584, %v6600
        %v6617 = vmax.f32 %v6585, %v6601
        %v6618 = vmax.f32 %v6586, %v6602
        %v6619 = vmax.f32 %v6587, %v6603
        %v6620 = vmax.f32 %v6588, %v6604
        %v6621 = vmax.f32 %v6589, %v6605
        %v6622 = vmax.f32 %v6590, %v6606
        %v6623 = vmax.f32 %v6591, %v6607
        %v6624 = vpack.c.bf16 %v6609, %v6608
        %v6625 = vpack.c.bf16 %v6611, %v6610
        %v6626 = vpack.c.bf16 %v6613, %v6612
        %v6627 = vpack.c.bf16 %v6615, %v6614
        %v6628 = vpack.c.bf16 %v6617, %v6616
        %v6629 = vpack.c.bf16 %v6619, %v6618
        %v6630 = vpack.c.bf16 %v6621, %v6620
        %v6631 = vpack.c.bf16 %v6623, %v6622
        %v6640 = vunpack.c.l.b16 %v6624
        %v6641 = vunpack.c.h.b16 %v6624
        %v6642 = vunpack.c.l.b16 %v6625
        %v6643 = vunpack.c.h.b16 %v6625
        %v6644 = vunpack.c.l.b16 %v6626
        %v6645 = vunpack.c.h.b16 %v6626
        %v6646 = vunpack.c.l.b16 %v6627
        %v6647 = vunpack.c.h.b16 %v6627
        %v6648 = vunpack.c.l.b16 %v6628
        %v6649 = vunpack.c.h.b16 %v6628
        %v6650 = vunpack.c.l.b16 %v6629
        %v6651 = vunpack.c.h.b16 %v6629
        %v6652 = vunpack.c.l.b16 %v6630
        %v6653 = vunpack.c.h.b16 %v6630
        %v6654 = vunpack.c.l.b16 %v6631
        %v6655 = vunpack.c.h.b16 %v6631
        %v6656 = vpack.c.b16 %v6640, %v6640
        %v6657 = vpack.c.b16 %v6641, %v6641
        %v6658 = vpack.c.b16 %v6642, %v6642
        %v6659 = vpack.c.b16 %v6643, %v6643
        %v6660 = vpack.c.b16 %v6644, %v6644
        %v6661 = vpack.c.b16 %v6645, %v6645
        %v6662 = vpack.c.b16 %v6646, %v6646
        %v6663 = vpack.c.b16 %v6647, %v6647
        %v6664 = vpack.c.b16 %v6648, %v6648
        %v6665 = vpack.c.b16 %v6649, %v6649
        %v6666 = vpack.c.b16 %v6650, %v6650
        %v6667 = vpack.c.b16 %v6651, %v6651
        %v6668 = vpack.c.b16 %v6652, %v6652
        %v6669 = vpack.c.b16 %v6653, %v6653
        %v6670 = vpack.c.b16 %v6654, %v6654
        %v6671 = vpack.c.b16 %v6655, %v6655
        %6688 = vst [vmem:[%s300] sm:$0xf] %v6656
        %6689 = vst [vmem:[%s300 + $0x4] sm:$0xf] %v6657
        %6690 = vst [vmem:[%s300 + $0x8] sm:$0xf] %v6658
        %6691 = vst [vmem:[%s300 + $0xc] sm:$0xf] %v6659
        %6692 = vst [vmem:[%s300 + $0x10] sm:$0xf] %v6660
        %6693 = vst [vmem:[%s300 + $0x14] sm:$0xf] %v6661
        %6694 = vst [vmem:[%s300 + $0x18] sm:$0xf] %v6662
        %6695 = vst [vmem:[%s300 + $0x1c] sm:$0xf] %v6663
        %6696 = vst [vmem:[%s300 + $0x20] sm:$0xf] %v6664
        %6697 = vst [vmem:[%s300 + $0x24] sm:$0xf] %v6665
        %6698 = vst [vmem:[%s300 + $0x28] sm:$0xf] %v6666
        %6699 = vst [vmem:[%s300 + $0x2c] sm:$0xf] %v6667
        %6700 = vst [vmem:[%s300 + $0x30] sm:$0xf] %v6668
        %6701 = vst [vmem:[%s300 + $0x34] sm:$0xf] %v6669
        %6702 = vst [vmem:[%s300 + $0x38] sm:$0xf] %v6670
        %6703 = vst [vmem:[%s300 + $0x3c] sm:$0xf] %v6671
        %s6704 = sand.u32 %s196, 1
        %s6705 = scalar_lea.sflag [#allocation5], %s6704
        %s6706 = sand.u32 %s196, 1
        %s6707 = smul.addr %s6706, 64
        %s6708 = scalar_lea.vmem [#allocation6], %s6707
        // Predicated region
        $region61: #{tpu_custom_call.1} parent=47 // pred_check
          %p6709 = pneg %p206
        $region62: #{tpu_custom_call.1} parent=47 // pred_check_branch
          %6711 = sbr.rel (%p6709) target = $region64
        $region63: #{tpu_custom_call.1} parent=47 // pred_region
          %s6712 = smul.u32 8, %s27
          %s6714 = ssub.s32 1024, 1024
          %6715 = vsyncadd %s6705, %s6714
          %s6716 = smul.addr %s6712, 2
          %s6717 = smul.addr %s26, 32
          %s6718 = sadd.s32 %s6716, %s6717
          %s6719 = smul.addr %s6718, 64
          %s6720 = scalar_lea.hbm %s7, %s6719
          %s6721 = sshll.u32 %s6708, 4
          %s6722 = int_to_ptr.vmem [resolvable:$true] %s6721
          %6727 = dma.vmem_to_hbm [thread:$0]  %s6722, 1024, %s6720, %s6705, 64, 64, 4
        $region64: #{tpu_custom_call.1} parent=47 // pred_fallthru
          _
      $region48: #{tpu_custom_call.1} parent=5 // pred_fallthru
        _
      %p6728 = scmp.le.s32.totalorder 2, %s17
      // Predicated region
      $region65: #{tpu_custom_call.1} parent=5 // pred_check
        %p6729 = pneg %p6728
      $region66: #{tpu_custom_call.1} parent=5 // pred_check_branch
        %6731 = sbr.rel (%p6729) target = $region68
      $region67: #{tpu_custom_call.1} parent=5 // pred_region
        %s6732 = ssub.s32 %s17, 2
        // Predicated region
        $region69: #{tpu_custom_call.1} parent=67 // pred_check
          %p6733 = pneg %p212
        $region70: #{tpu_custom_call.1} parent=67 // pred_check_branch
          %6735 = sbr.rel (%p6733) target = $region72
        $region71: #{tpu_custom_call.1} parent=67 // pred_region
          %s6736 = sand.u32 %s197, 1
          %s6737 = scalar_lea.sflag [#allocation5], %s6736
          %s6738 = sand.u32 %s197, 1
          %s6739 = smul.addr %s6738, 64
          %s6740 = scalar_lea.vmem [#allocation6], %s6739
          %6741 = dma.done %s6737, 1024
        $region72: #{tpu_custom_call.1} parent=67 // pred_fallthru
          _
      $region68: #{tpu_custom_call.1} parent=5 // pred_fallthru
        _
    $region6: #{tpu_custom_call.1} parent=1 // loop_footer
      %s21 = sadd.s32 1, %s17
    $region7: #{tpu_custom_call.1} parent=1 // loop_footer_branch
      %16 = sbr.rel target = $region3
    $region8: #{tpu_custom_call.1} parent=1 // loop_exit
      _
    %6742 = vsyncpa [#allocation4], 1
    %s6743 = scalar_lea.sflag [#allocation4], 1
    %6744 = vsyncpa %s6743, 1
    %6745 = vsyncpa [#allocation5], 1
    %s6746 = scalar_lea.sflag [#allocation5], 1
    %6747 = vsyncpa %s6746, 1

</llo_original>
